<compile_context>
chip_gen: v7x
topology: tpu7x:2x2x1
jax: 0.10.0
libtpu: 0.0.40
codegen_flags: <defaults>
</compile_context>

<pallas_src>
import math
import functools

import jax
import jax.numpy as jnp
import numpy as np
from jax.experimental import pallas as pl
from jax.experimental.pallas import tpu as pltpu


def _layernorm(x, gamma, beta, eps=1e-5):
    mu = jnp.mean(x, axis=-1, keepdims=True)
    var = jnp.mean((x - mu) ** 2, axis=-1, keepdims=True)
    return (x - mu) * jax.lax.rsqrt(var + eps) * gamma + beta


def _mha(q_in, kv_in, mask, wk, bk, wv, bv, wq, bq, wo, bo, heads, head_size):
    """Multi-head attention on 2-D tiles: queries [Sq, E], keys/values [Skv, E]."""
    f32 = jnp.float32
    bf16 = jnp.bfloat16
    scale = 1.0 / math.sqrt(head_size)

    # QKV projections: bf16 operands, f32 accumulation (K = E contraction, MXU-friendly).
    q_b = q_in.astype(bf16)
    kv_b = kv_in.astype(bf16)
    k = jnp.dot(kv_b, wk, preferred_element_type=f32) + bk
    v = jnp.dot(kv_b, wv, preferred_element_type=f32) + bv
    q = (jnp.dot(q_b, wq, preferred_element_type=f32) + bq) * scale  # scale folded once

    sq = q_in.shape[0]
    skv = kv_in.shape[0]
    # Additive mask, computed & broadcast ONCE (hoisted out of the head loop); finite
    # sentinel keeps fully-masked rows NaN-free.
    mask_add = jnp.broadcast_to(
        jnp.where(mask > 0.0, 0.0, -1e30).astype(f32), (sq, skv))

    q16 = q.astype(bf16)
    k16 = k.astype(bf16)
    v16 = v.astype(bf16)

    ctx_heads = []
    for h in range(heads):  # static unroll over a small head count
        lo = h * head_size
        qh = q16[:, lo:lo + head_size]
        kh = k16[:, lo:lo + head_size]
        vh = v16[:, lo:lo + head_size]
        # q @ k^T without materializing a transpose ("NT" contraction).
        logits = jax.lax.dot_general(qh, kh, (((1,), (1,)), ((), ())),
                                     preferred_element_type=f32)
        logits = logits + mask_add
        m = jnp.max(logits, axis=-1, keepdims=True)
        e = jnp.exp(logits - m)
        denom = jnp.sum(e, axis=-1, keepdims=True)
        attn = e * pl.reciprocal(denom, approx=True)  # EUP slot instead of VALU divide
        ctx_heads.append(jax.lax.dot_general(attn.astype(bf16), vh,
                                             (((1,), (0,)), ((), ())),
                                             preferred_element_type=f32))

    # Concatenate heads, then ONE full-width output projection (K = E, not K = head_size).
    ctx = jnp.concatenate(ctx_heads, axis=-1).astype(bf16)
    return jnp.dot(ctx, wo, preferred_element_type=f32) + bo


def decoder_block_kernel(xq_ref, xkv_ref, mem_ref, trg_mask_ref, src_mask_ref,
                         sa_wk, sa_bk, sa_wv, sa_bv, sa_wq, sa_bq, sa_wo, sa_bo,
                         ca_wk, ca_bk, ca_wv, ca_bv, ca_wq, ca_bq, ca_wo, ca_bo,
                         n1_g, n1_b, n3_g, n3_b,
                         ff_w1, ff_b1, ff_w2, ff_b2,
                         out_ref, *, heads, head_size):
    bf16 = jnp.bfloat16
    f32 = jnp.float32

    xq = xq_ref[0]              # [tq, E]    query tile
    xkv = xkv_ref[0]            # [S, E]     full x (K/V source for self-attention)
    mem = mem_ref[0]            # [Ssrc, E]
    trg_mask = trg_mask_ref[0]  # [1, S]
    src_mask = src_mask_ref[0]  # [1, Ssrc]

    # --- self attention: k=x, v=x, q=x(tile), mask=trg_mask ---
    attended_trg = _mha(xq, xkv, trg_mask,
                        sa_wk[...], sa_bk[...], sa_wv[...], sa_bv[...],
                        sa_wq[...], sa_bq[...], sa_wo[...], sa_bo[...],
                        heads, head_size)
    x = _layernorm(attended_trg + xq, n1_g[...], n1_b[...])

    # --- encoder (source) attention: k=memory, v=memory, q=x(tile), mask=src_mask ---
    attended_src = _mha(x, mem, src_mask,
                        ca_wk[...], ca_bk[...], ca_wv[...], ca_bv[...],
                        ca_wq[...], ca_bq[...], ca_wo[...], ca_bo[...],
                        heads, head_size)
    # PyTorch forward re-uses norm1 here (norm2 is created but never used).
    x = _layernorm(attended_src + x, n1_g[...], n1_b[...])

    # --- feed forward: Linear -> ReLU -> Linear (bf16 matmul operands, f32 accumulate) ---
    h = jnp.maximum(jnp.dot(x.astype(bf16), ff_w1[...],
                            preferred_element_type=f32) + ff_b1[...], 0.0)
    ff = jnp.dot(h.astype(bf16), ff_w2[...],
                 preferred_element_type=f32) + ff_b2[...]
    x = _layernorm(ff + x, n3_g[...], n3_b[...])

    # dropout p=0.0 -> identity
    out_ref[0] = x


def transformer_decoder_block(x, memory, src_mask, trg_mask, weights, heads, q_tile=None):
    B, S, E = x.shape
    _, Ssrc, _ = memory.shape
    head_size = E // heads

    if q_tile is None:
        q_tile = S if S <= 128 else 128
    assert S % q_tile == 0, "sequence length must be divisible by the query tile"
    n_qt = S // q_tile

    trg_mask_f = trg_mask.astype(jnp.float32)
    src_mask_f = src_mask.astype(jnp.float32)

    # Matmul weight matrices -> bf16 (fast MXU path, half the HBM/VMEM bytes).
    # Biases and layernorm params (leading dim 1) stay f32.
    weights_dev = tuple(
        w.astype(jnp.bfloat16) if w.shape[0] > 1 else w for w in weights)

    def weight_spec(shape):
        n = len(shape)
        # Grid-invariant index_map -> Pallas fetches each weight once and keeps it resident.
        return pl.BlockSpec(shape, lambda b, t: (0,) * n)

    in_specs = [
        pl.BlockSpec((1, q_tile, E), lambda b, t: (b, t, 0)),   # x: query tile
        pl.BlockSpec((1, S, E), lambda b, t: (b, 0, 0)),        # x: full (self-attn K/V)
        pl.BlockSpec((1, Ssrc, E), lambda b, t: (b, 0, 0)),     # memory (src-attn K/V)
        pl.BlockSpec((1, 1, S), lambda b, t: (b, 0, 0)),        # trg mask [1, S]
        pl.BlockSpec((1, 1, Ssrc), lambda b, t: (b, 0, 0)),     # src mask [1, Ssrc]
    ] + [weight_spec(w.shape) for w in weights_dev]

    kernel = functools.partial(decoder_block_kernel, heads=heads, head_size=head_size)

    return pl.pallas_call(
        kernel,
        out_shape=jax.ShapeDtypeStruct((B, S, E), jnp.float32),
        grid_spec=pltpu.PrefetchScalarGridSpec(
            num_scalar_prefetch=0,
            grid=(B, n_qt),
            in_specs=in_specs,
            out_specs=pl.BlockSpec((1, q_tile, E), lambda b, t: (b, t, 0)),
        ),
        compiler_params=pltpu.CompilerParams(
            dimension_semantics=("parallel", "parallel"),
            # Raise the scoped VMEM cap above the 16/32 MiB defaults while staying below
            # physical VMEM on every generation (v7x has 64 MiB per TensorCore).
            vmem_limit_bytes=48 * 1024 * 1024,
        ),
    )(x, x, memory, trg_mask_f, src_mask_f, *weights_dev)


# ---------------- parameter construction (deterministic, PyTorch-like init) --------------

def _linear_params(key, fan_in, fan_out):
    k1, k2 = jax.random.split(key)
    bound = 1.0 / math.sqrt(fan_in)
    w = jax.random.uniform(k1, (fan_in, fan_out), jnp.float32, -bound, bound)
    b = jax.random.uniform(k2, (1, fan_out), jnp.float32, -bound, bound)
    return w, b


def make_weights(key, emb_size, ff_hidden_mult=4):
    keys = jax.random.split(key, 10)
    # self attention: k, v, q, out
    sa_wk, sa_bk = _linear_params(keys[0], emb_size, emb_size)
    sa_wv, sa_bv = _linear_params(keys[1], emb_size, emb_size)
    sa_wq, sa_bq = _linear_params(keys[2], emb_size, emb_size)
    sa_wo, sa_bo = _linear_params(keys[3], emb_size, emb_size)
    # source (encoder) attention
    ca_wk, ca_bk = _linear_params(keys[4], emb_size, emb_size)
    ca_wv, ca_bv = _linear_params(keys[5], emb_size, emb_size)
    ca_wq, ca_bq = _linear_params(keys[6], emb_size, emb_size)
    ca_wo, ca_bo = _linear_params(keys[7], emb_size, emb_size)
    # layer norms (norm2 exists in __init__ but is unused in forward -> omitted)
    n1_g = jnp.ones((1, emb_size), jnp.float32)
    n1_b = jnp.zeros((1, emb_size), jnp.float32)
    n3_g = jnp.ones((1, emb_size), jnp.float32)
    n3_b = jnp.zeros((1, emb_size), jnp.float32)
    # feed forward
    ff_w1, ff_b1 = _linear_params(keys[8], emb_size, ff_hidden_mult * emb_size)
    ff_w2, ff_b2 = _linear_params(keys[9], ff_hidden_mult * emb_size, emb_size)
    return (sa_wk, sa_bk, sa_wv, sa_bv, sa_wq, sa_bq, sa_wo, sa_bo,
            ca_wk, ca_bk, ca_wv, ca_bv, ca_wq, ca_bq, ca_wo, ca_bo,
            n1_g, n1_b, n3_g, n3_b,
            ff_w1, ff_b1, ff_w2, ff_b2)


# ---------------- pure-JAX f32 reference (for a sanity check) ----------------------------

def _ref_mha(q_in, kv_in, mask, wk, bk, wv, bv, wq, bq, wo, bo, heads, head_size):
    B = q_in.shape[0]
    k = kv_in @ wk + bk
    v = kv_in @ wv + bv
    q = q_in @ wq + bq
    def split(t):
        return t.reshape(B, -1, heads, head_size).transpose(0, 2, 1, 3)
    k, v, q = split(k), split(v), split(q)
    q = q / math.sqrt(head_size)
    dot = jnp.einsum('bhqd,bhkd->bhqk', q, k)
    dot = jnp.where(mask[:, None, :, :] > 0, dot, -jnp.inf)
    attn = jax.nn.softmax(dot, axis=-1)
    ctx = jnp.einsum('bhqk,bhkd->bhqd', attn, v)
    ctx = ctx.transpose(0, 2, 1, 3).reshape(B, -1, heads * head_size)
    return ctx @ wo + bo


def _ref_block(x, memory, src_mask, trg_mask, w, heads):
    (sa_wk, sa_bk, sa_wv, sa_bv, sa_wq, sa_bq, sa_wo, sa_bo,
     ca_wk, ca_bk, ca_wv, ca_bv, ca_wq, ca_bq, ca_wo, ca_bo,
     n1_g, n1_b, n3_g, n3_b, ff_w1, ff_b1, ff_w2, ff_b2) = w
    hs = x.shape[-1] // heads
    def ln(t, g, b):
        mu = jnp.mean(t, -1, keepdims=True)
        var = jnp.mean((t - mu) ** 2, -1, keepdims=True)
        return (t - mu) / jnp.sqrt(var + 1e-5) * g + b
    a = _ref_mha(x, x, trg_mask.astype(jnp.float32),
                 sa_wk, sa_bk, sa_wv, sa_bv, sa_wq, sa_bq, sa_wo, sa_bo, heads, hs)
    x = ln(a + x, n1_g, n1_b)
    a = _ref_mha(x, memory, src_mask.astype(jnp.float32),
                 ca_wk, ca_bk, ca_wv, ca_bv, ca_wq, ca_bq, ca_wo, ca_bo, heads, hs)
    x = ln(a + x, n1_g, n1_b)
    ff = jnp.maximum(x @ ff_w1 + ff_b1, 0.0) @ ff_w2 + ff_b2
    return ln(ff + x, n3_g, n3_b)


if __name__ == "__main__":
    B, S, Ssrc, E, heads = 2, 8, 8, 32, 4

    key = jax.random.PRNGKey(0)
    k_x, k_mem, k_w = jax.random.split(key, 3)
    x = jax.random.normal(k_x, (B, S, E), jnp.float32)
    memory = jax.random.normal(k_mem, (B, Ssrc, E), jnp.float32)
    # boolean masks [batch, 1, key_len]; last key position masked out
    trg_mask = jnp.ones((B, 1, S), dtype=bool).at[:, :, -1].set(False)
    src_mask = jnp.ones((B, 1, Ssrc), dtype=bool).at[:, :, -1].set(False)

    weights = make_weights(k_w, E, ff_hidden_mult=4)

    out = transformer_decoder_block(x, memory, src_mask, trg_mask, weights, heads)
    out = jax.block_until_ready(out)

    ref = _ref_block(x, memory, src_mask, trg_mask, weights, heads)
    # Kernel runs its matmuls with bf16 operands (f32 accumulate), so the tolerance vs. the
    # all-f32 reference is loosened accordingly.
    np.testing.assert_allclose(np.asarray(out), np.asarray(ref), rtol=5e-2, atol=5e-2)

    print("KERNEL_OK")
</pallas_src>

<mosaic_0001>
module attributes {stable_mosaic.version = 11 : i64} {
  func.func @decoder_block_kernel(%arg0: i32, %arg1: i32, %arg2: memref<1x8x32xf32, #tpu.memory_space<vmem>>, %arg3: memref<1x8x32xf32, #tpu.memory_space<vmem>>, %arg4: memref<1x8x32xf32, #tpu.memory_space<vmem>>, %arg5: memref<1x1x8xf32, #tpu.memory_space<vmem>>, %arg6: memref<1x1x8xf32, #tpu.memory_space<vmem>>, %arg7: memref<32x32xbf16, #tpu.memory_space<vmem>>, %arg8: memref<1x32xf32, #tpu.memory_space<vmem>>, %arg9: memref<32x32xbf16, #tpu.memory_space<vmem>>, %arg10: memref<1x32xf32, #tpu.memory_space<vmem>>, %arg11: memref<32x32xbf16, #tpu.memory_space<vmem>>, %arg12: memref<1x32xf32, #tpu.memory_space<vmem>>, %arg13: memref<32x32xbf16, #tpu.memory_space<vmem>>, %arg14: memref<1x32xf32, #tpu.memory_space<vmem>>, %arg15: memref<32x32xbf16, #tpu.memory_space<vmem>>, %arg16: memref<1x32xf32, #tpu.memory_space<vmem>>, %arg17: memref<32x32xbf16, #tpu.memory_space<vmem>>, %arg18: memref<1x32xf32, #tpu.memory_space<vmem>>, %arg19: memref<32x32xbf16, #tpu.memory_space<vmem>>, %arg20: memref<1x32xf32, #tpu.memory_space<vmem>>, %arg21: memref<32x32xbf16, #tpu.memory_space<vmem>>, %arg22: memref<1x32xf32, #tpu.memory_space<vmem>>, %arg23: memref<1x32xf32, #tpu.memory_space<vmem>>, %arg24: memref<1x32xf32, #tpu.memory_space<vmem>>, %arg25: memref<1x32xf32, #tpu.memory_space<vmem>>, %arg26: memref<1x32xf32, #tpu.memory_space<vmem>>, %arg27: memref<32x128xbf16, #tpu.memory_space<vmem>>, %arg28: memref<1x128xf32, #tpu.memory_space<vmem>>, %arg29: memref<128x32xbf16, #tpu.memory_space<vmem>>, %arg30: memref<1x32xf32, #tpu.memory_space<vmem>>, %arg31: memref<1x8x32xf32, #tpu.memory_space<vmem>>) attributes {dimension_semantics = [#tpu.dimension_semantics<parallel>, #tpu.dimension_semantics<parallel>], iteration_bounds = array<i64: 2, 1>, scalar_prefetch = 0 : i64, scratch_operands = 0 : i64, tpu.core_type = #tpu.core_type<tc>, window_params = [{transform_indices = @transform_0, window_bounds = array<i64: 1, 8, 32>}, {transform_indices = @transform_1, window_bounds = array<i64: 1, 8, 32>}, {transform_indices = @transform_2, window_bounds = array<i64: 1, 8, 32>}, {transform_indices = @transform_3, window_bounds = array<i64: 1, 1, 8>}, {transform_indices = @transform_4, window_bounds = array<i64: 1, 1, 8>}, {pipeline_mode = #tpu.pipeline_mode<synchronous>, transform_indices = @transform_5, window_bounds = array<i64: 32, 32>}, {pipeline_mode = #tpu.pipeline_mode<synchronous>, transform_indices = @transform_6, window_bounds = array<i64: 1, 32>}, {pipeline_mode = #tpu.pipeline_mode<synchronous>, transform_indices = @transform_7, window_bounds = array<i64: 32, 32>}, {pipeline_mode = #tpu.pipeline_mode<synchronous>, transform_indices = @transform_8, window_bounds = array<i64: 1, 32>}, {pipeline_mode = #tpu.pipeline_mode<synchronous>, transform_indices = @transform_9, window_bounds = array<i64: 32, 32>}, {pipeline_mode = #tpu.pipeline_mode<synchronous>, transform_indices = @transform_10, window_bounds = array<i64: 1, 32>}, {pipeline_mode = #tpu.pipeline_mode<synchronous>, transform_indices = @transform_11, window_bounds = array<i64: 32, 32>}, {pipeline_mode = #tpu.pipeline_mode<synchronous>, transform_indices = @transform_12, window_bounds = array<i64: 1, 32>}, {pipeline_mode = #tpu.pipeline_mode<synchronous>, transform_indices = @transform_13, window_bounds = array<i64: 32, 32>}, {pipeline_mode = #tpu.pipeline_mode<synchronous>, transform_indices = @transform_14, window_bounds = array<i64: 1, 32>}, {pipeline_mode = #tpu.pipeline_mode<synchronous>, transform_indices = @transform_15, window_bounds = array<i64: 32, 32>}, {pipeline_mode = #tpu.pipeline_mode<synchronous>, transform_indices = @transform_16, window_bounds = array<i64: 1, 32>}, {pipeline_mode = #tpu.pipeline_mode<synchronous>, transform_indices = @transform_17, window_bounds = array<i64: 32, 32>}, {pipeline_mode = #tpu.pipeline_mode<synchronous>, transform_indices = @transform_18, window_bounds = array<i64: 1, 32>}, {pipeline_mode = #tpu.pipeline_mode<synchronous>, transform_indices = @transform_19, window_bounds = array<i64: 32, 32>}, {pipeline_mode = #tpu.pipeline_mode<synchronous>, transform_indices = @transform_20, window_bounds = array<i64: 1, 32>}, {pipeline_mode = #tpu.pipeline_mode<synchronous>, transform_indices = @transform_21, window_bounds = array<i64: 1, 32>}, {pipeline_mode = #tpu.pipeline_mode<synchronous>, transform_indices = @transform_22, window_bounds = array<i64: 1, 32>}, {pipeline_mode = #tpu.pipeline_mode<synchronous>, transform_indices = @transform_23, window_bounds = array<i64: 1, 32>}, {pipeline_mode = #tpu.pipeline_mode<synchronous>, transform_indices = @transform_24, window_bounds = array<i64: 1, 32>}, {pipeline_mode = #tpu.pipeline_mode<synchronous>, transform_indices = @transform_25, window_bounds = array<i64: 32, 128>}, {pipeline_mode = #tpu.pipeline_mode<synchronous>, transform_indices = @transform_26, window_bounds = array<i64: 1, 128>}, {pipeline_mode = #tpu.pipeline_mode<synchronous>, transform_indices = @transform_27, window_bounds = array<i64: 128, 32>}, {pipeline_mode = #tpu.pipeline_mode<synchronous>, transform_indices = @transform_28, window_bounds = array<i64: 1, 32>}, {transform_indices = @transform_29, window_bounds = array<i64: 1, 8, 32>}]} {
    %c0 = arith.constant 0 : index
    %c0_0 = arith.constant 0 : index
    %c0_1 = arith.constant 0 : index
    %0 = vector.load %arg2[%c0, %c0_0, %c0_1] : memref<1x8x32xf32, #tpu.memory_space<vmem>>, vector<1x8x32xf32>
    %1 = vector.shape_cast %0 : vector<1x8x32xf32> to vector<8x32xf32>
    %c0_2 = arith.constant 0 : index
    %c0_3 = arith.constant 0 : index
    %c0_4 = arith.constant 0 : index
    %2 = vector.load %arg3[%c0_2, %c0_3, %c0_4] : memref<1x8x32xf32, #tpu.memory_space<vmem>>, vector<1x8x32xf32>
    %3 = vector.shape_cast %2 : vector<1x8x32xf32> to vector<8x32xf32>
    %c0_5 = arith.constant 0 : index
    %c0_6 = arith.constant 0 : index
    %c0_7 = arith.constant 0 : index
    %4 = vector.load %arg4[%c0_5, %c0_6, %c0_7] : memref<1x8x32xf32, #tpu.memory_space<vmem>>, vector<1x8x32xf32>
    %5 = vector.shape_cast %4 : vector<1x8x32xf32> to vector<8x32xf32>
    %c0_8 = arith.constant 0 : index
    %c0_9 = arith.constant 0 : index
    %c0_10 = arith.constant 0 : index
    %6 = vector.load %arg5[%c0_8, %c0_9, %c0_10] : memref<1x1x8xf32, #tpu.memory_space<vmem>>, vector<1x1x8xf32>
    %7 = vector.shape_cast %6 : vector<1x1x8xf32> to vector<1x8xf32>
    %c0_11 = arith.constant 0 : index
    %c0_12 = arith.constant 0 : index
    %c0_13 = arith.constant 0 : index
    %8 = vector.load %arg6[%c0_11, %c0_12, %c0_13] : memref<1x1x8xf32, #tpu.memory_space<vmem>>, vector<1x1x8xf32>
    %9 = vector.shape_cast %8 : vector<1x1x8xf32> to vector<1x8xf32>
    %c0_14 = arith.constant 0 : index
    %c0_15 = arith.constant 0 : index
    %10 = vector.load %arg7[%c0_14, %c0_15] : memref<32x32xbf16, #tpu.memory_space<vmem>>, vector<32x32xbf16>
    %c0_16 = arith.constant 0 : index
    %c0_17 = arith.constant 0 : index
    %11 = vector.load %arg8[%c0_16, %c0_17] : memref<1x32xf32, #tpu.memory_space<vmem>>, vector<1x32xf32>
    %c0_18 = arith.constant 0 : index
    %c0_19 = arith.constant 0 : index
    %12 = vector.load %arg9[%c0_18, %c0_19] : memref<32x32xbf16, #tpu.memory_space<vmem>>, vector<32x32xbf16>
    %c0_20 = arith.constant 0 : index
    %c0_21 = arith.constant 0 : index
    %13 = vector.load %arg10[%c0_20, %c0_21] : memref<1x32xf32, #tpu.memory_space<vmem>>, vector<1x32xf32>
    %c0_22 = arith.constant 0 : index
    %c0_23 = arith.constant 0 : index
    %14 = vector.load %arg11[%c0_22, %c0_23] : memref<32x32xbf16, #tpu.memory_space<vmem>>, vector<32x32xbf16>
    %c0_24 = arith.constant 0 : index
    %c0_25 = arith.constant 0 : index
    %15 = vector.load %arg12[%c0_24, %c0_25] : memref<1x32xf32, #tpu.memory_space<vmem>>, vector<1x32xf32>
    %c0_26 = arith.constant 0 : index
    %c0_27 = arith.constant 0 : index
    %16 = vector.load %arg13[%c0_26, %c0_27] : memref<32x32xbf16, #tpu.memory_space<vmem>>, vector<32x32xbf16>
    %c0_28 = arith.constant 0 : index
    %c0_29 = arith.constant 0 : index
    %17 = vector.load %arg14[%c0_28, %c0_29] : memref<1x32xf32, #tpu.memory_space<vmem>>, vector<1x32xf32>
    %18 = arith.truncf %1 : vector<8x32xf32> to vector<8x32xbf16>
    %19 = arith.truncf %3 : vector<8x32xf32> to vector<8x32xbf16>
    %cst = arith.constant dense<0.000000e+00> : vector<8x32xf32>
    %20 = tpu.matmul %19, %10, %cst {dimension_numbers = #tpu.dot_dimension_numbers<[1], [0], [0], [1], [0, 0, 1, 1], [], []>} : vector<8x32xbf16>, vector<32x32xbf16>, vector<8x32xf32> -> vector<8x32xf32>
    %21 = vector.broadcast %11 : vector<1x32xf32> to vector<8x32xf32>
    %22 = arith.addf %20, %21 : vector<8x32xf32>
    %cst_30 = arith.constant dense<0.000000e+00> : vector<8x32xf32>
    %23 = tpu.matmul %19, %12, %cst_30 {dimension_numbers = #tpu.dot_dimension_numbers<[1], [0], [0], [1], [0, 0, 1, 1], [], []>} : vector<8x32xbf16>, vector<32x32xbf16>, vector<8x32xf32> -> vector<8x32xf32>
    %24 = vector.broadcast %13 : vector<1x32xf32> to vector<8x32xf32>
    %25 = arith.addf %23, %24 : vector<8x32xf32>
    %cst_31 = arith.constant dense<0.000000e+00> : vector<8x32xf32>
    %26 = tpu.matmul %18, %14, %cst_31 {dimension_numbers = #tpu.dot_dimension_numbers<[1], [0], [0], [1], [0, 0, 1, 1], [], []>} : vector<8x32xbf16>, vector<32x32xbf16>, vector<8x32xf32> -> vector<8x32xf32>
    %27 = vector.broadcast %15 : vector<1x32xf32> to vector<8x32xf32>
    %28 = arith.addf %26, %27 : vector<8x32xf32>
    %cst_32 = arith.constant 0.353553385 : f32
    %29 = vector.broadcast %cst_32 : f32 to vector<8x32xf32>
    %30 = arith.mulf %28, %29 : vector<8x32xf32>
    %cst_33 = arith.constant 0.000000e+00 : f32
    %31 = vector.broadcast %cst_33 : f32 to vector<1x8xf32>
    %32 = arith.cmpf ogt, %7, %31 : vector<1x8xf32>
    %cst_34 = arith.constant 0.000000e+00 : f32
    %cst_35 = arith.constant -1.000000e+30 : f32
    %33 = vector.broadcast %cst_34 : f32 to vector<1x8xf32>
    %34 = vector.broadcast %cst_35 : f32 to vector<1x8xf32>
    %35 = arith.select %32, %33, %34 : vector<1x8xi1>, vector<1x8xf32>
    %36 = vector.shape_cast %35 : vector<1x8xf32> to vector<1x8xf32>
    %37 = vector.broadcast %36 : vector<1x8xf32> to vector<8x8xf32>
    %38 = arith.truncf %30 : vector<8x32xf32> to vector<8x32xbf16>
    %39 = arith.truncf %22 : vector<8x32xf32> to vector<8x32xbf16>
    %40 = arith.truncf %25 : vector<8x32xf32> to vector<8x32xbf16>
    %41 = vector.extract_strided_slice %38 {offsets = [0, 0], sizes = [8, 8], strides = [1, 1]} : vector<8x32xbf16> to vector<8x8xbf16>
    %42 = vector.extract_strided_slice %39 {offsets = [0, 0], sizes = [8, 8], strides = [1, 1]} : vector<8x32xbf16> to vector<8x8xbf16>
    %43 = vector.extract_strided_slice %40 {offsets = [0, 0], sizes = [8, 8], strides = [1, 1]} : vector<8x32xbf16> to vector<8x8xbf16>
    %cst_36 = arith.constant dense<0.000000e+00> : vector<8x8xf32>
    %44 = tpu.matmul %41, %42, %cst_36 {dimension_numbers = #tpu.dot_dimension_numbers<[1], [1], [0], [0], [0, 0, 1, 0], [], []>} : vector<8x8xbf16>, vector<8x8xbf16>, vector<8x8xf32> -> vector<8x8xf32>
    %45 = arith.addf %44, %37 : vector<8x8xf32>
    %cst_37 = arith.constant dense<0xFF800000> : vector<8xf32>
    %46 = vector.multi_reduction <maximumf>, %45, %cst_37 [1] : vector<8x8xf32> to vector<8xf32>
    %47 = vector.shape_cast %46 : vector<8xf32> to vector<8x1xf32>
    %48 = vector.broadcast %47 : vector<8x1xf32> to vector<8x8xf32>
    %49 = arith.subf %45, %48 : vector<8x8xf32>
    %50 = math.exp %49 : vector<8x8xf32>
    %cst_38 = arith.constant dense<0.000000e+00> : vector<8xf32>
    %51 = vector.multi_reduction <add>, %50, %cst_38 [1] : vector<8x8xf32> to vector<8xf32>
    %52 = vector.shape_cast %51 : vector<8xf32> to vector<8x1xf32>
    %53 = tpu.reciprocal %52 {approx = true} : vector<8x1xf32> -> vector<8x1xf32>
    %54 = vector.broadcast %53 : vector<8x1xf32> to vector<8x8xf32>
    %55 = arith.mulf %50, %54 : vector<8x8xf32>
    %56 = arith.truncf %55 : vector<8x8xf32> to vector<8x8xbf16>
    %cst_39 = arith.constant dense<0.000000e+00> : vector<8x8xf32>
    %57 = tpu.matmul %56, %43, %cst_39 {dimension_numbers = #tpu.dot_dimension_numbers<[1], [0], [0], [1], [0, 0, 1, 1], [], []>} : vector<8x8xbf16>, vector<8x8xbf16>, vector<8x8xf32> -> vector<8x8xf32>
    %58 = vector.extract_strided_slice %38 {offsets = [0, 8], sizes = [8, 8], strides = [1, 1]} : vector<8x32xbf16> to vector<8x8xbf16>
    %59 = vector.extract_strided_slice %39 {offsets = [0, 8], sizes = [8, 8], strides = [1, 1]} : vector<8x32xbf16> to vector<8x8xbf16>
    %60 = vector.extract_strided_slice %40 {offsets = [0, 8], sizes = [8, 8], strides = [1, 1]} : vector<8x32xbf16> to vector<8x8xbf16>
    %cst_40 = arith.constant dense<0.000000e+00> : vector<8x8xf32>
    %61 = tpu.matmul %58, %59, %cst_40 {dimension_numbers = #tpu.dot_dimension_numbers<[1], [1], [0], [0], [0, 0, 1, 0], [], []>} : vector<8x8xbf16>, vector<8x8xbf16>, vector<8x8xf32> -> vector<8x8xf32>
    %62 = arith.addf %61, %37 : vector<8x8xf32>
    %cst_41 = arith.constant dense<0xFF800000> : vector<8xf32>
    %63 = vector.multi_reduction <maximumf>, %62, %cst_41 [1] : vector<8x8xf32> to vector<8xf32>
    %64 = vector.shape_cast %63 : vector<8xf32> to vector<8x1xf32>
    %65 = vector.broadcast %64 : vector<8x1xf32> to vector<8x8xf32>
    %66 = arith.subf %62, %65 : vector<8x8xf32>
    %67 = math.exp %66 : vector<8x8xf32>
    %cst_42 = arith.constant dense<0.000000e+00> : vector<8xf32>
    %68 = vector.multi_reduction <add>, %67, %cst_42 [1] : vector<8x8xf32> to vector<8xf32>
    %69 = vector.shape_cast %68 : vector<8xf32> to vector<8x1xf32>
    %70 = tpu.reciprocal %69 {approx = true} : vector<8x1xf32> -> vector<8x1xf32>
    %71 = vector.broadcast %70 : vector<8x1xf32> to vector<8x8xf32>
    %72 = arith.mulf %67, %71 : vector<8x8xf32>
    %73 = arith.truncf %72 : vector<8x8xf32> to vector<8x8xbf16>
    %cst_43 = arith.constant dense<0.000000e+00> : vector<8x8xf32>
    %74 = tpu.matmul %73, %60, %cst_43 {dimension_numbers = #tpu.dot_dimension_numbers<[1], [0], [0], [1], [0, 0, 1, 1], [], []>} : vector<8x8xbf16>, vector<8x8xbf16>, vector<8x8xf32> -> vector<8x8xf32>
    %75 = vector.extract_strided_slice %38 {offsets = [0, 16], sizes = [8, 8], strides = [1, 1]} : vector<8x32xbf16> to vector<8x8xbf16>
    %76 = vector.extract_strided_slice %39 {offsets = [0, 16], sizes = [8, 8], strides = [1, 1]} : vector<8x32xbf16> to vector<8x8xbf16>
    %77 = vector.extract_strided_slice %40 {offsets = [0, 16], sizes = [8, 8], strides = [1, 1]} : vector<8x32xbf16> to vector<8x8xbf16>
    %cst_44 = arith.constant dense<0.000000e+00> : vector<8x8xf32>
    %78 = tpu.matmul %75, %76, %cst_44 {dimension_numbers = #tpu.dot_dimension_numbers<[1], [1], [0], [0], [0, 0, 1, 0], [], []>} : vector<8x8xbf16>, vector<8x8xbf16>, vector<8x8xf32> -> vector<8x8xf32>
    %79 = arith.addf %78, %37 : vector<8x8xf32>
    %cst_45 = arith.constant dense<0xFF800000> : vector<8xf32>
    %80 = vector.multi_reduction <maximumf>, %79, %cst_45 [1] : vector<8x8xf32> to vector<8xf32>
    %81 = vector.shape_cast %80 : vector<8xf32> to vector<8x1xf32>
    %82 = vector.broadcast %81 : vector<8x1xf32> to vector<8x8xf32>
    %83 = arith.subf %79, %82 : vector<8x8xf32>
    %84 = math.exp %83 : vector<8x8xf32>
    %cst_46 = arith.constant dense<0.000000e+00> : vector<8xf32>
    %85 = vector.multi_reduction <add>, %84, %cst_46 [1] : vector<8x8xf32> to vector<8xf32>
    %86 = vector.shape_cast %85 : vector<8xf32> to vector<8x1xf32>
    %87 = tpu.reciprocal %86 {approx = true} : vector<8x1xf32> -> vector<8x1xf32>
    %88 = vector.broadcast %87 : vector<8x1xf32> to vector<8x8xf32>
    %89 = arith.mulf %84, %88 : vector<8x8xf32>
    %90 = arith.truncf %89 : vector<8x8xf32> to vector<8x8xbf16>
    %cst_47 = arith.constant dense<0.000000e+00> : vector<8x8xf32>
    %91 = tpu.matmul %90, %77, %cst_47 {dimension_numbers = #tpu.dot_dimension_numbers<[1], [0], [0], [1], [0, 0, 1, 1], [], []>} : vector<8x8xbf16>, vector<8x8xbf16>, vector<8x8xf32> -> vector<8x8xf32>
    %92 = vector.extract_strided_slice %38 {offsets = [0, 24], sizes = [8, 8], strides = [1, 1]} : vector<8x32xbf16> to vector<8x8xbf16>
    %93 = vector.extract_strided_slice %39 {offsets = [0, 24], sizes = [8, 8], strides = [1, 1]} : vector<8x32xbf16> to vector<8x8xbf16>
    %94 = vector.extract_strided_slice %40 {offsets = [0, 24], sizes = [8, 8], strides = [1, 1]} : vector<8x32xbf16> to vector<8x8xbf16>
    %cst_48 = arith.constant dense<0.000000e+00> : vector<8x8xf32>
    %95 = tpu.matmul %92, %93, %cst_48 {dimension_numbers = #tpu.dot_dimension_numbers<[1], [1], [0], [0], [0, 0, 1, 0], [], []>} : vector<8x8xbf16>, vector<8x8xbf16>, vector<8x8xf32> -> vector<8x8xf32>
    %96 = arith.addf %95, %37 : vector<8x8xf32>
    %cst_49 = arith.constant dense<0xFF800000> : vector<8xf32>
    %97 = vector.multi_reduction <maximumf>, %96, %cst_49 [1] : vector<8x8xf32> to vector<8xf32>
    %98 = vector.shape_cast %97 : vector<8xf32> to vector<8x1xf32>
    %99 = vector.broadcast %98 : vector<8x1xf32> to vector<8x8xf32>
    %100 = arith.subf %96, %99 : vector<8x8xf32>
    %101 = math.exp %100 : vector<8x8xf32>
    %cst_50 = arith.constant dense<0.000000e+00> : vector<8xf32>
    %102 = vector.multi_reduction <add>, %101, %cst_50 [1] : vector<8x8xf32> to vector<8xf32>
    %103 = vector.shape_cast %102 : vector<8xf32> to vector<8x1xf32>
    %104 = tpu.reciprocal %103 {approx = true} : vector<8x1xf32> -> vector<8x1xf32>
    %105 = vector.broadcast %104 : vector<8x1xf32> to vector<8x8xf32>
    %106 = arith.mulf %101, %105 : vector<8x8xf32>
    %107 = arith.truncf %106 : vector<8x8xf32> to vector<8x8xbf16>
    %cst_51 = arith.constant dense<0.000000e+00> : vector<8x8xf32>
    %108 = tpu.matmul %107, %94, %cst_51 {dimension_numbers = #tpu.dot_dimension_numbers<[1], [0], [0], [1], [0, 0, 1, 1], [], []>} : vector<8x8xbf16>, vector<8x8xbf16>, vector<8x8xf32> -> vector<8x8xf32>
    %109 = tpu.concatenate %57, %74, %91, %108 in 1 : vector<8x8xf32>, vector<8x8xf32>, vector<8x8xf32>, vector<8x8xf32> -> vector<8x32xf32>
    %110 = arith.truncf %109 : vector<8x32xf32> to vector<8x32xbf16>
    %cst_52 = arith.constant dense<0.000000e+00> : vector<8x32xf32>
    %111 = tpu.matmul %110, %16, %cst_52 {dimension_numbers = #tpu.dot_dimension_numbers<[1], [0], [0], [1], [0, 0, 1, 1], [], []>} : vector<8x32xbf16>, vector<32x32xbf16>, vector<8x32xf32> -> vector<8x32xf32>
    %112 = vector.broadcast %17 : vector<1x32xf32> to vector<8x32xf32>
    %113 = arith.addf %111, %112 : vector<8x32xf32>
    %114 = arith.addf %113, %1 : vector<8x32xf32>
    %c0_53 = arith.constant 0 : index
    %c0_54 = arith.constant 0 : index
    %115 = vector.load %arg23[%c0_53, %c0_54] : memref<1x32xf32, #tpu.memory_space<vmem>>, vector<1x32xf32>
    %c0_55 = arith.constant 0 : index
    %c0_56 = arith.constant 0 : index
    %116 = vector.load %arg24[%c0_55, %c0_56] : memref<1x32xf32, #tpu.memory_space<vmem>>, vector<1x32xf32>
    %cst_57 = arith.constant dense<0.000000e+00> : vector<8xf32>
    %117 = vector.multi_reduction <add>, %114, %cst_57 [1] : vector<8x32xf32> to vector<8xf32>
    %118 = vector.shape_cast %117 : vector<8xf32> to vector<8x1xf32>
    %cst_58 = arith.constant 3.200000e+01 : f32
    %119 = vector.broadcast %cst_58 : f32 to vector<8x1xf32>
    %120 = arith.divf %118, %119 : vector<8x1xf32>
    %121 = vector.broadcast %120 : vector<8x1xf32> to vector<8x32xf32>
    %122 = arith.subf %114, %121 : vector<8x32xf32>
    %123 = arith.mulf %122, %122 : vector<8x32xf32>
    %cst_59 = arith.constant dense<0.000000e+00> : vector<8xf32>
    %124 = vector.multi_reduction <add>, %123, %cst_59 [1] : vector<8x32xf32> to vector<8xf32>
    %125 = vector.shape_cast %124 : vector<8xf32> to vector<8x1xf32>
    %cst_60 = arith.constant 3.200000e+01 : f32
    %126 = vector.broadcast %cst_60 : f32 to vector<8x1xf32>
    %127 = arith.divf %125, %126 : vector<8x1xf32>
    %128 = vector.broadcast %120 : vector<8x1xf32> to vector<8x32xf32>
    %129 = arith.subf %114, %128 : vector<8x32xf32>
    %cst_61 = arith.constant 9.99999974E-6 : f32
    %130 = vector.broadcast %cst_61 : f32 to vector<8x1xf32>
    %131 = arith.addf %127, %130 : vector<8x1xf32>
    %132 = math.rsqrt %131 : vector<8x1xf32>
    %133 = vector.broadcast %132 : vector<8x1xf32> to vector<8x32xf32>
    %134 = arith.mulf %129, %133 : vector<8x32xf32>
    %135 = vector.broadcast %115 : vector<1x32xf32> to vector<8x32xf32>
    %136 = arith.mulf %134, %135 : vector<8x32xf32>
    %137 = vector.broadcast %116 : vector<1x32xf32> to vector<8x32xf32>
    %138 = arith.addf %136, %137 : vector<8x32xf32>
    %c0_62 = arith.constant 0 : index
    %c0_63 = arith.constant 0 : index
    %139 = vector.load %arg15[%c0_62, %c0_63] : memref<32x32xbf16, #tpu.memory_space<vmem>>, vector<32x32xbf16>
    %c0_64 = arith.constant 0 : index
    %c0_65 = arith.constant 0 : index
    %140 = vector.load %arg16[%c0_64, %c0_65] : memref<1x32xf32, #tpu.memory_space<vmem>>, vector<1x32xf32>
    %c0_66 = arith.constant 0 : index
    %c0_67 = arith.constant 0 : index
    %141 = vector.load %arg17[%c0_66, %c0_67] : memref<32x32xbf16, #tpu.memory_space<vmem>>, vector<32x32xbf16>
    %c0_68 = arith.constant 0 : index
    %c0_69 = arith.constant 0 : index
    %142 = vector.load %arg18[%c0_68, %c0_69] : memref<1x32xf32, #tpu.memory_space<vmem>>, vector<1x32xf32>
    %c0_70 = arith.constant 0 : index
    %c0_71 = arith.constant 0 : index
    %143 = vector.load %arg19[%c0_70, %c0_71] : memref<32x32xbf16, #tpu.memory_space<vmem>>, vector<32x32xbf16>
    %c0_72 = arith.constant 0 : index
    %c0_73 = arith.constant 0 : index
    %144 = vector.load %arg20[%c0_72, %c0_73] : memref<1x32xf32, #tpu.memory_space<vmem>>, vector<1x32xf32>
    %c0_74 = arith.constant 0 : index
    %c0_75 = arith.constant 0 : index
    %145 = vector.load %arg21[%c0_74, %c0_75] : memref<32x32xbf16, #tpu.memory_space<vmem>>, vector<32x32xbf16>
    %c0_76 = arith.constant 0 : index
    %c0_77 = arith.constant 0 : index
    %146 = vector.load %arg22[%c0_76, %c0_77] : memref<1x32xf32, #tpu.memory_space<vmem>>, vector<1x32xf32>
    %147 = arith.truncf %138 : vector<8x32xf32> to vector<8x32xbf16>
    %148 = arith.truncf %5 : vector<8x32xf32> to vector<8x32xbf16>
    %cst_78 = arith.constant dense<0.000000e+00> : vector<8x32xf32>
    %149 = tpu.matmul %148, %139, %cst_78 {dimension_numbers = #tpu.dot_dimension_numbers<[1], [0], [0], [1], [0, 0, 1, 1], [], []>} : vector<8x32xbf16>, vector<32x32xbf16>, vector<8x32xf32> -> vector<8x32xf32>
    %150 = vector.broadcast %140 : vector<1x32xf32> to vector<8x32xf32>
    %151 = arith.addf %149, %150 : vector<8x32xf32>
    %cst_79 = arith.constant dense<0.000000e+00> : vector<8x32xf32>
    %152 = tpu.matmul %148, %141, %cst_79 {dimension_numbers = #tpu.dot_dimension_numbers<[1], [0], [0], [1], [0, 0, 1, 1], [], []>} : vector<8x32xbf16>, vector<32x32xbf16>, vector<8x32xf32> -> vector<8x32xf32>
    %153 = vector.broadcast %142 : vector<1x32xf32> to vector<8x32xf32>
    %154 = arith.addf %152, %153 : vector<8x32xf32>
    %cst_80 = arith.constant dense<0.000000e+00> : vector<8x32xf32>
    %155 = tpu.matmul %147, %143, %cst_80 {dimension_numbers = #tpu.dot_dimension_numbers<[1], [0], [0], [1], [0, 0, 1, 1], [], []>} : vector<8x32xbf16>, vector<32x32xbf16>, vector<8x32xf32> -> vector<8x32xf32>
    %156 = vector.broadcast %144 : vector<1x32xf32> to vector<8x32xf32>
    %157 = arith.addf %155, %156 : vector<8x32xf32>
    %cst_81 = arith.constant 0.353553385 : f32
    %158 = vector.broadcast %cst_81 : f32 to vector<8x32xf32>
    %159 = arith.mulf %157, %158 : vector<8x32xf32>
    %cst_82 = arith.constant 0.000000e+00 : f32
    %160 = vector.broadcast %cst_82 : f32 to vector<1x8xf32>
    %161 = arith.cmpf ogt, %9, %160 : vector<1x8xf32>
    %cst_83 = arith.constant 0.000000e+00 : f32
    %cst_84 = arith.constant -1.000000e+30 : f32
    %162 = vector.broadcast %cst_83 : f32 to vector<1x8xf32>
    %163 = vector.broadcast %cst_84 : f32 to vector<1x8xf32>
    %164 = arith.select %161, %162, %163 : vector<1x8xi1>, vector<1x8xf32>
    %165 = vector.shape_cast %164 : vector<1x8xf32> to vector<1x8xf32>
    %166 = vector.broadcast %165 : vector<1x8xf32> to vector<8x8xf32>
    %167 = arith.truncf %159 : vector<8x32xf32> to vector<8x32xbf16>
    %168 = arith.truncf %151 : vector<8x32xf32> to vector<8x32xbf16>
    %169 = arith.truncf %154 : vector<8x32xf32> to vector<8x32xbf16>
    %170 = vector.extract_strided_slice %167 {offsets = [0, 0], sizes = [8, 8], strides = [1, 1]} : vector<8x32xbf16> to vector<8x8xbf16>
    %171 = vector.extract_strided_slice %168 {offsets = [0, 0], sizes = [8, 8], strides = [1, 1]} : vector<8x32xbf16> to vector<8x8xbf16>
    %172 = vector.extract_strided_slice %169 {offsets = [0, 0], sizes = [8, 8], strides = [1, 1]} : vector<8x32xbf16> to vector<8x8xbf16>
    %cst_85 = arith.constant dense<0.000000e+00> : vector<8x8xf32>
    %173 = tpu.matmul %170, %171, %cst_85 {dimension_numbers = #tpu.dot_dimension_numbers<[1], [1], [0], [0], [0, 0, 1, 0], [], []>} : vector<8x8xbf16>, vector<8x8xbf16>, vector<8x8xf32> -> vector<8x8xf32>
    %174 = arith.addf %173, %166 : vector<8x8xf32>
    %cst_86 = arith.constant dense<0xFF800000> : vector<8xf32>
    %175 = vector.multi_reduction <maximumf>, %174, %cst_86 [1] : vector<8x8xf32> to vector<8xf32>
    %176 = vector.shape_cast %175 : vector<8xf32> to vector<8x1xf32>
    %177 = vector.broadcast %176 : vector<8x1xf32> to vector<8x8xf32>
    %178 = arith.subf %174, %177 : vector<8x8xf32>
    %179 = math.exp %178 : vector<8x8xf32>
    %cst_87 = arith.constant dense<0.000000e+00> : vector<8xf32>
    %180 = vector.multi_reduction <add>, %179, %cst_87 [1] : vector<8x8xf32> to vector<8xf32>
    %181 = vector.shape_cast %180 : vector<8xf32> to vector<8x1xf32>
    %182 = tpu.reciprocal %181 {approx = true} : vector<8x1xf32> -> vector<8x1xf32>
    %183 = vector.broadcast %182 : vector<8x1xf32> to vector<8x8xf32>
    %184 = arith.mulf %179, %183 : vector<8x8xf32>
    %185 = arith.truncf %184 : vector<8x8xf32> to vector<8x8xbf16>
    %cst_88 = arith.constant dense<0.000000e+00> : vector<8x8xf32>
    %186 = tpu.matmul %185, %172, %cst_88 {dimension_numbers = #tpu.dot_dimension_numbers<[1], [0], [0], [1], [0, 0, 1, 1], [], []>} : vector<8x8xbf16>, vector<8x8xbf16>, vector<8x8xf32> -> vector<8x8xf32>
    %187 = vector.extract_strided_slice %167 {offsets = [0, 8], sizes = [8, 8], strides = [1, 1]} : vector<8x32xbf16> to vector<8x8xbf16>
    %188 = vector.extract_strided_slice %168 {offsets = [0, 8], sizes = [8, 8], strides = [1, 1]} : vector<8x32xbf16> to vector<8x8xbf16>
    %189 = vector.extract_strided_slice %169 {offsets = [0, 8], sizes = [8, 8], strides = [1, 1]} : vector<8x32xbf16> to vector<8x8xbf16>
    %cst_89 = arith.constant dense<0.000000e+00> : vector<8x8xf32>
    %190 = tpu.matmul %187, %188, %cst_89 {dimension_numbers = #tpu.dot_dimension_numbers<[1], [1], [0], [0], [0, 0, 1, 0], [], []>} : vector<8x8xbf16>, vector<8x8xbf16>, vector<8x8xf32> -> vector<8x8xf32>
    %191 = arith.addf %190, %166 : vector<8x8xf32>
    %cst_90 = arith.constant dense<0xFF800000> : vector<8xf32>
    %192 = vector.multi_reduction <maximumf>, %191, %cst_90 [1] : vector<8x8xf32> to vector<8xf32>
    %193 = vector.shape_cast %192 : vector<8xf32> to vector<8x1xf32>
    %194 = vector.broadcast %193 : vector<8x1xf32> to vector<8x8xf32>
    %195 = arith.subf %191, %194 : vector<8x8xf32>
    %196 = math.exp %195 : vector<8x8xf32>
    %cst_91 = arith.constant dense<0.000000e+00> : vector<8xf32>
    %197 = vector.multi_reduction <add>, %196, %cst_91 [1] : vector<8x8xf32> to vector<8xf32>
    %198 = vector.shape_cast %197 : vector<8xf32> to vector<8x1xf32>
    %199 = tpu.reciprocal %198 {approx = true} : vector<8x1xf32> -> vector<8x1xf32>
    %200 = vector.broadcast %199 : vector<8x1xf32> to vector<8x8xf32>
    %201 = arith.mulf %196, %200 : vector<8x8xf32>
    %202 = arith.truncf %201 : vector<8x8xf32> to vector<8x8xbf16>
    %cst_92 = arith.constant dense<0.000000e+00> : vector<8x8xf32>
    %203 = tpu.matmul %202, %189, %cst_92 {dimension_numbers = #tpu.dot_dimension_numbers<[1], [0], [0], [1], [0, 0, 1, 1], [], []>} : vector<8x8xbf16>, vector<8x8xbf16>, vector<8x8xf32> -> vector<8x8xf32>
    %204 = vector.extract_strided_slice %167 {offsets = [0, 16], sizes = [8, 8], strides = [1, 1]} : vector<8x32xbf16> to vector<8x8xbf16>
    %205 = vector.extract_strided_slice %168 {offsets = [0, 16], sizes = [8, 8], strides = [1, 1]} : vector<8x32xbf16> to vector<8x8xbf16>
    %206 = vector.extract_strided_slice %169 {offsets = [0, 16], sizes = [8, 8], strides = [1, 1]} : vector<8x32xbf16> to vector<8x8xbf16>
    %cst_93 = arith.constant dense<0.000000e+00> : vector<8x8xf32>
    %207 = tpu.matmul %204, %205, %cst_93 {dimension_numbers = #tpu.dot_dimension_numbers<[1], [1], [0], [0], [0, 0, 1, 0], [], []>} : vector<8x8xbf16>, vector<8x8xbf16>, vector<8x8xf32> -> vector<8x8xf32>
    %208 = arith.addf %207, %166 : vector<8x8xf32>
    %cst_94 = arith.constant dense<0xFF800000> : vector<8xf32>
    %209 = vector.multi_reduction <maximumf>, %208, %cst_94 [1] : vector<8x8xf32> to vector<8xf32>
    %210 = vector.shape_cast %209 : vector<8xf32> to vector<8x1xf32>
    %211 = vector.broadcast %210 : vector<8x1xf32> to vector<8x8xf32>
    %212 = arith.subf %208, %211 : vector<8x8xf32>
    %213 = math.exp %212 : vector<8x8xf32>
    %cst_95 = arith.constant dense<0.000000e+00> : vector<8xf32>
    %214 = vector.multi_reduction <add>, %213, %cst_95 [1] : vector<8x8xf32> to vector<8xf32>
    %215 = vector.shape_cast %214 : vector<8xf32> to vector<8x1xf32>
    %216 = tpu.reciprocal %215 {approx = true} : vector<8x1xf32> -> vector<8x1xf32>
    %217 = vector.broadcast %216 : vector<8x1xf32> to vector<8x8xf32>
    %218 = arith.mulf %213, %217 : vector<8x8xf32>
    %219 = arith.truncf %218 : vector<8x8xf32> to vector<8x8xbf16>
    %cst_96 = arith.constant dense<0.000000e+00> : vector<8x8xf32>
    %220 = tpu.matmul %219, %206, %cst_96 {dimension_numbers = #tpu.dot_dimension_numbers<[1], [0], [0], [1], [0, 0, 1, 1], [], []>} : vector<8x8xbf16>, vector<8x8xbf16>, vector<8x8xf32> -> vector<8x8xf32>
    %221 = vector.extract_strided_slice %167 {offsets = [0, 24], sizes = [8, 8], strides = [1, 1]} : vector<8x32xbf16> to vector<8x8xbf16>
    %222 = vector.extract_strided_slice %168 {offsets = [0, 24], sizes = [8, 8], strides = [1, 1]} : vector<8x32xbf16> to vector<8x8xbf16>
    %223 = vector.extract_strided_slice %169 {offsets = [0, 24], sizes = [8, 8], strides = [1, 1]} : vector<8x32xbf16> to vector<8x8xbf16>
    %cst_97 = arith.constant dense<0.000000e+00> : vector<8x8xf32>
    %224 = tpu.matmul %221, %222, %cst_97 {dimension_numbers = #tpu.dot_dimension_numbers<[1], [1], [0], [0], [0, 0, 1, 0], [], []>} : vector<8x8xbf16>, vector<8x8xbf16>, vector<8x8xf32> -> vector<8x8xf32>
    %225 = arith.addf %224, %166 : vector<8x8xf32>
    %cst_98 = arith.constant dense<0xFF800000> : vector<8xf32>
    %226 = vector.multi_reduction <maximumf>, %225, %cst_98 [1] : vector<8x8xf32> to vector<8xf32>
    %227 = vector.shape_cast %226 : vector<8xf32> to vector<8x1xf32>
    %228 = vector.broadcast %227 : vector<8x1xf32> to vector<8x8xf32>
    %229 = arith.subf %225, %228 : vector<8x8xf32>
    %230 = math.exp %229 : vector<8x8xf32>
    %cst_99 = arith.constant dense<0.000000e+00> : vector<8xf32>
    %231 = vector.multi_reduction <add>, %230, %cst_99 [1] : vector<8x8xf32> to vector<8xf32>
    %232 = vector.shape_cast %231 : vector<8xf32> to vector<8x1xf32>
    %233 = tpu.reciprocal %232 {approx = true} : vector<8x1xf32> -> vector<8x1xf32>
    %234 = vector.broadcast %233 : vector<8x1xf32> to vector<8x8xf32>
    %235 = arith.mulf %230, %234 : vector<8x8xf32>
    %236 = arith.truncf %235 : vector<8x8xf32> to vector<8x8xbf16>
    %cst_100 = arith.constant dense<0.000000e+00> : vector<8x8xf32>
    %237 = tpu.matmul %236, %223, %cst_100 {dimension_numbers = #tpu.dot_dimension_numbers<[1], [0], [0], [1], [0, 0, 1, 1], [], []>} : vector<8x8xbf16>, vector<8x8xbf16>, vector<8x8xf32> -> vector<8x8xf32>
    %238 = tpu.concatenate %186, %203, %220, %237 in 1 : vector<8x8xf32>, vector<8x8xf32>, vector<8x8xf32>, vector<8x8xf32> -> vector<8x32xf32>
    %239 = arith.truncf %238 : vector<8x32xf32> to vector<8x32xbf16>
    %cst_101 = arith.constant dense<0.000000e+00> : vector<8x32xf32>
    %240 = tpu.matmul %239, %145, %cst_101 {dimension_numbers = #tpu.dot_dimension_numbers<[1], [0], [0], [1], [0, 0, 1, 1], [], []>} : vector<8x32xbf16>, vector<32x32xbf16>, vector<8x32xf32> -> vector<8x32xf32>
    %241 = vector.broadcast %146 : vector<1x32xf32> to vector<8x32xf32>
    %242 = arith.addf %240, %241 : vector<8x32xf32>
    %243 = arith.addf %242, %138 : vector<8x32xf32>
    %c0_102 = arith.constant 0 : index
    %c0_103 = arith.constant 0 : index
    %244 = vector.load %arg23[%c0_102, %c0_103] : memref<1x32xf32, #tpu.memory_space<vmem>>, vector<1x32xf32>
    %c0_104 = arith.constant 0 : index
    %c0_105 = arith.constant 0 : index
    %245 = vector.load %arg24[%c0_104, %c0_105] : memref<1x32xf32, #tpu.memory_space<vmem>>, vector<1x32xf32>
    %cst_106 = arith.constant dense<0.000000e+00> : vector<8xf32>
    %246 = vector.multi_reduction <add>, %243, %cst_106 [1] : vector<8x32xf32> to vector<8xf32>
    %247 = vector.shape_cast %246 : vector<8xf32> to vector<8x1xf32>
    %cst_107 = arith.constant 3.200000e+01 : f32
    %248 = vector.broadcast %cst_107 : f32 to vector<8x1xf32>
    %249 = arith.divf %247, %248 : vector<8x1xf32>
    %250 = vector.broadcast %249 : vector<8x1xf32> to vector<8x32xf32>
    %251 = arith.subf %243, %250 : vector<8x32xf32>
    %252 = arith.mulf %251, %251 : vector<8x32xf32>
    %cst_108 = arith.constant dense<0.000000e+00> : vector<8xf32>
    %253 = vector.multi_reduction <add>, %252, %cst_108 [1] : vector<8x32xf32> to vector<8xf32>
    %254 = vector.shape_cast %253 : vector<8xf32> to vector<8x1xf32>
    %cst_109 = arith.constant 3.200000e+01 : f32
    %255 = vector.broadcast %cst_109 : f32 to vector<8x1xf32>
    %256 = arith.divf %254, %255 : vector<8x1xf32>
    %257 = vector.broadcast %249 : vector<8x1xf32> to vector<8x32xf32>
    %258 = arith.subf %243, %257 : vector<8x32xf32>
    %cst_110 = arith.constant 9.99999974E-6 : f32
    %259 = vector.broadcast %cst_110 : f32 to vector<8x1xf32>
    %260 = arith.addf %256, %259 : vector<8x1xf32>
    %261 = math.rsqrt %260 : vector<8x1xf32>
    %262 = vector.broadcast %261 : vector<8x1xf32> to vector<8x32xf32>
    %263 = arith.mulf %258, %262 : vector<8x32xf32>
    %264 = vector.broadcast %244 : vector<1x32xf32> to vector<8x32xf32>
    %265 = arith.mulf %263, %264 : vector<8x32xf32>
    %266 = vector.broadcast %245 : vector<1x32xf32> to vector<8x32xf32>
    %267 = arith.addf %265, %266 : vector<8x32xf32>
    %268 = arith.truncf %267 : vector<8x32xf32> to vector<8x32xbf16>
    %c0_111 = arith.constant 0 : index
    %c0_112 = arith.constant 0 : index
    %269 = vector.load %arg27[%c0_111, %c0_112] : memref<32x128xbf16, #tpu.memory_space<vmem>>, vector<32x128xbf16>
    %cst_113 = arith.constant dense<0.000000e+00> : vector<8x128xf32>
    %270 = tpu.matmul %268, %269, %cst_113 {dimension_numbers = #tpu.dot_dimension_numbers<[1], [0], [0], [1], [0, 0, 1, 1], [], []>} : vector<8x32xbf16>, vector<32x128xbf16>, vector<8x128xf32> -> vector<8x128xf32>
    %c0_114 = arith.constant 0 : index
    %c0_115 = arith.constant 0 : index
    %271 = vector.load %arg28[%c0_114, %c0_115] : memref<1x128xf32, #tpu.memory_space<vmem>>, vector<1x128xf32>
    %272 = vector.broadcast %271 : vector<1x128xf32> to vector<8x128xf32>
    %273 = arith.addf %270, %272 : vector<8x128xf32>
    %cst_116 = arith.constant 0.000000e+00 : f32
    %274 = vector.broadcast %cst_116 : f32 to vector<8x128xf32>
    %275 = arith.maximumf %273, %274 : vector<8x128xf32>
    %276 = arith.truncf %275 : vector<8x128xf32> to vector<8x128xbf16>
    %c0_117 = arith.constant 0 : index
    %c0_118 = arith.constant 0 : index
    %277 = vector.load %arg29[%c0_117, %c0_118] : memref<128x32xbf16, #tpu.memory_space<vmem>>, vector<128x32xbf16>
    %cst_119 = arith.constant dense<0.000000e+00> : vector<8x32xf32>
    %278 = tpu.matmul %276, %277, %cst_119 {dimension_numbers = #tpu.dot_dimension_numbers<[1], [0], [0], [1], [0, 0, 1, 1], [], []>} : vector<8x128xbf16>, vector<128x32xbf16>, vector<8x32xf32> -> vector<8x32xf32>
    %c0_120 = arith.constant 0 : index
    %c0_121 = arith.constant 0 : index
    %279 = vector.load %arg30[%c0_120, %c0_121] : memref<1x32xf32, #tpu.memory_space<vmem>>, vector<1x32xf32>
    %280 = vector.broadcast %279 : vector<1x32xf32> to vector<8x32xf32>
    %281 = arith.addf %278, %280 : vector<8x32xf32>
    %282 = arith.addf %281, %267 : vector<8x32xf32>
    %c0_122 = arith.constant 0 : index
    %c0_123 = arith.constant 0 : index
    %283 = vector.load %arg25[%c0_122, %c0_123] : memref<1x32xf32, #tpu.memory_space<vmem>>, vector<1x32xf32>
    %c0_124 = arith.constant 0 : index
    %c0_125 = arith.constant 0 : index
    %284 = vector.load %arg26[%c0_124, %c0_125] : memref<1x32xf32, #tpu.memory_space<vmem>>, vector<1x32xf32>
    %cst_126 = arith.constant dense<0.000000e+00> : vector<8xf32>
    %285 = vector.multi_reduction <add>, %282, %cst_126 [1] : vector<8x32xf32> to vector<8xf32>
    %286 = vector.shape_cast %285 : vector<8xf32> to vector<8x1xf32>
    %cst_127 = arith.constant 3.200000e+01 : f32
    %287 = vector.broadcast %cst_127 : f32 to vector<8x1xf32>
    %288 = arith.divf %286, %287 : vector<8x1xf32>
    %289 = vector.broadcast %288 : vector<8x1xf32> to vector<8x32xf32>
    %290 = arith.subf %282, %289 : vector<8x32xf32>
    %291 = arith.mulf %290, %290 : vector<8x32xf32>
    %cst_128 = arith.constant dense<0.000000e+00> : vector<8xf32>
    %292 = vector.multi_reduction <add>, %291, %cst_128 [1] : vector<8x32xf32> to vector<8xf32>
    %293 = vector.shape_cast %292 : vector<8xf32> to vector<8x1xf32>
    %cst_129 = arith.constant 3.200000e+01 : f32
    %294 = vector.broadcast %cst_129 : f32 to vector<8x1xf32>
    %295 = arith.divf %293, %294 : vector<8x1xf32>
    %296 = vector.broadcast %288 : vector<8x1xf32> to vector<8x32xf32>
    %297 = arith.subf %282, %296 : vector<8x32xf32>
    %cst_130 = arith.constant 9.99999974E-6 : f32
    %298 = vector.broadcast %cst_130 : f32 to vector<8x1xf32>
    %299 = arith.addf %295, %298 : vector<8x1xf32>
    %300 = math.rsqrt %299 : vector<8x1xf32>
    %301 = vector.broadcast %300 : vector<8x1xf32> to vector<8x32xf32>
    %302 = arith.mulf %297, %301 : vector<8x32xf32>
    %303 = vector.broadcast %283 : vector<1x32xf32> to vector<8x32xf32>
    %304 = arith.mulf %302, %303 : vector<8x32xf32>
    %305 = vector.broadcast %284 : vector<1x32xf32> to vector<8x32xf32>
    %306 = arith.addf %304, %305 : vector<8x32xf32>
    %c0_131 = arith.constant 0 : index
    %c0_132 = arith.constant 0 : index
    %c0_133 = arith.constant 0 : index
    %307 = vector.load %arg31[%c0_131, %c0_132, %c0_133] : memref<1x8x32xf32, #tpu.memory_space<vmem>>, vector<1x8x32xf32>
    %308 = vector.shape_cast %307 : vector<1x8x32xf32> to vector<8x32xf32>
    %309 = vector.shape_cast %306 : vector<8x32xf32> to vector<1x8x32xf32>
    tpu.vector_store %arg31[%c0_131, %c0_132, %c0_133], %309 {strides = array<i32>} : memref<1x8x32xf32, #tpu.memory_space<vmem>>, vector<1x8x32xf32>,
    return
  }
  func.func @transform_0(%arg0: i32, %arg1: i32) -> (i32, i32, i32) {
    %c0_i32 = arith.constant 0 : i32
    %c0_i32_0 = arith.constant 0 : i32
    return %arg0, %arg1, %c0_i32 : i32, i32, i32
  }
  func.func @transform_1(%arg0: i32, %arg1: i32) -> (i32, i32, i32) {
    %c0_i32 = arith.constant 0 : i32
    %c0_i32_0 = arith.constant 0 : i32
    %c0_i32_1 = arith.constant 0 : i32
    return %arg0, %c0_i32, %c0_i32_0 : i32, i32, i32
  }
  func.func @transform_2(%arg0: i32, %arg1: i32) -> (i32, i32, i32) {
    %c0_i32 = arith.constant 0 : i32
    %c0_i32_0 = arith.constant 0 : i32
    %c0_i32_1 = arith.constant 0 : i32
    return %arg0, %c0_i32, %c0_i32_0 : i32, i32, i32
  }
  func.func @transform_3(%arg0: i32, %arg1: i32) -> (i32, i32, i32) {
    %c0_i32 = arith.constant 0 : i32
    %c0_i32_0 = arith.constant 0 : i32
    %c0_i32_1 = arith.constant 0 : i32
    return %arg0, %c0_i32, %c0_i32_0 : i32, i32, i32
  }
  func.func @transform_4(%arg0: i32, %arg1: i32) -> (i32, i32, i32) {
    %c0_i32 = arith.constant 0 : i32
    %c0_i32_0 = arith.constant 0 : i32
    %c0_i32_1 = arith.constant 0 : i32
    return %arg0, %c0_i32, %c0_i32_0 : i32, i32, i32
  }
  func.func @transform_5(%arg0: i32, %arg1: i32) -> (i32, i32) {
    %c0_i32 = arith.constant 0 : i32
    %c0_i32_0 = arith.constant 0 : i32
    %c0_i32_1 = arith.constant 0 : i32
    return %c0_i32, %c0_i32_0 : i32, i32
  }
  func.func @transform_6(%arg0: i32, %arg1: i32) -> (i32, i32) {
    %c0_i32 = arith.constant 0 : i32
    %c0_i32_0 = arith.constant 0 : i32
    %c0_i32_1 = arith.constant 0 : i32
    return %c0_i32, %c0_i32_0 : i32, i32
  }
  func.func @transform_7(%arg0: i32, %arg1: i32) -> (i32, i32) {
    %c0_i32 = arith.constant 0 : i32
    %c0_i32_0 = arith.constant 0 : i32
    %c0_i32_1 = arith.constant 0 : i32
    return %c0_i32, %c0_i32_0 : i32, i32
  }
  func.func @transform_8(%arg0: i32, %arg1: i32) -> (i32, i32) {
    %c0_i32 = arith.constant 0 : i32
    %c0_i32_0 = arith.constant 0 : i32
    %c0_i32_1 = arith.constant 0 : i32
    return %c0_i32, %c0_i32_0 : i32, i32
  }
  func.func @transform_9(%arg0: i32, %arg1: i32) -> (i32, i32) {
    %c0_i32 = arith.constant 0 : i32
    %c0_i32_0 = arith.constant 0 : i32
    %c0_i32_1 = arith.constant 0 : i32
    return %c0_i32, %c0_i32_0 : i32, i32
  }
  func.func @transform_10(%arg0: i32, %arg1: i32) -> (i32, i32) {
    %c0_i32 = arith.constant 0 : i32
    %c0_i32_0 = arith.constant 0 : i32
    %c0_i32_1 = arith.constant 0 : i32
    return %c0_i32, %c0_i32_0 : i32, i32
  }
  func.func @transform_11(%arg0: i32, %arg1: i32) -> (i32, i32) {
    %c0_i32 = arith.constant 0 : i32
    %c0_i32_0 = arith.constant 0 : i32
    %c0_i32_1 = arith.constant 0 : i32
    return %c0_i32, %c0_i32_0 : i32, i32
  }
  func.func @transform_12(%arg0: i32, %arg1: i32) -> (i32, i32) {
    %c0_i32 = arith.constant 0 : i32
    %c0_i32_0 = arith.constant 0 : i32
    %c0_i32_1 = arith.constant 0 : i32
    return %c0_i32, %c0_i32_0 : i32, i32
  }
  func.func @transform_13(%arg0: i32, %arg1: i32) -> (i32, i32) {
    %c0_i32 = arith.constant 0 : i32
    %c0_i32_0 = arith.constant 0 : i32
    %c0_i32_1 = arith.constant 0 : i32
    return %c0_i32, %c0_i32_0 : i32, i32
  }
  func.func @transform_14(%arg0: i32, %arg1: i32) -> (i32, i32) {
    %c0_i32 = arith.constant 0 : i32
    %c0_i32_0 = arith.constant 0 : i32
    %c0_i32_1 = arith.constant 0 : i32
    return %c0_i32, %c0_i32_0 : i32, i32
  }
  func.func @transform_15(%arg0: i32, %arg1: i32) -> (i32, i32) {
    %c0_i32 = arith.constant 0 : i32
    %c0_i32_0 = arith.constant 0 : i32
    %c0_i32_1 = arith.constant 0 : i32
    return %c0_i32, %c0_i32_0 : i32, i32
  }
  func.func @transform_16(%arg0: i32, %arg1: i32) -> (i32, i32) {
    %c0_i32 = arith.constant 0 : i32
    %c0_i32_0 = arith.constant 0 : i32
    %c0_i32_1 = arith.constant 0 : i32
    return %c0_i32, %c0_i32_0 : i32, i32
  }
  func.func @transform_17(%arg0: i32, %arg1: i32) -> (i32, i32) {
    %c0_i32 = arith.constant 0 : i32
    %c0_i32_0 = arith.constant 0 : i32
    %c0_i32_1 = arith.constant 0 : i32
    return %c0_i32, %c0_i32_0 : i32, i32
  }
  func.func @transform_18(%arg0: i32, %arg1: i32) -> (i32, i32) {
    %c0_i32 = arith.constant 0 : i32
    %c0_i32_0 = arith.constant 0 : i32
    %c0_i32_1 = arith.constant 0 : i32
    return %c0_i32, %c0_i32_0 : i32, i32
  }
  func.func @transform_19(%arg0: i32, %arg1: i32) -> (i32, i32) {
    %c0_i32 = arith.constant 0 : i32
    %c0_i32_0 = arith.constant 0 : i32
    %c0_i32_1 = arith.constant 0 : i32
    return %c0_i32, %c0_i32_0 : i32, i32
  }
  func.func @transform_20(%arg0: i32, %arg1: i32) -> (i32, i32) {
    %c0_i32 = arith.constant 0 : i32
    %c0_i32_0 = arith.constant 0 : i32
    %c0_i32_1 = arith.constant 0 : i32
    return %c0_i32, %c0_i32_0 : i32, i32
  }
  func.func @transform_21(%arg0: i32, %arg1: i32) -> (i32, i32) {
    %c0_i32 = arith.constant 0 : i32
    %c0_i32_0 = arith.constant 0 : i32
    %c0_i32_1 = arith.constant 0 : i32
    return %c0_i32, %c0_i32_0 : i32, i32
  }
  func.func @transform_22(%arg0: i32, %arg1: i32) -> (i32, i32) {
    %c0_i32 = arith.constant 0 : i32
    %c0_i32_0 = arith.constant 0 : i32
    %c0_i32_1 = arith.constant 0 : i32
    return %c0_i32, %c0_i32_0 : i32, i32
  }
  func.func @transform_23(%arg0: i32, %arg1: i32) -> (i32, i32) {
    %c0_i32 = arith.constant 0 : i32
    %c0_i32_0 = arith.constant 0 : i32
    %c0_i32_1 = arith.constant 0 : i32
    return %c0_i32, %c0_i32_0 : i32, i32
  }
  func.func @transform_24(%arg0: i32, %arg1: i32) -> (i32, i32) {
    %c0_i32 = arith.constant 0 : i32
    %c0_i32_0 = arith.constant 0 : i32
    %c0_i32_1 = arith.constant 0 : i32
    return %c0_i32, %c0_i32_0 : i32, i32
  }
  func.func @transform_25(%arg0: i32, %arg1: i32) -> (i32, i32) {
    %c0_i32 = arith.constant 0 : i32
    %c0_i32_0 = arith.constant 0 : i32
    %c0_i32_1 = arith.constant 0 : i32
    return %c0_i32, %c0_i32_0 : i32, i32
  }
  func.func @transform_26(%arg0: i32, %arg1: i32) -> (i32, i32) {
    %c0_i32 = arith.constant 0 : i32
    %c0_i32_0 = arith.constant 0 : i32
    %c0_i32_1 = arith.constant 0 : i32
    return %c0_i32, %c0_i32_0 : i32, i32
  }
  func.func @transform_27(%arg0: i32, %arg1: i32) -> (i32, i32) {
    %c0_i32 = arith.constant 0 : i32
    %c0_i32_0 = arith.constant 0 : i32
    %c0_i32_1 = arith.constant 0 : i32
    return %c0_i32, %c0_i32_0 : i32, i32
  }
  func.func @transform_28(%arg0: i32, %arg1: i32) -> (i32, i32) {
    %c0_i32 = arith.constant 0 : i32
    %c0_i32_0 = arith.constant 0 : i32
    %c0_i32_1 = arith.constant 0 : i32
    return %c0_i32, %c0_i32_0 : i32, i32
  }
  func.func @transform_29(%arg0: i32, %arg1: i32) -> (i32, i32, i32) {
    %c0_i32 = arith.constant 0 : i32
    %c0_i32_0 = arith.constant 0 : i32
    return %arg0, %arg1, %c0_i32 : i32, i32, i32
  }
}

</mosaic_0001>

<llo_original>
// kernel: tpu_custom_call.1
$region0: #{tpu_custom_call.1}
  #allocation0 [shape = 'u32[]', space=smem, size = 0x4, offset = 0x4, fixed_abs, tag = 'smem constant byte address 0x4 - core index']
  #allocation1 [shape = 'u32[144,128]{1,0:T(1,128)}', space=vmem, size = 0x12000, scoped, tag = 'internal scratch']
  %s0 = inlined_call_operand.smem [shape: u32[30], index: -1, kind: input, shape index: {}]
  %s1 = sld [smem:[%s0]]
  %s2 = scalar_lea.smem %s0, 1
  %s3 = sld [smem:[%s2]]
  %s4 = scalar_lea.smem %s0, 2
  %s5 = sld [smem:[%s4]]
  %s6 = scalar_lea.smem %s0, 3
  %s7 = sld [smem:[%s6]]
  %s8 = scalar_lea.smem %s0, 4
  %s9 = sld [smem:[%s8]]
  %s10 = scalar_lea.smem %s0, 5
  %s11 = sld [smem:[%s10]]
  %s12 = scalar_lea.smem %s0, 6
  %s13 = sld [smem:[%s12]]
  %s14 = scalar_lea.smem %s0, 7
  %s15 = sld [smem:[%s14]]
  %s16 = scalar_lea.smem %s0, 8
  %s17 = sld [smem:[%s16]]
  %s18 = scalar_lea.smem %s0, 9
  %s19 = sld [smem:[%s18]]
  %s20 = scalar_lea.smem %s0, 10
  %s21 = sld [smem:[%s20]]
  %s22 = scalar_lea.smem %s0, 11
  %s23 = sld [smem:[%s22]]
  %s24 = scalar_lea.smem %s0, 12
  %s25 = sld [smem:[%s24]]
  %s26 = scalar_lea.smem %s0, 13
  %s27 = sld [smem:[%s26]]
  %s28 = scalar_lea.smem %s0, 14
  %s29 = sld [smem:[%s28]]
  %s30 = scalar_lea.smem %s0, 15
  %s31 = sld [smem:[%s30]]
  %s32 = scalar_lea.smem %s0, 16
  %s33 = sld [smem:[%s32]]
  %s34 = scalar_lea.smem %s0, 17
  %s35 = sld [smem:[%s34]]
  %s36 = scalar_lea.smem %s0, 18
  %s37 = sld [smem:[%s36]]
  %s38 = scalar_lea.smem %s0, 19
  %s39 = sld [smem:[%s38]]
  %s40 = scalar_lea.smem %s0, 20
  %s41 = sld [smem:[%s40]]
  %s42 = scalar_lea.smem %s0, 21
  %s43 = sld [smem:[%s42]]
  %s44 = scalar_lea.smem %s0, 22
  %s45 = sld [smem:[%s44]]
  %s46 = scalar_lea.smem %s0, 23
  %s47 = sld [smem:[%s46]]
  %s48 = scalar_lea.smem %s0, 24
  %s49 = sld [smem:[%s48]]
  %s50 = scalar_lea.smem %s0, 25
  %s51 = sld [smem:[%s50]]
  %s52 = scalar_lea.smem %s0, 26
  %s53 = sld [smem:[%s52]]
  %s54 = scalar_lea.smem %s0, 27
  %s55 = sld [smem:[%s54]]
  %s56 = scalar_lea.smem %s0, 28
  %s57 = sld [smem:[%s56]]
  %s58 = scalar_lea.smem %s0, 29
  %s59 = sld [smem:[%s58]]
  %s60 = sld [smem:[#allocation0]]
  $region197: #{tpu_custom_call.1} parent=0
    _
  %s62 = ssub.s32 1, %s60
  %s63 = scalar_select 0, %s62, %s60
  $region1: #{tpu_custom_call.1} parent=0
    #allocation2 [shape = 'u8[1024]{0}', space=vmem, size = 0x400, scoped, tag = 'input window, operand 3']
    #allocation3 [shape = 's32[2]{0}', space=sflag, size = 0x8, scoped, tag = 'scoped memory for tpu_custom_call.1']
    #allocation4 [shape = 's32[2]{0}', space=sflag, size = 0x8, scoped, tag = 'scoped memory for tpu_custom_call.1']
    #allocation5 [shape = 'u8[1024]{0}', space=vmem, size = 0x400, scoped, tag = 'input window, operand 4']
    #allocation6 [shape = 's32[2]{0}', space=sflag, size = 0x8, scoped, tag = 'scoped memory for tpu_custom_call.1']
    #allocation7 [shape = 'u8[512]{0}', space=vmem, size = 0x400, scoped, tag = 'input window, operand 6, single buffered']
    #allocation8 [shape = 'u8[512]{0}', space=vmem, size = 0x400, scoped, tag = 'input window, operand 8, single buffered']
    #allocation9 [shape = 's32[1]{0}', space=sflag, size = 0x4, scoped, tag = 'scoped memory for tpu_custom_call.1']
    #allocation10 [shape = 'u8[512]{0}', space=vmem, size = 0x400, scoped, tag = 'input window, operand 10, single buffered']
    #allocation11 [shape = 'u8[8192]{0}', space=vmem, size = 0x2000, scoped, tag = 'input window, operand 11, single buffered']
    #allocation12 [shape = 's32[1]{0}', space=sflag, size = 0x4, scoped, tag = 'scoped memory for tpu_custom_call.1']
    #allocation13 [shape = 'u8[512]{0}', space=vmem, size = 0x400, scoped, tag = 'input window, operand 12, single buffered']
    #allocation14 [shape = 'u8[512]{0}', space=vmem, size = 0x400, scoped, tag = 'input window, operand 14, single buffered']
    #allocation15 [shape = 's32[1]{0}', space=sflag, size = 0x4, scoped, tag = 'scoped memory for tpu_custom_call.1']
    #allocation16 [shape = 'u8[8192]{0}', space=vmem, size = 0x2000, scoped, tag = 'input window, operand 15, single buffered']
    #allocation17 [shape = 'u8[512]{0}', space=vmem, size = 0x400, scoped, tag = 'input window, operand 16, single buffered']
    #allocation18 [shape = 's32[1]{0}', space=sflag, size = 0x4, scoped, tag = 'scoped memory for tpu_custom_call.1']
    #allocation19 [shape = 'u8[8192]{0}', space=vmem, size = 0x2000, scoped, tag = 'input window, operand 19, single buffered']
    #allocation20 [shape = 'u8[512]{0}', space=vmem, size = 0x400, scoped, tag = 'input window, operand 22, single buffered']
    #allocation21 [shape = 's32[1]{0}', space=sflag, size = 0x4, scoped, tag = 'scoped memory for tpu_custom_call.1']
    #allocation22 [shape = 'u8[8192]{0}', space=vmem, size = 0x2000, scoped, tag = 'output window, operand 0']
    %64 = vsyncpa [#allocation3], 0
    %s65 = scalar_lea.sflag [#allocation3], 1
    %66 = vsyncpa %s65, 0
    %67 = vsyncpa [#allocation6], 0
    %s68 = scalar_lea.sflag [#allocation6], 1
    %69 = vsyncpa %s68, 0
    %70 = vsyncpa [#allocation9], 0
    %71 = vsyncpa [#allocation12], 0
    %72 = vsyncpa [#allocation15], 0
    %73 = vsyncpa [#allocation18], 0
    %74 = vsyncpa [#allocation21], 0
    %75 = vsyncpa [#allocation4], 0
    %s76 = scalar_lea.sflag [#allocation4], 1
    %77 = vsyncpa %s76, 0
    loop: start=0, step=1, limit=4
    $region2: #{tpu_custom_call.1} parent=1 // loop_pre_header
      _
    $region3: #{tpu_custom_call.1} parent=1 // loop_header
      %s79 = sphi 0, %s83
      %p80 = scmp.ge.s32.totalorder %s79, 4
      %s86 = sphi 0, %s98
      %s87 = sphi 0, %s94
      %s88 = sphi 0, %s86
      %s89 = sphi 0, %s87
      %s90 = sphi 0, %s88
      %s91 = sphi 0, %s89
      %s103 = sphi 0, %s105
      %s106 = sphi 0, %s103
      %s107 = sphi 0, %s106
      %s123 = sphi 0, %s107
      %s129 = sphi 0, %s131
      %s132 = sphi 0, %s129
      %s133 = sphi 0, %s132
      %s149 = sphi 0, %s133
      %s155 = sphi 0, %s157
      %s158 = sphi 0, %s155
      %s159 = sphi 0, %s158
      %s175 = sphi 0, %s159
      %s181 = sphi 0, %s183
      %s184 = sphi 0, %s181
      %s185 = sphi 0, %s184
      %s201 = sphi 0, %s185
      %s207 = sphi 0, %s209
      %s210 = sphi 0, %s207
      %s211 = sphi 0, %s210
      %s227 = sphi 0, %s211
      %s231 = sphi 0, %s231
      %s233 = sphi 0, %s231
      %s234 = sphi 0, %s233
      %s248 = sphi 0, %s234
      %s252 = sphi 0, %s252
      %s254 = sphi 0, %s252
      %s255 = sphi 0, %s254
      %s269 = sphi 0, %s255
      %s273 = sphi 0, %s273
      %s275 = sphi 0, %s273
      %s276 = sphi 0, %s275
      %s290 = sphi 0, %s276
      %s294 = sphi 0, %s294
      %s296 = sphi 0, %s294
      %s297 = sphi 0, %s296
      %s311 = sphi 0, %s297
      %s315 = sphi 0, %s315
      %s317 = sphi 0, %s315
      %s318 = sphi 0, %s317
      %s332 = sphi 0, %s318
      %s336 = sphi 0, %s336
      %s338 = sphi 0, %s336
      %s339 = sphi 0, %s338
      %s353 = sphi 0, %s339
      %s357 = sphi 0, %s357
      %s359 = sphi 0, %s357
      %s360 = sphi 0, %s359
      %s374 = sphi 0, %s360
      %s378 = sphi 0, %s378
      %s380 = sphi 0, %s378
      %s381 = sphi 0, %s380
      %s395 = sphi 0, %s381
      %s399 = sphi 0, %s399
      %s401 = sphi 0, %s399
      %s402 = sphi 0, %s401
      %s416 = sphi 0, %s402
      %s420 = sphi 0, %s420
      %s422 = sphi 0, %s420
      %s423 = sphi 0, %s422
      %s437 = sphi 0, %s423
      %s441 = sphi 0, %s441
      %s443 = sphi 0, %s441
      %s444 = sphi 0, %s443
      %s458 = sphi 0, %s444
      %s462 = sphi 0, %s462
      %s464 = sphi 0, %s462
      %s465 = sphi 0, %s464
      %s479 = sphi 0, %s465
      %s483 = sphi 0, %s483
      %s485 = sphi 0, %s483
      %s486 = sphi 0, %s485
      %s500 = sphi 0, %s486
      %s504 = sphi 0, %s504
      %s506 = sphi 0, %s504
      %s507 = sphi 0, %s506
      %s521 = sphi 0, %s507
      %s525 = sphi 0, %s525
      %s527 = sphi 0, %s525
      %s528 = sphi 0, %s527
      %s542 = sphi 0, %s528
      %s546 = sphi 0, %s546
      %s548 = sphi 0, %s546
      %s549 = sphi 0, %s548
      %s563 = sphi 0, %s549
      %s567 = sphi 0, %s567
      %s569 = sphi 0, %s567
      %s570 = sphi 0, %s569
      %s584 = sphi 0, %s570
      %s588 = sphi 0, %s588
      %s590 = sphi 0, %s588
      %s591 = sphi 0, %s590
      %s605 = sphi 0, %s591
      %s609 = sphi 0, %s609
      %s611 = sphi 0, %s609
      %s612 = sphi 0, %s611
      %s626 = sphi 0, %s612
      %s630 = sphi 0, %s630
      %s632 = sphi 0, %s630
      %s633 = sphi 0, %s632
      %s647 = sphi 0, %s633
      %s651 = sphi 0, %s651
      %s653 = sphi 0, %s651
      %s654 = sphi 0, %s653
      %s668 = sphi 0, %s654
      %s672 = sphi 0, %s672
      %s674 = sphi 0, %s672
      %s675 = sphi 0, %s674
      %s689 = sphi 0, %s675
      %s693 = sphi 0, %s693
      %s695 = sphi 0, %s693
      %s696 = sphi 0, %s695
      %s710 = sphi 0, %s696
      %s714 = sphi 0, %s714
      %s716 = sphi 0, %s714
      %s717 = sphi 0, %s716
      %s731 = sphi 0, %s717
      %s739 = sphi 0, %s741
      %s742 = sphi 0, %s739
      %s743 = sphi 0, %s742
      %s759 = sphi 0, %s743
    $region4: #{tpu_custom_call.1} parent=1 // loop_header_branch
      %82 = sbr.rel (%p80) target = $region8
    $region5: #{tpu_custom_call.1} parent=1 // loop_body
      %s84 = ssub.s32 %s79, 1
      %s85 = ssub.s32 %s79, 2
      %s92 = sadd.s32 1, %s87
      %p93 = scmp.ge.s32.totalorder %s92, 1
      %s94 = scalar_select %p93, 0, %s92
      %s95 = sadd.s32 1, %s86
      %s96 = scalar_select %p93, %s95, %s86
      %p97 = scmp.ge.s32.totalorder %s96, 2
      %s98 = scalar_select %p97, 0, %s96
      %s99 = ssub.s32 %s86, %s98
      %s100 = ssub.s32 %s87, %s94
      %s101 = sor.u32 %s99, %s100
      %p102 = scmp.eq.s32.totalorder %s101, 0
      %s104 = sadd.s32 %s103, 1
      %s105 = scalar_select %p102, %s103, %s104
      %p108 = pneg %p102
      %p109 = scmp.eq.s32.totalorder %s79, 1
      %p110 = por %p108, %p109
      %p111 = scmp.ne.s32.totalorder %s103, %s106
      %p112 = scmp.eq.s32.totalorder %s79, 0
      %p113 = por %p111, %p112
      %p114 = scmp.ne.s32.totalorder %s103, %s106
      %p115 = scmp.eq.s32.totalorder %s84, 1
      %p116 = por %p114, %p115
      %p117 = scmp.ne.s32.totalorder %s106, %s107
      %p118 = scmp.eq.s32.totalorder %s84, 0
      %p119 = por %p117, %p118
      %p120 = scmp.ne.s32.totalorder %s106, %s107
      %p121 = scmp.eq.s32.totalorder %s85, 1
      %p122 = por %p120, %p121
      %p124 = scmp.ne.s32.totalorder %s107, %s123
      %p125 = scmp.eq.s32.totalorder %s85, 0
      %p126 = por %p124, %p125
      %s127 = ssub.s32 %s86, %s98
      %p128 = scmp.eq.s32.totalorder %s127, 0
      %s130 = sadd.s32 %s129, 1
      %s131 = scalar_select %p128, %s129, %s130
      %p134 = pneg %p128
      %p135 = scmp.eq.s32.totalorder %s79, 1
      %p136 = por %p134, %p135
      %p137 = scmp.ne.s32.totalorder %s129, %s132
      %p138 = scmp.eq.s32.totalorder %s79, 0
      %p139 = por %p137, %p138
      %p140 = scmp.ne.s32.totalorder %s129, %s132
      %p141 = scmp.eq.s32.totalorder %s84, 1
      %p142 = por %p140, %p141
      %p143 = scmp.ne.s32.totalorder %s132, %s133
      %p144 = scmp.eq.s32.totalorder %s84, 0
      %p145 = por %p143, %p144
      %p146 = scmp.ne.s32.totalorder %s132, %s133
      %p147 = scmp.eq.s32.totalorder %s85, 1
      %p148 = por %p146, %p147
      %p150 = scmp.ne.s32.totalorder %s133, %s149
      %p151 = scmp.eq.s32.totalorder %s85, 0
      %p152 = por %p150, %p151
      %s153 = ssub.s32 %s86, %s98
      %p154 = scmp.eq.s32.totalorder %s153, 0
      %s156 = sadd.s32 %s155, 1
      %s157 = scalar_select %p154, %s155, %s156
      %p160 = pneg %p154
      %p161 = scmp.eq.s32.totalorder %s79, 1
      %p162 = por %p160, %p161
      %p163 = scmp.ne.s32.totalorder %s155, %s158
      %p164 = scmp.eq.s32.totalorder %s79, 0
      %p165 = por %p163, %p164
      %p166 = scmp.ne.s32.totalorder %s155, %s158
      %p167 = scmp.eq.s32.totalorder %s84, 1
      %p168 = por %p166, %p167
      %p169 = scmp.ne.s32.totalorder %s158, %s159
      %p170 = scmp.eq.s32.totalorder %s84, 0
      %p171 = por %p169, %p170
      %p172 = scmp.ne.s32.totalorder %s158, %s159
      %p173 = scmp.eq.s32.totalorder %s85, 1
      %p174 = por %p172, %p173
      %p176 = scmp.ne.s32.totalorder %s159, %s175
      %p177 = scmp.eq.s32.totalorder %s85, 0
      %p178 = por %p176, %p177
      %s179 = ssub.s32 %s86, %s98
      %p180 = scmp.eq.s32.totalorder %s179, 0
      %s182 = sadd.s32 %s181, 1
      %s183 = scalar_select %p180, %s181, %s182
      %p186 = pneg %p180
      %p187 = scmp.eq.s32.totalorder %s79, 1
      %p188 = por %p186, %p187
      %p189 = scmp.ne.s32.totalorder %s181, %s184
      %p190 = scmp.eq.s32.totalorder %s79, 0
      %p191 = por %p189, %p190
      %p192 = scmp.ne.s32.totalorder %s181, %s184
      %p193 = scmp.eq.s32.totalorder %s84, 1
      %p194 = por %p192, %p193
      %p195 = scmp.ne.s32.totalorder %s184, %s185
      %p196 = scmp.eq.s32.totalorder %s84, 0
      %p197 = por %p195, %p196
      %p198 = scmp.ne.s32.totalorder %s184, %s185
      %p199 = scmp.eq.s32.totalorder %s85, 1
      %p200 = por %p198, %p199
      %p202 = scmp.ne.s32.totalorder %s185, %s201
      %p203 = scmp.eq.s32.totalorder %s85, 0
      %p204 = por %p202, %p203
      %s205 = ssub.s32 %s86, %s98
      %p206 = scmp.eq.s32.totalorder %s205, 0
      %s208 = sadd.s32 %s207, 1
      %s209 = scalar_select %p206, %s207, %s208
      %p212 = pneg %p206
      %p213 = scmp.eq.s32.totalorder %s79, 1
      %p214 = por %p212, %p213
      %p215 = scmp.ne.s32.totalorder %s207, %s210
      %p216 = scmp.eq.s32.totalorder %s79, 0
      %p217 = por %p215, %p216
      %p218 = scmp.ne.s32.totalorder %s207, %s210
      %p219 = scmp.eq.s32.totalorder %s84, 1
      %p220 = por %p218, %p219
      %p221 = scmp.ne.s32.totalorder %s210, %s211
      %p222 = scmp.eq.s32.totalorder %s84, 0
      %p223 = por %p221, %p222
      %p224 = scmp.ne.s32.totalorder %s210, %s211
      %p225 = scmp.eq.s32.totalorder %s85, 1
      %p226 = por %p224, %p225
      %p228 = scmp.ne.s32.totalorder %s211, %s227
      %p229 = scmp.eq.s32.totalorder %s85, 0
      %p230 = por %p228, %p229
      %s232 = sadd.s32 %s231, 1
      %p235 = scmp.eq.s32.totalorder %s79, 1
      %p236 = scmp.ne.s32.totalorder %s231, %s233
      %p237 = scmp.eq.s32.totalorder %s79, 0
      %p238 = por %p236, %p237
      %p239 = scmp.ne.s32.totalorder %s231, %s233
      %p240 = scmp.eq.s32.totalorder %s84, 1
      %p241 = por %p239, %p240
      %p242 = scmp.ne.s32.totalorder %s233, %s234
      %p243 = scmp.eq.s32.totalorder %s84, 0
      %p244 = por %p242, %p243
      %p245 = scmp.ne.s32.totalorder %s233, %s234
      %p246 = scmp.eq.s32.totalorder %s85, 1
      %p247 = por %p245, %p246
      %p249 = scmp.ne.s32.totalorder %s234, %s248
      %p250 = scmp.eq.s32.totalorder %s85, 0
      %p251 = por %p249, %p250
      %s253 = sadd.s32 %s252, 1
      %p256 = scmp.eq.s32.totalorder %s79, 1
      %p257 = scmp.ne.s32.totalorder %s252, %s254
      %p258 = scmp.eq.s32.totalorder %s79, 0
      %p259 = por %p257, %p258
      %p260 = scmp.ne.s32.totalorder %s252, %s254
      %p261 = scmp.eq.s32.totalorder %s84, 1
      %p262 = por %p260, %p261
      %p263 = scmp.ne.s32.totalorder %s254, %s255
      %p264 = scmp.eq.s32.totalorder %s84, 0
      %p265 = por %p263, %p264
      %p266 = scmp.ne.s32.totalorder %s254, %s255
      %p267 = scmp.eq.s32.totalorder %s85, 1
      %p268 = por %p266, %p267
      %p270 = scmp.ne.s32.totalorder %s255, %s269
      %p271 = scmp.eq.s32.totalorder %s85, 0
      %p272 = por %p270, %p271
      %s274 = sadd.s32 %s273, 1
      %p277 = scmp.eq.s32.totalorder %s79, 1
      %p278 = scmp.ne.s32.totalorder %s273, %s275
      %p279 = scmp.eq.s32.totalorder %s79, 0
      %p280 = por %p278, %p279
      %p281 = scmp.ne.s32.totalorder %s273, %s275
      %p282 = scmp.eq.s32.totalorder %s84, 1
      %p283 = por %p281, %p282
      %p284 = scmp.ne.s32.totalorder %s275, %s276
      %p285 = scmp.eq.s32.totalorder %s84, 0
      %p286 = por %p284, %p285
      %p287 = scmp.ne.s32.totalorder %s275, %s276
      %p288 = scmp.eq.s32.totalorder %s85, 1
      %p289 = por %p287, %p288
      %p291 = scmp.ne.s32.totalorder %s276, %s290
      %p292 = scmp.eq.s32.totalorder %s85, 0
      %p293 = por %p291, %p292
      %s295 = sadd.s32 %s294, 1
      %p298 = scmp.eq.s32.totalorder %s79, 1
      %p299 = scmp.ne.s32.totalorder %s294, %s296
      %p300 = scmp.eq.s32.totalorder %s79, 0
      %p301 = por %p299, %p300
      %p302 = scmp.ne.s32.totalorder %s294, %s296
      %p303 = scmp.eq.s32.totalorder %s84, 1
      %p304 = por %p302, %p303
      %p305 = scmp.ne.s32.totalorder %s296, %s297
      %p306 = scmp.eq.s32.totalorder %s84, 0
      %p307 = por %p305, %p306
      %p308 = scmp.ne.s32.totalorder %s296, %s297
      %p309 = scmp.eq.s32.totalorder %s85, 1
      %p310 = por %p308, %p309
      %p312 = scmp.ne.s32.totalorder %s297, %s311
      %p313 = scmp.eq.s32.totalorder %s85, 0
      %p314 = por %p312, %p313
      %s316 = sadd.s32 %s315, 1
      %p319 = scmp.eq.s32.totalorder %s79, 1
      %p320 = scmp.ne.s32.totalorder %s315, %s317
      %p321 = scmp.eq.s32.totalorder %s79, 0
      %p322 = por %p320, %p321
      %p323 = scmp.ne.s32.totalorder %s315, %s317
      %p324 = scmp.eq.s32.totalorder %s84, 1
      %p325 = por %p323, %p324
      %p326 = scmp.ne.s32.totalorder %s317, %s318
      %p327 = scmp.eq.s32.totalorder %s84, 0
      %p328 = por %p326, %p327
      %p329 = scmp.ne.s32.totalorder %s317, %s318
      %p330 = scmp.eq.s32.totalorder %s85, 1
      %p331 = por %p329, %p330
      %p333 = scmp.ne.s32.totalorder %s318, %s332
      %p334 = scmp.eq.s32.totalorder %s85, 0
      %p335 = por %p333, %p334
      %s337 = sadd.s32 %s336, 1
      %p340 = scmp.eq.s32.totalorder %s79, 1
      %p341 = scmp.ne.s32.totalorder %s336, %s338
      %p342 = scmp.eq.s32.totalorder %s79, 0
      %p343 = por %p341, %p342
      %p344 = scmp.ne.s32.totalorder %s336, %s338
      %p345 = scmp.eq.s32.totalorder %s84, 1
      %p346 = por %p344, %p345
      %p347 = scmp.ne.s32.totalorder %s338, %s339
      %p348 = scmp.eq.s32.totalorder %s84, 0
      %p349 = por %p347, %p348
      %p350 = scmp.ne.s32.totalorder %s338, %s339
      %p351 = scmp.eq.s32.totalorder %s85, 1
      %p352 = por %p350, %p351
      %p354 = scmp.ne.s32.totalorder %s339, %s353
      %p355 = scmp.eq.s32.totalorder %s85, 0
      %p356 = por %p354, %p355
      %s358 = sadd.s32 %s357, 1
      %p361 = scmp.eq.s32.totalorder %s79, 1
      %p362 = scmp.ne.s32.totalorder %s357, %s359
      %p363 = scmp.eq.s32.totalorder %s79, 0
      %p364 = por %p362, %p363
      %p365 = scmp.ne.s32.totalorder %s357, %s359
      %p366 = scmp.eq.s32.totalorder %s84, 1
      %p367 = por %p365, %p366
      %p368 = scmp.ne.s32.totalorder %s359, %s360
      %p369 = scmp.eq.s32.totalorder %s84, 0
      %p370 = por %p368, %p369
      %p371 = scmp.ne.s32.totalorder %s359, %s360
      %p372 = scmp.eq.s32.totalorder %s85, 1
      %p373 = por %p371, %p372
      %p375 = scmp.ne.s32.totalorder %s360, %s374
      %p376 = scmp.eq.s32.totalorder %s85, 0
      %p377 = por %p375, %p376
      %s379 = sadd.s32 %s378, 1
      %p382 = scmp.eq.s32.totalorder %s79, 1
      %p383 = scmp.ne.s32.totalorder %s378, %s380
      %p384 = scmp.eq.s32.totalorder %s79, 0
      %p385 = por %p383, %p384
      %p386 = scmp.ne.s32.totalorder %s378, %s380
      %p387 = scmp.eq.s32.totalorder %s84, 1
      %p388 = por %p386, %p387
      %p389 = scmp.ne.s32.totalorder %s380, %s381
      %p390 = scmp.eq.s32.totalorder %s84, 0
      %p391 = por %p389, %p390
      %p392 = scmp.ne.s32.totalorder %s380, %s381
      %p393 = scmp.eq.s32.totalorder %s85, 1
      %p394 = por %p392, %p393
      %p396 = scmp.ne.s32.totalorder %s381, %s395
      %p397 = scmp.eq.s32.totalorder %s85, 0
      %p398 = por %p396, %p397
      %s400 = sadd.s32 %s399, 1
      %p403 = scmp.eq.s32.totalorder %s79, 1
      %p404 = scmp.ne.s32.totalorder %s399, %s401
      %p405 = scmp.eq.s32.totalorder %s79, 0
      %p406 = por %p404, %p405
      %p407 = scmp.ne.s32.totalorder %s399, %s401
      %p408 = scmp.eq.s32.totalorder %s84, 1
      %p409 = por %p407, %p408
      %p410 = scmp.ne.s32.totalorder %s401, %s402
      %p411 = scmp.eq.s32.totalorder %s84, 0
      %p412 = por %p410, %p411
      %p413 = scmp.ne.s32.totalorder %s401, %s402
      %p414 = scmp.eq.s32.totalorder %s85, 1
      %p415 = por %p413, %p414
      %p417 = scmp.ne.s32.totalorder %s402, %s416
      %p418 = scmp.eq.s32.totalorder %s85, 0
      %p419 = por %p417, %p418
      %s421 = sadd.s32 %s420, 1
      %p424 = scmp.eq.s32.totalorder %s79, 1
      %p425 = scmp.ne.s32.totalorder %s420, %s422
      %p426 = scmp.eq.s32.totalorder %s79, 0
      %p427 = por %p425, %p426
      %p428 = scmp.ne.s32.totalorder %s420, %s422
      %p429 = scmp.eq.s32.totalorder %s84, 1
      %p430 = por %p428, %p429
      %p431 = scmp.ne.s32.totalorder %s422, %s423
      %p432 = scmp.eq.s32.totalorder %s84, 0
      %p433 = por %p431, %p432
      %p434 = scmp.ne.s32.totalorder %s422, %s423
      %p435 = scmp.eq.s32.totalorder %s85, 1
      %p436 = por %p434, %p435
      %p438 = scmp.ne.s32.totalorder %s423, %s437
      %p439 = scmp.eq.s32.totalorder %s85, 0
      %p440 = por %p438, %p439
      %s442 = sadd.s32 %s441, 1
      %p445 = scmp.eq.s32.totalorder %s79, 1
      %p446 = scmp.ne.s32.totalorder %s441, %s443
      %p447 = scmp.eq.s32.totalorder %s79, 0
      %p448 = por %p446, %p447
      %p449 = scmp.ne.s32.totalorder %s441, %s443
      %p450 = scmp.eq.s32.totalorder %s84, 1
      %p451 = por %p449, %p450
      %p452 = scmp.ne.s32.totalorder %s443, %s444
      %p453 = scmp.eq.s32.totalorder %s84, 0
      %p454 = por %p452, %p453
      %p455 = scmp.ne.s32.totalorder %s443, %s444
      %p456 = scmp.eq.s32.totalorder %s85, 1
      %p457 = por %p455, %p456
      %p459 = scmp.ne.s32.totalorder %s444, %s458
      %p460 = scmp.eq.s32.totalorder %s85, 0
      %p461 = por %p459, %p460
      %s463 = sadd.s32 %s462, 1
      %p466 = scmp.eq.s32.totalorder %s79, 1
      %p467 = scmp.ne.s32.totalorder %s462, %s464
      %p468 = scmp.eq.s32.totalorder %s79, 0
      %p469 = por %p467, %p468
      %p470 = scmp.ne.s32.totalorder %s462, %s464
      %p471 = scmp.eq.s32.totalorder %s84, 1
      %p472 = por %p470, %p471
      %p473 = scmp.ne.s32.totalorder %s464, %s465
      %p474 = scmp.eq.s32.totalorder %s84, 0
      %p475 = por %p473, %p474
      %p476 = scmp.ne.s32.totalorder %s464, %s465
      %p477 = scmp.eq.s32.totalorder %s85, 1
      %p478 = por %p476, %p477
      %p480 = scmp.ne.s32.totalorder %s465, %s479
      %p481 = scmp.eq.s32.totalorder %s85, 0
      %p482 = por %p480, %p481
      %s484 = sadd.s32 %s483, 1
      %p487 = scmp.eq.s32.totalorder %s79, 1
      %p488 = scmp.ne.s32.totalorder %s483, %s485
      %p489 = scmp.eq.s32.totalorder %s79, 0
      %p490 = por %p488, %p489
      %p491 = scmp.ne.s32.totalorder %s483, %s485
      %p492 = scmp.eq.s32.totalorder %s84, 1
      %p493 = por %p491, %p492
      %p494 = scmp.ne.s32.totalorder %s485, %s486
      %p495 = scmp.eq.s32.totalorder %s84, 0
      %p496 = por %p494, %p495
      %p497 = scmp.ne.s32.totalorder %s485, %s486
      %p498 = scmp.eq.s32.totalorder %s85, 1
      %p499 = por %p497, %p498
      %p501 = scmp.ne.s32.totalorder %s486, %s500
      %p502 = scmp.eq.s32.totalorder %s85, 0
      %p503 = por %p501, %p502
      %s505 = sadd.s32 %s504, 1
      %p508 = scmp.eq.s32.totalorder %s79, 1
      %p509 = scmp.ne.s32.totalorder %s504, %s506
      %p510 = scmp.eq.s32.totalorder %s79, 0
      %p511 = por %p509, %p510
      %p512 = scmp.ne.s32.totalorder %s504, %s506
      %p513 = scmp.eq.s32.totalorder %s84, 1
      %p514 = por %p512, %p513
      %p515 = scmp.ne.s32.totalorder %s506, %s507
      %p516 = scmp.eq.s32.totalorder %s84, 0
      %p517 = por %p515, %p516
      %p518 = scmp.ne.s32.totalorder %s506, %s507
      %p519 = scmp.eq.s32.totalorder %s85, 1
      %p520 = por %p518, %p519
      %p522 = scmp.ne.s32.totalorder %s507, %s521
      %p523 = scmp.eq.s32.totalorder %s85, 0
      %p524 = por %p522, %p523
      %s526 = sadd.s32 %s525, 1
      %p529 = scmp.eq.s32.totalorder %s79, 1
      %p530 = scmp.ne.s32.totalorder %s525, %s527
      %p531 = scmp.eq.s32.totalorder %s79, 0
      %p532 = por %p530, %p531
      %p533 = scmp.ne.s32.totalorder %s525, %s527
      %p534 = scmp.eq.s32.totalorder %s84, 1
      %p535 = por %p533, %p534
      %p536 = scmp.ne.s32.totalorder %s527, %s528
      %p537 = scmp.eq.s32.totalorder %s84, 0
      %p538 = por %p536, %p537
      %p539 = scmp.ne.s32.totalorder %s527, %s528
      %p540 = scmp.eq.s32.totalorder %s85, 1
      %p541 = por %p539, %p540
      %p543 = scmp.ne.s32.totalorder %s528, %s542
      %p544 = scmp.eq.s32.totalorder %s85, 0
      %p545 = por %p543, %p544
      %s547 = sadd.s32 %s546, 1
      %p550 = scmp.eq.s32.totalorder %s79, 1
      %p551 = scmp.ne.s32.totalorder %s546, %s548
      %p552 = scmp.eq.s32.totalorder %s79, 0
      %p553 = por %p551, %p552
      %p554 = scmp.ne.s32.totalorder %s546, %s548
      %p555 = scmp.eq.s32.totalorder %s84, 1
      %p556 = por %p554, %p555
      %p557 = scmp.ne.s32.totalorder %s548, %s549
      %p558 = scmp.eq.s32.totalorder %s84, 0
      %p559 = por %p557, %p558
      %p560 = scmp.ne.s32.totalorder %s548, %s549
      %p561 = scmp.eq.s32.totalorder %s85, 1
      %p562 = por %p560, %p561
      %p564 = scmp.ne.s32.totalorder %s549, %s563
      %p565 = scmp.eq.s32.totalorder %s85, 0
      %p566 = por %p564, %p565
      %s568 = sadd.s32 %s567, 1
      %p571 = scmp.eq.s32.totalorder %s79, 1
      %p572 = scmp.ne.s32.totalorder %s567, %s569
      %p573 = scmp.eq.s32.totalorder %s79, 0
      %p574 = por %p572, %p573
      %p575 = scmp.ne.s32.totalorder %s567, %s569
      %p576 = scmp.eq.s32.totalorder %s84, 1
      %p577 = por %p575, %p576
      %p578 = scmp.ne.s32.totalorder %s569, %s570
      %p579 = scmp.eq.s32.totalorder %s84, 0
      %p580 = por %p578, %p579
      %p581 = scmp.ne.s32.totalorder %s569, %s570
      %p582 = scmp.eq.s32.totalorder %s85, 1
      %p583 = por %p581, %p582
      %p585 = scmp.ne.s32.totalorder %s570, %s584
      %p586 = scmp.eq.s32.totalorder %s85, 0
      %p587 = por %p585, %p586
      %s589 = sadd.s32 %s588, 1
      %p592 = scmp.eq.s32.totalorder %s79, 1
      %p593 = scmp.ne.s32.totalorder %s588, %s590
      %p594 = scmp.eq.s32.totalorder %s79, 0
      %p595 = por %p593, %p594
      %p596 = scmp.ne.s32.totalorder %s588, %s590
      %p597 = scmp.eq.s32.totalorder %s84, 1
      %p598 = por %p596, %p597
      %p599 = scmp.ne.s32.totalorder %s590, %s591
      %p600 = scmp.eq.s32.totalorder %s84, 0
      %p601 = por %p599, %p600
      %p602 = scmp.ne.s32.totalorder %s590, %s591
      %p603 = scmp.eq.s32.totalorder %s85, 1
      %p604 = por %p602, %p603
      %p606 = scmp.ne.s32.totalorder %s591, %s605
      %p607 = scmp.eq.s32.totalorder %s85, 0
      %p608 = por %p606, %p607
      %s610 = sadd.s32 %s609, 1
      %p613 = scmp.eq.s32.totalorder %s79, 1
      %p614 = scmp.ne.s32.totalorder %s609, %s611
      %p615 = scmp.eq.s32.totalorder %s79, 0
      %p616 = por %p614, %p615
      %p617 = scmp.ne.s32.totalorder %s609, %s611
      %p618 = scmp.eq.s32.totalorder %s84, 1
      %p619 = por %p617, %p618
      %p620 = scmp.ne.s32.totalorder %s611, %s612
      %p621 = scmp.eq.s32.totalorder %s84, 0
      %p622 = por %p620, %p621
      %p623 = scmp.ne.s32.totalorder %s611, %s612
      %p624 = scmp.eq.s32.totalorder %s85, 1
      %p625 = por %p623, %p624
      %p627 = scmp.ne.s32.totalorder %s612, %s626
      %p628 = scmp.eq.s32.totalorder %s85, 0
      %p629 = por %p627, %p628
      %s631 = sadd.s32 %s630, 1
      %p634 = scmp.eq.s32.totalorder %s79, 1
      %p635 = scmp.ne.s32.totalorder %s630, %s632
      %p636 = scmp.eq.s32.totalorder %s79, 0
      %p637 = por %p635, %p636
      %p638 = scmp.ne.s32.totalorder %s630, %s632
      %p639 = scmp.eq.s32.totalorder %s84, 1
      %p640 = por %p638, %p639
      %p641 = scmp.ne.s32.totalorder %s632, %s633
      %p642 = scmp.eq.s32.totalorder %s84, 0
      %p643 = por %p641, %p642
      %p644 = scmp.ne.s32.totalorder %s632, %s633
      %p645 = scmp.eq.s32.totalorder %s85, 1
      %p646 = por %p644, %p645
      %p648 = scmp.ne.s32.totalorder %s633, %s647
      %p649 = scmp.eq.s32.totalorder %s85, 0
      %p650 = por %p648, %p649
      %s652 = sadd.s32 %s651, 1
      %p655 = scmp.eq.s32.totalorder %s79, 1
      %p656 = scmp.ne.s32.totalorder %s651, %s653
      %p657 = scmp.eq.s32.totalorder %s79, 0
      %p658 = por %p656, %p657
      %p659 = scmp.ne.s32.totalorder %s651, %s653
      %p660 = scmp.eq.s32.totalorder %s84, 1
      %p661 = por %p659, %p660
      %p662 = scmp.ne.s32.totalorder %s653, %s654
      %p663 = scmp.eq.s32.totalorder %s84, 0
      %p664 = por %p662, %p663
      %p665 = scmp.ne.s32.totalorder %s653, %s654
      %p666 = scmp.eq.s32.totalorder %s85, 1
      %p667 = por %p665, %p666
      %p669 = scmp.ne.s32.totalorder %s654, %s668
      %p670 = scmp.eq.s32.totalorder %s85, 0
      %p671 = por %p669, %p670
      %s673 = sadd.s32 %s672, 1
      %p676 = scmp.eq.s32.totalorder %s79, 1
      %p677 = scmp.ne.s32.totalorder %s672, %s674
      %p678 = scmp.eq.s32.totalorder %s79, 0
      %p679 = por %p677, %p678
      %p680 = scmp.ne.s32.totalorder %s672, %s674
      %p681 = scmp.eq.s32.totalorder %s84, 1
      %p682 = por %p680, %p681
      %p683 = scmp.ne.s32.totalorder %s674, %s675
      %p684 = scmp.eq.s32.totalorder %s84, 0
      %p685 = por %p683, %p684
      %p686 = scmp.ne.s32.totalorder %s674, %s675
      %p687 = scmp.eq.s32.totalorder %s85, 1
      %p688 = por %p686, %p687
      %p690 = scmp.ne.s32.totalorder %s675, %s689
      %p691 = scmp.eq.s32.totalorder %s85, 0
      %p692 = por %p690, %p691
      %s694 = sadd.s32 %s693, 1
      %p697 = scmp.eq.s32.totalorder %s79, 1
      %p698 = scmp.ne.s32.totalorder %s693, %s695
      %p699 = scmp.eq.s32.totalorder %s79, 0
      %p700 = por %p698, %p699
      %p701 = scmp.ne.s32.totalorder %s693, %s695
      %p702 = scmp.eq.s32.totalorder %s84, 1
      %p703 = por %p701, %p702
      %p704 = scmp.ne.s32.totalorder %s695, %s696
      %p705 = scmp.eq.s32.totalorder %s84, 0
      %p706 = por %p704, %p705
      %p707 = scmp.ne.s32.totalorder %s695, %s696
      %p708 = scmp.eq.s32.totalorder %s85, 1
      %p709 = por %p707, %p708
      %p711 = scmp.ne.s32.totalorder %s696, %s710
      %p712 = scmp.eq.s32.totalorder %s85, 0
      %p713 = por %p711, %p712
      %s715 = sadd.s32 %s714, 1
      %p718 = scmp.eq.s32.totalorder %s79, 1
      %p719 = scmp.ne.s32.totalorder %s714, %s716
      %p720 = scmp.eq.s32.totalorder %s79, 0
      %p721 = por %p719, %p720
      %p722 = scmp.ne.s32.totalorder %s714, %s716
      %p723 = scmp.eq.s32.totalorder %s84, 1
      %p724 = por %p722, %p723
      %p725 = scmp.ne.s32.totalorder %s716, %s717
      %p726 = scmp.eq.s32.totalorder %s84, 0
      %p727 = por %p725, %p726
      %p728 = scmp.ne.s32.totalorder %s716, %s717
      %p729 = scmp.eq.s32.totalorder %s85, 1
      %p730 = por %p728, %p729
      %p732 = scmp.ne.s32.totalorder %s717, %s731
      %p733 = scmp.eq.s32.totalorder %s85, 0
      %p734 = por %p732, %p733
      %s735 = ssub.s32 %s86, %s98
      %s736 = ssub.s32 %s87, %s94
      %s737 = sor.u32 %s735, %s736
      %p738 = scmp.eq.s32.totalorder %s737, 0
      %s740 = sadd.s32 %s739, 1
      %s741 = scalar_select %p738, %s739, %s740
      %p744 = pneg %p738
      %p745 = scmp.eq.s32.totalorder %s79, 1
      %p746 = por %p744, %p745
      %p747 = scmp.ne.s32.totalorder %s739, %s742
      %p748 = scmp.eq.s32.totalorder %s79, 0
      %p749 = por %p747, %p748
      %p750 = scmp.ne.s32.totalorder %s739, %s742
      %p751 = scmp.eq.s32.totalorder %s84, 1
      %p752 = por %p750, %p751
      %p753 = scmp.ne.s32.totalorder %s742, %s743
      %p754 = scmp.eq.s32.totalorder %s84, 0
      %p755 = por %p753, %p754
      %p756 = scmp.ne.s32.totalorder %s742, %s743
      %p757 = scmp.eq.s32.totalorder %s85, 1
      %p758 = por %p756, %p757
      %p760 = scmp.ne.s32.totalorder %s743, %s759
      %p761 = scmp.eq.s32.totalorder %s85, 0
      %p762 = por %p760, %p761
      %p763 = scmp.le.s32.totalorder 1, %s79
      %p764 = scmp.lt.s32.totalorder %s79, 3
      %p765 = pnand %p763, %p764
      %p766 = pneg %p765
      // Predicated region
      $region9: #{tpu_custom_call.1} parent=5 // pred_check
        _
      $region10: #{tpu_custom_call.1} parent=5 // pred_check_branch
        %768 = sbr.rel (%p765) target = $region12
      $region11: #{tpu_custom_call.1} parent=5 // pred_region
        %s769 = ssub.s32 %s79, 1
        // Predicated region
        $region13: #{tpu_custom_call.1} parent=11 // pred_check
          %p770 = pneg %p244
        $region14: #{tpu_custom_call.1} parent=11 // pred_check_branch
          %772 = sbr.rel (%p770) target = $region16
        $region15: #{tpu_custom_call.1} parent=11 // pred_region
          _
        $region16: #{tpu_custom_call.1} parent=11 // pred_fallthru
          _
        // Predicated region
        $region17: #{tpu_custom_call.1} parent=11 // pred_check
          %p773 = pneg %p265
        $region18: #{tpu_custom_call.1} parent=11 // pred_check_branch
          %775 = sbr.rel (%p773) target = $region20
        $region19: #{tpu_custom_call.1} parent=11 // pred_region
          %s777 = ssub.s32 16, 16
          %778 = vsyncadd [#allocation6], %s777
          %s780 = sshll.u32 [#allocation7], 4
          %s781 = int_to_ptr.vmem [resolvable:$true] %s780
          %783 = dma.hbm_to_vmem [thread:$0]  %s13, 16, %s781, [#allocation6]
        $region20: #{tpu_custom_call.1} parent=11 // pred_fallthru
          _
        // Predicated region
        $region21: #{tpu_custom_call.1} parent=11 // pred_check
          %p784 = pneg %p286
        $region22: #{tpu_custom_call.1} parent=11 // pred_check_branch
          %786 = sbr.rel (%p784) target = $region24
        $region23: #{tpu_custom_call.1} parent=11 // pred_region
          _
        $region24: #{tpu_custom_call.1} parent=11 // pred_fallthru
          _
        // Predicated region
        $region25: #{tpu_custom_call.1} parent=11 // pred_check
          %p787 = pneg %p307
        $region26: #{tpu_custom_call.1} parent=11 // pred_check_branch
          %789 = sbr.rel (%p787) target = $region28
        $region27: #{tpu_custom_call.1} parent=11 // pred_region
          %s791 = ssub.s32 16, 16
          %792 = vsyncadd [#allocation9], %s791
          %s794 = sshll.u32 [#allocation8], 4
          %s795 = int_to_ptr.vmem [resolvable:$true] %s794
          %797 = dma.hbm_to_vmem [thread:$0]  %s17, 16, %s795, [#allocation9]
        $region28: #{tpu_custom_call.1} parent=11 // pred_fallthru
          _
        // Predicated region
        $region29: #{tpu_custom_call.1} parent=11 // pred_check
          %p798 = pneg %p328
        $region30: #{tpu_custom_call.1} parent=11 // pred_check_branch
          %800 = sbr.rel (%p798) target = $region32
        $region31: #{tpu_custom_call.1} parent=11 // pred_region
          _
        $region32: #{tpu_custom_call.1} parent=11 // pred_fallthru
          _
        // Predicated region
        $region33: #{tpu_custom_call.1} parent=11 // pred_check
          %p801 = pneg %p349
        $region34: #{tpu_custom_call.1} parent=11 // pred_check_branch
          %803 = sbr.rel (%p801) target = $region36
        $region35: #{tpu_custom_call.1} parent=11 // pred_region
          %s805 = ssub.s32 16, 16
          %806 = vsyncadd [#allocation9], %s805
          %s808 = sshll.u32 [#allocation10], 4
          %s809 = int_to_ptr.vmem [resolvable:$true] %s808
          %811 = dma.hbm_to_vmem [thread:$0]  %s21, 16, %s809, [#allocation9]
        $region36: #{tpu_custom_call.1} parent=11 // pred_fallthru
          _
        // Predicated region
        $region37: #{tpu_custom_call.1} parent=11 // pred_check
          %p812 = pneg %p370
        $region38: #{tpu_custom_call.1} parent=11 // pred_check_branch
          %814 = sbr.rel (%p812) target = $region40
        $region39: #{tpu_custom_call.1} parent=11 // pred_region
          %s816 = ssub.s32 256, 256
          %817 = vsyncadd [#allocation12], %s816
          %s818 = sshll.u32 [#allocation11], 4
          %s819 = int_to_ptr.vmem [resolvable:$true] %s818
          %824 = dma.hbm_to_vmem [thread:$0]  %s23, 256, %s819, [#allocation12], 64, 64, 4
        $region40: #{tpu_custom_call.1} parent=11 // pred_fallthru
          _
        // Predicated region
        $region41: #{tpu_custom_call.1} parent=11 // pred_check
          %p825 = pneg %p391
        $region42: #{tpu_custom_call.1} parent=11 // pred_check_branch
          %827 = sbr.rel (%p825) target = $region44
        $region43: #{tpu_custom_call.1} parent=11 // pred_region
          %s829 = ssub.s32 16, 16
          %830 = vsyncadd [#allocation12], %s829
          %s832 = sshll.u32 [#allocation13], 4
          %s833 = int_to_ptr.vmem [resolvable:$true] %s832
          %835 = dma.hbm_to_vmem [thread:$0]  %s25, 16, %s833, [#allocation12]
        $region44: #{tpu_custom_call.1} parent=11 // pred_fallthru
          _
        // Predicated region
        $region45: #{tpu_custom_call.1} parent=11 // pred_check
          %p836 = pneg %p412
        $region46: #{tpu_custom_call.1} parent=11 // pred_check_branch
          %838 = sbr.rel (%p836) target = $region48
        $region47: #{tpu_custom_call.1} parent=11 // pred_region
          _
        $region48: #{tpu_custom_call.1} parent=11 // pred_fallthru
          _
        // Predicated region
        $region49: #{tpu_custom_call.1} parent=11 // pred_check
          %p839 = pneg %p433
        $region50: #{tpu_custom_call.1} parent=11 // pred_check_branch
          %841 = sbr.rel (%p839) target = $region52
        $region51: #{tpu_custom_call.1} parent=11 // pred_region
          %s843 = ssub.s32 16, 16
          %844 = vsyncadd [#allocation15], %s843
          %s846 = sshll.u32 [#allocation14], 4
          %s847 = int_to_ptr.vmem [resolvable:$true] %s846
          %849 = dma.hbm_to_vmem [thread:$0]  %s29, 16, %s847, [#allocation15]
        $region52: #{tpu_custom_call.1} parent=11 // pred_fallthru
          _
        // Predicated region
        $region53: #{tpu_custom_call.1} parent=11 // pred_check
          %p850 = pneg %p454
        $region54: #{tpu_custom_call.1} parent=11 // pred_check_branch
          %852 = sbr.rel (%p850) target = $region56
        $region55: #{tpu_custom_call.1} parent=11 // pred_region
          %s854 = ssub.s32 256, 256
          %855 = vsyncadd [#allocation15], %s854
          %s856 = sshll.u32 [#allocation16], 4
          %s857 = int_to_ptr.vmem [resolvable:$true] %s856
          %862 = dma.hbm_to_vmem [thread:$0]  %s31, 256, %s857, [#allocation15], 64, 64, 4
        $region56: #{tpu_custom_call.1} parent=11 // pred_fallthru
          _
        // Predicated region
        $region57: #{tpu_custom_call.1} parent=11 // pred_check
          %p863 = pneg %p475
        $region58: #{tpu_custom_call.1} parent=11 // pred_check_branch
          %865 = sbr.rel (%p863) target = $region60
        $region59: #{tpu_custom_call.1} parent=11 // pred_region
          %s867 = ssub.s32 16, 16
          %868 = vsyncadd [#allocation18], %s867
          %s870 = sshll.u32 [#allocation17], 4
          %s871 = int_to_ptr.vmem [resolvable:$true] %s870
          %873 = dma.hbm_to_vmem [thread:$0]  %s33, 16, %s871, [#allocation18]
        $region60: #{tpu_custom_call.1} parent=11 // pred_fallthru
          _
        // Predicated region
        $region61: #{tpu_custom_call.1} parent=11 // pred_check
          %p874 = pneg %p496
        $region62: #{tpu_custom_call.1} parent=11 // pred_check_branch
          %876 = sbr.rel (%p874) target = $region64
        $region63: #{tpu_custom_call.1} parent=11 // pred_region
          _
        $region64: #{tpu_custom_call.1} parent=11 // pred_fallthru
          _
        // Predicated region
        $region65: #{tpu_custom_call.1} parent=11 // pred_check
          %p877 = pneg %p517
        $region66: #{tpu_custom_call.1} parent=11 // pred_check_branch
          %879 = sbr.rel (%p877) target = $region68
        $region67: #{tpu_custom_call.1} parent=11 // pred_region
          _
        $region68: #{tpu_custom_call.1} parent=11 // pred_fallthru
          _
        // Predicated region
        $region69: #{tpu_custom_call.1} parent=11 // pred_check
          %p880 = pneg %p538
        $region70: #{tpu_custom_call.1} parent=11 // pred_check_branch
          %882 = sbr.rel (%p880) target = $region72
        $region71: #{tpu_custom_call.1} parent=11 // pred_region
          %s884 = ssub.s32 256, 256
          %885 = vsyncadd [#allocation18], %s884
          %s886 = sshll.u32 [#allocation19], 4
          %s887 = int_to_ptr.vmem [resolvable:$true] %s886
          %892 = dma.hbm_to_vmem [thread:$0]  %s39, 256, %s887, [#allocation18], 64, 64, 4
        $region72: #{tpu_custom_call.1} parent=11 // pred_fallthru
          _
        // Predicated region
        $region73: #{tpu_custom_call.1} parent=11 // pred_check
          %p893 = pneg %p559
        $region74: #{tpu_custom_call.1} parent=11 // pred_check_branch
          %895 = sbr.rel (%p893) target = $region76
        $region75: #{tpu_custom_call.1} parent=11 // pred_region
          _
        $region76: #{tpu_custom_call.1} parent=11 // pred_fallthru
          _
        // Predicated region
        $region77: #{tpu_custom_call.1} parent=11 // pred_check
          %p896 = pneg %p580
        $region78: #{tpu_custom_call.1} parent=11 // pred_check_branch
          %898 = sbr.rel (%p896) target = $region80
        $region79: #{tpu_custom_call.1} parent=11 // pred_region
          _
        $region80: #{tpu_custom_call.1} parent=11 // pred_fallthru
          _
        // Predicated region
        $region81: #{tpu_custom_call.1} parent=11 // pred_check
          %p899 = pneg %p601
        $region82: #{tpu_custom_call.1} parent=11 // pred_check_branch
          %901 = sbr.rel (%p899) target = $region84
        $region83: #{tpu_custom_call.1} parent=11 // pred_region
          %s903 = ssub.s32 16, 16
          %904 = vsyncadd [#allocation21], %s903
          %s906 = sshll.u32 [#allocation20], 4
          %s907 = int_to_ptr.vmem [resolvable:$true] %s906
          %909 = dma.hbm_to_vmem [thread:$0]  %s45, 16, %s907, [#allocation21]
        $region84: #{tpu_custom_call.1} parent=11 // pred_fallthru
          _
        // Predicated region
        $region85: #{tpu_custom_call.1} parent=11 // pred_check
          %p910 = pneg %p622
        $region86: #{tpu_custom_call.1} parent=11 // pred_check_branch
          %912 = sbr.rel (%p910) target = $region88
        $region87: #{tpu_custom_call.1} parent=11 // pred_region
          _
        $region88: #{tpu_custom_call.1} parent=11 // pred_fallthru
          _
        // Predicated region
        $region89: #{tpu_custom_call.1} parent=11 // pred_check
          %p913 = pneg %p643
        $region90: #{tpu_custom_call.1} parent=11 // pred_check_branch
          %915 = sbr.rel (%p913) target = $region92
        $region91: #{tpu_custom_call.1} parent=11 // pred_region
          _
        $region92: #{tpu_custom_call.1} parent=11 // pred_fallthru
          _
        // Predicated region
        $region93: #{tpu_custom_call.1} parent=11 // pred_check
          %p916 = pneg %p664
        $region94: #{tpu_custom_call.1} parent=11 // pred_check_branch
          %918 = sbr.rel (%p916) target = $region96
        $region95: #{tpu_custom_call.1} parent=11 // pred_region
          _
        $region96: #{tpu_custom_call.1} parent=11 // pred_fallthru
          _
        // Predicated region
        $region97: #{tpu_custom_call.1} parent=11 // pred_check
          %p919 = pneg %p685
        $region98: #{tpu_custom_call.1} parent=11 // pred_check_branch
          %921 = sbr.rel (%p919) target = $region100
        $region99: #{tpu_custom_call.1} parent=11 // pred_region
          _
        $region100: #{tpu_custom_call.1} parent=11 // pred_fallthru
          _
        // Predicated region
        $region101: #{tpu_custom_call.1} parent=11 // pred_check
          %p922 = pneg %p706
        $region102: #{tpu_custom_call.1} parent=11 // pred_check_branch
          %924 = sbr.rel (%p922) target = $region104
        $region103: #{tpu_custom_call.1} parent=11 // pred_region
          _
        $region104: #{tpu_custom_call.1} parent=11 // pred_fallthru
          _
        // Predicated region
        $region105: #{tpu_custom_call.1} parent=11 // pred_check
          %p925 = pneg %p727
        $region106: #{tpu_custom_call.1} parent=11 // pred_check_branch
          %927 = sbr.rel (%p925) target = $region108
        $region107: #{tpu_custom_call.1} parent=11 // pred_region
          _
        $region108: #{tpu_custom_call.1} parent=11 // pred_fallthru
          _
      $region12: #{tpu_custom_call.1} parent=5 // pred_fallthru
        _
      %p928 = scmp.lt.s32.totalorder %s79, 2
      // Predicated region
      $region109: #{tpu_custom_call.1} parent=5 // pred_check
        %p929 = pneg %p928
      $region110: #{tpu_custom_call.1} parent=5 // pred_check_branch
        %931 = sbr.rel (%p929) target = $region112
      $region111: #{tpu_custom_call.1} parent=5 // pred_region
        // Predicated region
        $region113: #{tpu_custom_call.1} parent=111 // pred_check
          %p932 = pneg %p113
        $region114: #{tpu_custom_call.1} parent=111 // pred_check_branch
          %934 = sbr.rel (%p932) target = $region116
        $region115: #{tpu_custom_call.1} parent=111 // pred_region
          %p935 = scmp.lt.s32.totalorder %s86, 1
          %s936 = scalar_select %p935, %s86, 1
          %p937 = scmp.lt.s32.totalorder %s87, 0
          %s938 = scalar_select %p937, %s87, 0
          %s939 = sadd.s32 %s938, %s936
          %s940 = smul.addr %s939, 8
          %s941 = scalar_lea.vmem %s1, %s940
        $region116: #{tpu_custom_call.1} parent=111 // pred_fallthru
          _
        // Predicated region
        $region117: #{tpu_custom_call.1} parent=111 // pred_check
          %p942 = pneg %p139
        $region118: #{tpu_custom_call.1} parent=111 // pred_check_branch
          %944 = sbr.rel (%p942) target = $region120
        $region119: #{tpu_custom_call.1} parent=111 // pred_region
          %p945 = scmp.lt.s32.totalorder %s86, 1
          %s946 = scalar_select %p945, %s86, 1
          %s947 = smul.addr %s946, 8
          %s948 = scalar_lea.vmem %s3, %s947
        $region120: #{tpu_custom_call.1} parent=111 // pred_fallthru
          _
        // Predicated region
        $region121: #{tpu_custom_call.1} parent=111 // pred_check
          %p949 = pneg %p165
        $region122: #{tpu_custom_call.1} parent=111 // pred_check_branch
          %951 = sbr.rel (%p949) target = $region124
        $region123: #{tpu_custom_call.1} parent=111 // pred_region
          %p952 = scmp.lt.s32.totalorder %s86, 1
          %s953 = scalar_select %p952, %s86, 1
          %s954 = smul.addr %s953, 8
          %s955 = scalar_lea.vmem %s5, %s954
        $region124: #{tpu_custom_call.1} parent=111 // pred_fallthru
          _
        // Predicated region
        $region125: #{tpu_custom_call.1} parent=111 // pred_check
          %p956 = pneg %p191
        $region126: #{tpu_custom_call.1} parent=111 // pred_check_branch
          %958 = sbr.rel (%p956) target = $region128
        $region127: #{tpu_custom_call.1} parent=111 // pred_region
          %s959 = sand.u32 %s181, 1
          %s960 = scalar_lea.sflag [#allocation3], %s959
          %s961 = sand.u32 %s181, 1
          %s962 = scalar_lea.vmem [#allocation2], %s961
          %s964 = ssub.s32 16, 16
          %965 = vsyncadd %s960, %s964
          %s966 = smul.addr %s86, 16
          %s967 = scalar_lea.hbm %s7, %s966
          %s969 = sshll.u32 %s962, 4
          %s970 = int_to_ptr.vmem [resolvable:$true] %s969
          %972 = dma.hbm_to_vmem [thread:$0]  %s967, 16, %s970, %s960
        $region128: #{tpu_custom_call.1} parent=111 // pred_fallthru
          _
        // Predicated region
        $region129: #{tpu_custom_call.1} parent=111 // pred_check
          %p973 = pneg %p217
        $region130: #{tpu_custom_call.1} parent=111 // pred_check_branch
          %975 = sbr.rel (%p973) target = $region132
        $region131: #{tpu_custom_call.1} parent=111 // pred_region
          %s976 = sand.u32 %s79, 1
          %s977 = scalar_lea.sflag [#allocation6], %s976
          %s978 = sand.u32 %s207, 1
          %s979 = scalar_lea.vmem [#allocation5], %s978
          %s981 = ssub.s32 16, 16
          %982 = vsyncadd %s977, %s981
          %s983 = smul.addr %s86, 16
          %s984 = scalar_lea.hbm %s9, %s983
          %s986 = sshll.u32 %s979, 4
          %s987 = int_to_ptr.vmem [resolvable:$true] %s986
          %989 = dma.hbm_to_vmem [thread:$0]  %s984, 16, %s987, %s977
        $region132: #{tpu_custom_call.1} parent=111 // pred_fallthru
          _
      $region112: #{tpu_custom_call.1} parent=5 // pred_fallthru
        _
      %p990 = scmp.le.s32.totalorder 1, %s79
      %p991 = scmp.lt.s32.totalorder %s79, 3
      %p992 = pnand %p990, %p991
      %p993 = pneg %p992
      // Predicated region
      $region133: #{tpu_custom_call.1} parent=5 // pred_check
        _
      $region134: #{tpu_custom_call.1} parent=5 // pred_check_branch
        %995 = sbr.rel (%p992) target = $region136
      $region135: #{tpu_custom_call.1} parent=5 // pred_region
        %s996 = ssub.s32 %s79, 1
        %s997 = sand.u32 %s184, 1
        %s998 = scalar_lea.sflag [#allocation3], %s997
        %s999 = sand.u32 %s184, 1
        %s1000 = scalar_lea.vmem [#allocation2], %s999
        // Predicated region
        $region137: #{tpu_custom_call.1} parent=135 // pred_check
          %p1001 = pneg %p197
        $region138: #{tpu_custom_call.1} parent=135 // pred_check_branch
          %1003 = sbr.rel (%p1001) target = $region140
        $region139: #{tpu_custom_call.1} parent=135 // pred_region
          %1004 = dma.done %s998, 16
        $region140: #{tpu_custom_call.1} parent=135 // pred_fallthru
          _
        %s1005 = sand.u32 %s84, 1
        %s1006 = scalar_lea.sflag [#allocation6], %s1005
        %s1007 = sand.u32 %s210, 1
        %s1008 = scalar_lea.vmem [#allocation5], %s1007
        // Predicated region
        $region141: #{tpu_custom_call.1} parent=135 // pred_check
          %p1009 = pneg %p223
        $region142: #{tpu_custom_call.1} parent=135 // pred_check_branch
          %1011 = sbr.rel (%p1009) target = $region144
        $region143: #{tpu_custom_call.1} parent=135 // pred_region
          %1012 = dma.done %s1006, 16
        $region144: #{tpu_custom_call.1} parent=135 // pred_fallthru
          _
        // Predicated region
        $region145: #{tpu_custom_call.1} parent=135 // pred_check
          %p1013 = pneg %p265
        $region146: #{tpu_custom_call.1} parent=135 // pred_check_branch
          %1015 = sbr.rel (%p1013) target = $region148
        $region147: #{tpu_custom_call.1} parent=135 // pred_region
          %1016 = dma.done [#allocation6], 16
        $region148: #{tpu_custom_call.1} parent=135 // pred_fallthru
          _
        // Predicated region
        $region149: #{tpu_custom_call.1} parent=135 // pred_check
          %p1017 = pneg %p307
        $region150: #{tpu_custom_call.1} parent=135 // pred_check_branch
          %1019 = sbr.rel (%p1017) target = $region152
        $region151: #{tpu_custom_call.1} parent=135 // pred_region
          %1020 = dma.done [#allocation9], 16
        $region152: #{tpu_custom_call.1} parent=135 // pred_fallthru
          _
        // Predicated region
        $region153: #{tpu_custom_call.1} parent=135 // pred_check
          %p1021 = pneg %p349
        $region154: #{tpu_custom_call.1} parent=135 // pred_check_branch
          %1023 = sbr.rel (%p1021) target = $region156
        $region155: #{tpu_custom_call.1} parent=135 // pred_region
          %1024 = dma.done [#allocation9], 16
        $region156: #{tpu_custom_call.1} parent=135 // pred_fallthru
          _
        // Predicated region
        $region157: #{tpu_custom_call.1} parent=135 // pred_check
          %p1025 = pneg %p370
        $region158: #{tpu_custom_call.1} parent=135 // pred_check_branch
          %1027 = sbr.rel (%p1025) target = $region160
        $region159: #{tpu_custom_call.1} parent=135 // pred_region
          %1028 = dma.done [#allocation12], 256
        $region160: #{tpu_custom_call.1} parent=135 // pred_fallthru
          _
        // Predicated region
        $region161: #{tpu_custom_call.1} parent=135 // pred_check
          %p1029 = pneg %p391
        $region162: #{tpu_custom_call.1} parent=135 // pred_check_branch
          %1031 = sbr.rel (%p1029) target = $region164
        $region163: #{tpu_custom_call.1} parent=135 // pred_region
          %1032 = dma.done [#allocation12], 16
        $region164: #{tpu_custom_call.1} parent=135 // pred_fallthru
          _
        // Predicated region
        $region165: #{tpu_custom_call.1} parent=135 // pred_check
          %p1033 = pneg %p433
        $region166: #{tpu_custom_call.1} parent=135 // pred_check_branch
          %1035 = sbr.rel (%p1033) target = $region168
        $region167: #{tpu_custom_call.1} parent=135 // pred_region
          %1036 = dma.done [#allocation15], 16
        $region168: #{tpu_custom_call.1} parent=135 // pred_fallthru
          _
        // Predicated region
        $region169: #{tpu_custom_call.1} parent=135 // pred_check
          %p1037 = pneg %p454
        $region170: #{tpu_custom_call.1} parent=135 // pred_check_branch
          %1039 = sbr.rel (%p1037) target = $region172
        $region171: #{tpu_custom_call.1} parent=135 // pred_region
          %1040 = dma.done [#allocation15], 256
        $region172: #{tpu_custom_call.1} parent=135 // pred_fallthru
          _
        // Predicated region
        $region173: #{tpu_custom_call.1} parent=135 // pred_check
          %p1041 = pneg %p475
        $region174: #{tpu_custom_call.1} parent=135 // pred_check_branch
          %1043 = sbr.rel (%p1041) target = $region176
        $region175: #{tpu_custom_call.1} parent=135 // pred_region
          %1044 = dma.done [#allocation18], 16
        $region176: #{tpu_custom_call.1} parent=135 // pred_fallthru
          _
        // Predicated region
        $region177: #{tpu_custom_call.1} parent=135 // pred_check
          %p1045 = pneg %p538
        $region178: #{tpu_custom_call.1} parent=135 // pred_check_branch
          %1047 = sbr.rel (%p1045) target = $region180
        $region179: #{tpu_custom_call.1} parent=135 // pred_region
          %1048 = dma.done [#allocation18], 256
        $region180: #{tpu_custom_call.1} parent=135 // pred_fallthru
          _
        // Predicated region
        $region181: #{tpu_custom_call.1} parent=135 // pred_check
          %p1049 = pneg %p601
        $region182: #{tpu_custom_call.1} parent=135 // pred_check_branch
          %1051 = sbr.rel (%p1049) target = $region184
        $region183: #{tpu_custom_call.1} parent=135 // pred_region
          %1052 = dma.done [#allocation21], 16
        $region184: #{tpu_custom_call.1} parent=135 // pred_fallthru
          _
        %p1053 = scmp.lt.s32.totalorder %s88, 1
        %s1054 = scalar_select %p1053, %s88, 1
        %p1055 = scmp.lt.s32.totalorder %s89, 0
        %s1056 = scalar_select %p1055, %s89, 0
        %s1057 = sadd.s32 %s1056, %s1054
        %s1058 = smul.addr %s1057, 8
        %s1059 = scalar_lea.vmem %s1, %s1058
        %p1060 = pneg %p119
        %p1061 = pneg %p116
        %p1062 = scmp.lt.s32.totalorder %s88, 1
        %s1063 = scalar_select %p1062, %s88, 1
        %s1064 = smul.addr %s1063, 8
        %s1065 = scalar_lea.vmem %s3, %s1064
        %p1066 = pneg %p145
        %p1067 = pneg %p142
        %p1068 = scmp.lt.s32.totalorder %s88, 1
        %s1069 = scalar_select %p1068, %s88, 1
        %s1070 = smul.addr %s1069, 8
        %s1071 = scalar_lea.vmem %s5, %s1070
        %p1072 = pneg %p171
        %p1073 = pneg %p168
        %s1074 = sand.u32 %s184, 1
        %s1075 = scalar_lea.sflag [#allocation3], %s1074
        %s1076 = sand.u32 %s184, 1
        %s1077 = scalar_lea.vmem [#allocation2], %s1076
        %p1078 = pneg %p197
        %p1079 = pneg %p194
        %s1080 = sand.u32 %s84, 1
        %s1081 = scalar_lea.sflag [#allocation6], %s1080
        %s1082 = sand.u32 %s210, 1
        %s1083 = scalar_lea.vmem [#allocation5], %s1082
        %p1084 = pneg %p223
        %p1085 = pneg %p220
        %p1086 = pneg %p244
        %p1087 = pneg %p241
        %p1088 = pneg %p265
        %p1089 = pneg %p262
        %p1090 = pneg %p286
        %p1091 = pneg %p283
        %p1092 = pneg %p307
        %p1093 = pneg %p304
        %p1094 = pneg %p328
        %p1095 = pneg %p325
        %p1096 = pneg %p349
        %p1097 = pneg %p346
        %p1098 = pneg %p370
        %p1099 = pneg %p367
        %p1100 = pneg %p391
        %p1101 = pneg %p388
        %p1102 = pneg %p412
        %p1103 = pneg %p409
        %p1104 = pneg %p433
        %p1105 = pneg %p430
        %p1106 = pneg %p454
        %p1107 = pneg %p451
        %p1108 = pneg %p475
        %p1109 = pneg %p472
        %p1110 = pneg %p496
        %p1111 = pneg %p493
        %p1112 = pneg %p517
        %p1113 = pneg %p514
        %p1114 = pneg %p538
        %p1115 = pneg %p535
        %p1116 = pneg %p559
        %p1117 = pneg %p556
        %p1118 = pneg %p580
        %p1119 = pneg %p577
        %p1120 = pneg %p601
        %p1121 = pneg %p598
        %p1122 = pneg %p622
        %p1123 = pneg %p619
        %p1124 = pneg %p643
        %p1125 = pneg %p640
        %p1126 = pneg %p664
        %p1127 = pneg %p661
        %p1128 = pneg %p685
        %p1129 = pneg %p682
        %p1130 = pneg %p706
        %p1131 = pneg %p703
        %p1132 = pneg %p727
        %p1133 = pneg %p724
        %p1134 = pneg %p755
        %p1135 = pneg %p752
        %s1136 = sand.u32 %s742, 1
        %s1137 = scalar_lea.sflag [#allocation4], %s1136
        %s1138 = sand.u32 %s742, 1
        %s1139 = smul.addr %s1138, 8
        %s1140 = scalar_lea.vmem [#allocation22], %s1139
        %p1141 = scmp.lt.s32.totalorder %s88, 1
        %s1142 = scalar_select %p1141, %s88, 1
        %p1143 = scmp.lt.s32.totalorder %s89, 0
        %s1144 = scalar_select %p1143, %s89, 0
        %s1145 = sadd.s32 %s1144, %s1142
        %s1146 = smul.addr %s1145, 8
        %s1147 = scalar_lea.vmem %s1, %s1146
        %p1148 = scmp.lt.s32.totalorder %s88, 1
        %s1149 = scalar_select %p1148, %s88, 1
        %s1150 = smul.addr %s1149, 8
        %s1151 = scalar_lea.vmem %s3, %s1150
        %p1152 = scmp.lt.s32.totalorder %s88, 1
        %s1153 = scalar_select %p1152, %s88, 1
        %s1154 = smul.addr %s1153, 8
        %s1155 = scalar_lea.vmem %s5, %s1154
        %v1157 = vld [vmem:[%s1147] sm:$0xff]
        %v1158 = vld [vmem:[%s1151] sm:$0xff]
        %v1159 = vld [vmem:[%s1155] sm:$0xff]
        %v1160 = vld [vmem:[%s1000] sm:$0x1]
        %v1161 = vld [vmem:[%s1008] sm:$0x1]
        %v1162 = vld [vmem:[%s11] sm:$0xf]
        %v1163 = vld [vmem:[%s11 + $0x4] sm:$0xf]
        %v1164 = vld [vmem:[%s11 + $0x8] sm:$0xf]
        %v1165 = vld [vmem:[%s11 + $0xc] sm:$0xf]
        %v1166 = vld [vmem:[#allocation7] sm:$0x1]
        %v1167 = vld [vmem:[%s15] sm:$0xf]
        %v1168 = vld [vmem:[%s15 + $0x4] sm:$0xf]
        %v1169 = vld [vmem:[%s15 + $0x8] sm:$0xf]
        %v1170 = vld [vmem:[%s15 + $0xc] sm:$0xf]
        %v1171 = vld [vmem:[#allocation8] sm:$0x1]
        %v1172 = vld [vmem:[%s19] sm:$0xf]
        %v1173 = vld [vmem:[%s19 + $0x4] sm:$0xf]
        %v1174 = vld [vmem:[%s19 + $0x8] sm:$0xf]
        %v1175 = vld [vmem:[%s19 + $0xc] sm:$0xf]
        %v1176 = vld [vmem:[#allocation10] sm:$0x1]
        %v1177 = vld [vmem:[#allocation11] sm:$0xf]
        %v1178 = vld [vmem:[#allocation11 + $0x4] sm:$0xf]
        %v1179 = vld [vmem:[#allocation11 + $0x8] sm:$0xf]
        %v1180 = vld [vmem:[#allocation11 + $0xc] sm:$0xf]
        %v1181 = vld [vmem:[#allocation13] sm:$0x1]
        %v1182 = vpack.c.bf16 %v1157, %v1157
        %v1183 = vpack.c.bf16 %v1158, %v1158
        %v1185 = vlaneseq
        %v1186 = vshrl.u32 %v1185, 7
        %v1187 = vsub.s32 0, %v1186
        %v1188 = vrot.slane %v1166, %v1187
        %v1194 = vunpack.c.l.b16 %v1162
        %v1195 = vunpack.c.l.b16 %v1163
        %v1196 = vunpack.c.l.b16 %v1164
        %v1197 = vunpack.c.l.b16 %v1165
        %v1198 = vpack.c.b16 %v1195, %v1194
        %v1199 = vpack.c.b16 %v1197, %v1196
        %vm1202 = vcmask 261120
        %v1204 = vsel %vm1202, %v1183, 0
        %1206 = vmatprep.subr.bf16.mxu0 0
        %1207 = vmatpush1.bf16.msra.mxu0 %v1198
        %1208 = vmatprep.subr.bf16.mxu0 0
        %1209 = vmatpush1.bf16.msra.mxu0 %v1199
        %1210 = vmatprep.subr.bf16.mxu0 0
        %1211 = vmatpush1.bf16.msra.mxu0 0
        %1212 = vmatprep.subr.bf16.mxu0 0
        %1213 = vmatpush1.bf16.msra.mxu0 0
        %1214 = vmatprep.subr.bf16.mxu0 0
        %1215 = vmatpush1.bf16.msra.mxu0 0
        %1216 = vmatprep.subr.bf16.mxu0 0
        %1217 = vmatpush1.bf16.msra.mxu0 0
        %1218 = vmatprep.subr.bf16.mxu0 0
        %1219 = vmatpush1.bf16.msra.mxu0 0
        %1220 = vmatprep.subr.bf16.mxu0 0
        %1221 = vmatpush1.bf16.msra.mxu0 0
        %1222 = vmatprep.subr.bf16.mxu0 0
        %1223 = vmatpush1.bf16.msra.mxu0 0
        %1224 = vmatprep.subr.bf16.mxu0 0
        %1225 = vmatpush1.bf16.msra.mxu0 0
        %1226 = vmatprep.subr.bf16.mxu0 0
        %1227 = vmatpush1.bf16.msra.mxu0 0
        %1228 = vmatprep.subr.bf16.mxu0 0
        %1229 = vmatpush1.bf16.msra.mxu0 0
        %1230 = vmatprep.subr.bf16.mxu0 0
        %1231 = vmatpush1.bf16.msra.mxu0 0
        %1232 = vmatprep.subr.bf16.mxu0 0
        %1233 = vmatpush1.bf16.msra.mxu0 0
        %1234 = vmatprep.subr.bf16.mxu0 0
        %1235 = vmatpush1.bf16.msra.mxu0 0
        %1236 = vmatprep.subr.bf16.mxu0 0
        %1237 = vmatpush1.bf16.msra.mxu0 0
        %1238 = vmatprep.mubr.bf16.mxu0 0
        %1239 = vmatmul.mubr.bf16.gmra.mrb[0].mxu0 %v1204
        %v1240 = vpop.f32.mrb[0].mxu0
        %v1241 = vadd.f32 %v1188, %v1240
        %v1242 = vpop.f32.mrb[0].mxu0
        %v1243 = vpop.f32.mrb[0].mxu0
        %v1244 = vpop.f32.mrb[0].mxu0
        %1245 = vdwg.mxu0
        %v1247 = vlaneseq
        %v1248 = vshrl.u32 %v1247, 7
        %v1249 = vsub.s32 0, %v1248
        %v1250 = vrot.slane %v1171, %v1249
        %v1256 = vunpack.c.l.b16 %v1167
        %v1257 = vunpack.c.l.b16 %v1168
        %v1258 = vunpack.c.l.b16 %v1169
        %v1259 = vunpack.c.l.b16 %v1170
        %v1260 = vpack.c.b16 %v1257, %v1256
        %v1261 = vpack.c.b16 %v1259, %v1258
        %1264 = vmatprep.subr.bf16.mxu0 0
        %1265 = vmatpush1.bf16.msra.mxu0 %v1260
        %1266 = vmatprep.subr.bf16.mxu0 0
        %1267 = vmatpush1.bf16.msra.mxu0 %v1261
        %1268 = vmatprep.subr.bf16.mxu0 0
        %1269 = vmatpush1.bf16.msra.mxu0 0
        %1270 = vmatprep.subr.bf16.mxu0 0
        %1271 = vmatpush1.bf16.msra.mxu0 0
        %1272 = vmatprep.subr.bf16.mxu0 0
        %1273 = vmatpush1.bf16.msra.mxu0 0
        %1274 = vmatprep.subr.bf16.mxu0 0
        %1275 = vmatpush1.bf16.msra.mxu0 0
        %1276 = vmatprep.subr.bf16.mxu0 0
        %1277 = vmatpush1.bf16.msra.mxu0 0
        %1278 = vmatprep.subr.bf16.mxu0 0
        %1279 = vmatpush1.bf16.msra.mxu0 0
        %1280 = vmatprep.subr.bf16.mxu0 0
        %1281 = vmatpush1.bf16.msra.mxu0 0
        %1282 = vmatprep.subr.bf16.mxu0 0
        %1283 = vmatpush1.bf16.msra.mxu0 0
        %1284 = vmatprep.subr.bf16.mxu0 0
        %1285 = vmatpush1.bf16.msra.mxu0 0
        %1286 = vmatprep.subr.bf16.mxu0 0
        %1287 = vmatpush1.bf16.msra.mxu0 0
        %1288 = vmatprep.subr.bf16.mxu0 0
        %1289 = vmatpush1.bf16.msra.mxu0 0
        %1290 = vmatprep.subr.bf16.mxu0 0
        %1291 = vmatpush1.bf16.msra.mxu0 0
        %1292 = vmatprep.subr.bf16.mxu0 0
        %1293 = vmatpush1.bf16.msra.mxu0 0
        %1294 = vmatprep.subr.bf16.mxu0 0
        %1295 = vmatpush1.bf16.msra.mxu0 0
        %1296 = vmatprep.mubr.bf16.mxu0 0
        %1297 = vmatmul.mubr.bf16.gmra.mrb[0].mxu0 %v1204
        %v1298 = vpop.f32.mrb[0].mxu0
        %v1299 = vadd.f32 %v1250, %v1298
        %v1300 = vpop.f32.mrb[0].mxu0
        %v1301 = vpop.f32.mrb[0].mxu0
        %v1302 = vpop.f32.mrb[0].mxu0
        %1303 = vdwg.mxu0
        %v1305 = vlaneseq
        %v1306 = vshrl.u32 %v1305, 7
        %v1307 = vsub.s32 0, %v1306
        %v1308 = vrot.slane %v1176, %v1307
        %v1314 = vunpack.c.l.b16 %v1172
        %v1315 = vunpack.c.l.b16 %v1173
        %v1316 = vunpack.c.l.b16 %v1174
        %v1317 = vunpack.c.l.b16 %v1175
        %v1318 = vpack.c.b16 %v1315, %v1314
        %v1319 = vpack.c.b16 %v1317, %v1316
        %v1323 = vsel %vm1202, %v1182, 0
        %1325 = vmatprep.subr.bf16.mxu0 0
        %1326 = vmatpush1.bf16.msra.mxu0 %v1318
        %1327 = vmatprep.subr.bf16.mxu0 0
        %1328 = vmatpush1.bf16.msra.mxu0 %v1319
        %1329 = vmatprep.subr.bf16.mxu0 0
        %1330 = vmatpush1.bf16.msra.mxu0 0
        %1331 = vmatprep.subr.bf16.mxu0 0
        %1332 = vmatpush1.bf16.msra.mxu0 0
        %1333 = vmatprep.subr.bf16.mxu0 0
        %1334 = vmatpush1.bf16.msra.mxu0 0
        %1335 = vmatprep.subr.bf16.mxu0 0
        %1336 = vmatpush1.bf16.msra.mxu0 0
        %1337 = vmatprep.subr.bf16.mxu0 0
        %1338 = vmatpush1.bf16.msra.mxu0 0
        %1339 = vmatprep.subr.bf16.mxu0 0
        %1340 = vmatpush1.bf16.msra.mxu0 0
        %1341 = vmatprep.subr.bf16.mxu0 0
        %1342 = vmatpush1.bf16.msra.mxu0 0
        %1343 = vmatprep.subr.bf16.mxu0 0
        %1344 = vmatpush1.bf16.msra.mxu0 0
        %1345 = vmatprep.subr.bf16.mxu0 0
        %1346 = vmatpush1.bf16.msra.mxu0 0
        %1347 = vmatprep.subr.bf16.mxu0 0
        %1348 = vmatpush1.bf16.msra.mxu0 0
        %1349 = vmatprep.subr.bf16.mxu0 0
        %1350 = vmatpush1.bf16.msra.mxu0 0
        %1351 = vmatprep.subr.bf16.mxu0 0
        %1352 = vmatpush1.bf16.msra.mxu0 0
        %1353 = vmatprep.subr.bf16.mxu0 0
        %1354 = vmatpush1.bf16.msra.mxu0 0
        %1355 = vmatprep.subr.bf16.mxu0 0
        %1356 = vmatpush1.bf16.msra.mxu0 0
        %1357 = vmatprep.mubr.bf16.mxu0 0
        %1358 = vmatmul.mubr.bf16.gmra.mrb[0].mxu0 %v1323
        %v1359 = vpop.f32.mrb[0].mxu0
        %v1360 = vadd.f32 %v1308, %v1359
        %v1361 = vpop.f32.mrb[0].mxu0
        %v1362 = vpop.f32.mrb[0].mxu0
        %v1363 = vpop.f32.mrb[0].mxu0
        %1364 = vdwg.mxu0
        %v1365 = vmul.f32 %v1360, 0.35355338
        %vm1366 = vcmp.gt.f32.partialorder %v1160, 0.0
        %v1367 = vsel %vm1366, 0.0, -1e+30
        %v1369 = vlaneseq
        %v1370 = vshrl.u32 %v1369, 7
        %v1371 = vsub.s32 0, %v1370
        %v1372 = vrot.slane %v1367, %v1371
        %v1374 = vpack.c.bf16 %v1365, %v1365
        %v1375 = vpack.c.bf16 %v1241, %v1241
        %v1376 = vpack.c.bf16 %v1299, %v1299
        %vm1377 = vcmask 64512
        %v1379 = vsel %vm1377, %v1374, 0
        %v1382 = vsel %vm1377, %v1375, 0
        %1384 = vmatprep.subr.bf16.mxu0 0
        %1385 = vmatpush1.bf16.xpose.msra.mxu0 %v1382
        %1386 = vmatprep.subr.bf16.mxu0 0
        %1387 = vmatpush1.bf16.xpose.msra.mxu0 0
        %1388 = vmatprep.subr.bf16.mxu0 0
        %1389 = vmatpush1.bf16.xpose.msra.mxu0 0
        %1390 = vmatprep.subr.bf16.mxu0 0
        %1391 = vmatpush1.bf16.xpose.msra.mxu0 0
        %1392 = vmatprep.subr.bf16.mxu0 0
        %1393 = vmatpush1.bf16.xpose.msra.mxu0 0
        %1394 = vmatprep.subr.bf16.mxu0 0
        %1395 = vmatpush1.bf16.xpose.msra.mxu0 0
        %1396 = vmatprep.subr.bf16.mxu0 0
        %1397 = vmatpush1.bf16.xpose.msra.mxu0 0
        %1398 = vmatprep.subr.bf16.mxu0 0
        %1399 = vmatpush1.bf16.xpose.msra.mxu0 0
        %1400 = vmatprep.subr.bf16.mxu0 0
        %1401 = vmatpush1.bf16.xpose.msra.mxu0 0
        %1402 = vmatprep.subr.bf16.mxu0 0
        %1403 = vmatpush1.bf16.xpose.msra.mxu0 0
        %1404 = vmatprep.subr.bf16.mxu0 0
        %1405 = vmatpush1.bf16.xpose.msra.mxu0 0
        %1406 = vmatprep.subr.bf16.mxu0 0
        %1407 = vmatpush1.bf16.xpose.msra.mxu0 0
        %1408 = vmatprep.subr.bf16.mxu0 0
        %1409 = vmatpush1.bf16.xpose.msra.mxu0 0
        %1410 = vmatprep.subr.bf16.mxu0 0
        %1411 = vmatpush1.bf16.xpose.msra.mxu0 0
        %1412 = vmatprep.subr.bf16.mxu0 0
        %1413 = vmatpush1.bf16.xpose.msra.mxu0 0
        %1414 = vmatprep.subr.bf16.mxu0 0
        %1415 = vmatpush1.bf16.xpose.msra.mxu0 0
        %1416 = vmatprep.mubr.bf16.mxu0 0
        %1417 = vmatmul.mubr.bf16.gmra.mrb[0].mxu0 %v1379
        %v1418 = vpop.f32.mrb[0].mxu0
        %v1419 = vadd.f32 %v1372, %v1418
        %v1420 = vpop.f32.mrb[0].mxu0
        %v1421 = vpop.f32.mrb[0].mxu0
        %v1422 = vpop.f32.mrb[0].mxu0
        %1423 = vdwg.mxu0
        %v1424 = vsel %vm1377, %v1419, -inf
        %1425 = vmax.xlane.f32.xlu0 %v1424
        %v1426 = vpop.xlane.xlu0 %1425
        %v1427 = vsub.f32 %v1419, %v1426
        %v1428 = vmul.f32 %v1427, 1.442695
        %v1429 = vpow.pop %v1428
        %v1430 = vsel %vm1377, %v1429, 0.0
        %1431 = vadd.xlane.f32.xlu0 %v1430
        %v1432 = vpop.xlane.xlu0 %1431
        %v1433 = vrcp.pop %v1432
        %v1434 = vmul.f32 %v1429, %v1433
        %v1435 = vpack.c.bf16 %v1434, %v1434
        %v1437 = vsel %vm1377, %v1435, 0
        %vm1439 = vcmask 1043456
        %v1441 = vsel %vm1439, %v1376, 0
        %1443 = vmatprep.subr.bf16.mxu0 0
        %1444 = vmatpush1.bf16.msra.mxu0 %v1441
        %1445 = vmatprep.subr.bf16.mxu0 0
        %1446 = vmatpush1.bf16.msra.mxu0 0
        %1447 = vmatprep.subr.bf16.mxu0 0
        %1448 = vmatpush1.bf16.msra.mxu0 0
        %1449 = vmatprep.subr.bf16.mxu0 0
        %1450 = vmatpush1.bf16.msra.mxu0 0
        %1451 = vmatprep.subr.bf16.mxu0 0
        %1452 = vmatpush1.bf16.msra.mxu0 0
        %1453 = vmatprep.subr.bf16.mxu0 0
        %1454 = vmatpush1.bf16.msra.mxu0 0
        %1455 = vmatprep.subr.bf16.mxu0 0
        %1456 = vmatpush1.bf16.msra.mxu0 0
        %1457 = vmatprep.subr.bf16.mxu0 0
        %1458 = vmatpush1.bf16.msra.mxu0 0
        %1459 = vmatprep.subr.bf16.mxu0 0
        %1460 = vmatpush1.bf16.msra.mxu0 0
        %1461 = vmatprep.subr.bf16.mxu0 0
        %1462 = vmatpush1.bf16.msra.mxu0 0
        %1463 = vmatprep.subr.bf16.mxu0 0
        %1464 = vmatpush1.bf16.msra.mxu0 0
        %1465 = vmatprep.subr.bf16.mxu0 0
        %1466 = vmatpush1.bf16.msra.mxu0 0
        %1467 = vmatprep.subr.bf16.mxu0 0
        %1468 = vmatpush1.bf16.msra.mxu0 0
        %1469 = vmatprep.subr.bf16.mxu0 0
        %1470 = vmatpush1.bf16.msra.mxu0 0
        %1471 = vmatprep.subr.bf16.mxu0 0
        %1472 = vmatpush1.bf16.msra.mxu0 0
        %1473 = vmatprep.subr.bf16.mxu0 0
        %1474 = vmatpush1.bf16.msra.mxu0 0
        %1475 = vmatprep.mubr.bf16.mxu0 0
        %1476 = vmatmul.mubr.bf16.gmra.mrb[0].mxu0 %v1437
        %v1477 = vpop.f32.mrb[0].mxu0
        %v1478 = vadd.f32 0.0, %v1477
        %v1479 = vpop.f32.mrb[0].mxu0
        %v1480 = vpop.f32.mrb[0].mxu0
        %v1481 = vpop.f32.mrb[0].mxu0
        %1482 = vdwg.mxu0
        %1484 = vrot.lane.b32.xlu0 %v1374, 120
        %v1485 = vpop.permute.xlu0 %1484
        %1487 = vrot.lane.b32.xlu0 %v1375, 120
        %v1488 = vpop.permute.xlu0 %1487
        %v1490 = vsel %vm1377, %v1485, 0
        %v1493 = vsel %vm1377, %v1488, 0
        %1495 = vmatprep.subr.bf16.mxu0 0
        %1496 = vmatpush1.bf16.xpose.msra.mxu0 %v1493
        %1497 = vmatprep.subr.bf16.mxu0 0
        %1498 = vmatpush1.bf16.xpose.msra.mxu0 0
        %1499 = vmatprep.subr.bf16.mxu0 0
        %1500 = vmatpush1.bf16.xpose.msra.mxu0 0
        %1501 = vmatprep.subr.bf16.mxu0 0
        %1502 = vmatpush1.bf16.xpose.msra.mxu0 0
        %1503 = vmatprep.subr.bf16.mxu0 0
        %1504 = vmatpush1.bf16.xpose.msra.mxu0 0
        %1505 = vmatprep.subr.bf16.mxu0 0
        %1506 = vmatpush1.bf16.xpose.msra.mxu0 0
        %1507 = vmatprep.subr.bf16.mxu0 0
        %1508 = vmatpush1.bf16.xpose.msra.mxu0 0
        %1509 = vmatprep.subr.bf16.mxu0 0
        %1510 = vmatpush1.bf16.xpose.msra.mxu0 0
        %1511 = vmatprep.subr.bf16.mxu0 0
        %1512 = vmatpush1.bf16.xpose.msra.mxu0 0
        %1513 = vmatprep.subr.bf16.mxu0 0
        %1514 = vmatpush1.bf16.xpose.msra.mxu0 0
        %1515 = vmatprep.subr.bf16.mxu0 0
        %1516 = vmatpush1.bf16.xpose.msra.mxu0 0
        %1517 = vmatprep.subr.bf16.mxu0 0
        %1518 = vmatpush1.bf16.xpose.msra.mxu0 0
        %1519 = vmatprep.subr.bf16.mxu0 0
        %1520 = vmatpush1.bf16.xpose.msra.mxu0 0
        %1521 = vmatprep.subr.bf16.mxu0 0
        %1522 = vmatpush1.bf16.xpose.msra.mxu0 0
        %1523 = vmatprep.subr.bf16.mxu0 0
        %1524 = vmatpush1.bf16.xpose.msra.mxu0 0
        %1525 = vmatprep.subr.bf16.mxu0 0
        %1526 = vmatpush1.bf16.xpose.msra.mxu0 0
        %1527 = vmatprep.mubr.bf16.mxu0 0
        %1528 = vmatmul.mubr.bf16.gmra.mrb[0].mxu0 %v1490
        %v1529 = vpop.f32.mrb[0].mxu0
        %v1530 = vadd.f32 %v1372, %v1529
        %v1531 = vpop.f32.mrb[0].mxu0
        %v1532 = vpop.f32.mrb[0].mxu0
        %v1533 = vpop.f32.mrb[0].mxu0
        %1534 = vdwg.mxu0
        %v1535 = vsel %vm1377, %v1530, -inf
        %1536 = vmax.xlane.f32.xlu0 %v1535
        %v1537 = vpop.xlane.xlu0 %1536
        %v1538 = vsub.f32 %v1530, %v1537
        %v1539 = vmul.f32 %v1538, 1.442695
        %v1540 = vpow.pop %v1539
        %v1541 = vsel %vm1377, %v1540, 0.0
        %1542 = vadd.xlane.f32.xlu0 %v1541
        %v1543 = vpop.xlane.xlu0 %1542
        %v1544 = vrcp.pop %v1543
        %v1545 = vmul.f32 %v1540, %v1544
        %v1546 = vpack.c.bf16 %v1545, %v1545
        %1548 = vrot.lane.b32.xlu0 %v1376, 120
        %v1549 = vpop.permute.xlu0 %1548
        %v1551 = vsel %vm1377, %v1546, 0
        %v1554 = vsel %vm1439, %v1549, 0
        %1556 = vmatprep.subr.bf16.mxu0 0
        %1557 = vmatpush1.bf16.msra.mxu0 %v1554
        %1558 = vmatprep.subr.bf16.mxu0 0
        %1559 = vmatpush1.bf16.msra.mxu0 0
        %1560 = vmatprep.subr.bf16.mxu0 0
        %1561 = vmatpush1.bf16.msra.mxu0 0
        %1562 = vmatprep.subr.bf16.mxu0 0
        %1563 = vmatpush1.bf16.msra.mxu0 0
        %1564 = vmatprep.subr.bf16.mxu0 0
        %1565 = vmatpush1.bf16.msra.mxu0 0
        %1566 = vmatprep.subr.bf16.mxu0 0
        %1567 = vmatpush1.bf16.msra.mxu0 0
        %1568 = vmatprep.subr.bf16.mxu0 0
        %1569 = vmatpush1.bf16.msra.mxu0 0
        %1570 = vmatprep.subr.bf16.mxu0 0
        %1571 = vmatpush1.bf16.msra.mxu0 0
        %1572 = vmatprep.subr.bf16.mxu0 0
        %1573 = vmatpush1.bf16.msra.mxu0 0
        %1574 = vmatprep.subr.bf16.mxu0 0
        %1575 = vmatpush1.bf16.msra.mxu0 0
        %1576 = vmatprep.subr.bf16.mxu0 0
        %1577 = vmatpush1.bf16.msra.mxu0 0
        %1578 = vmatprep.subr.bf16.mxu0 0
        %1579 = vmatpush1.bf16.msra.mxu0 0
        %1580 = vmatprep.subr.bf16.mxu0 0
        %1581 = vmatpush1.bf16.msra.mxu0 0
        %1582 = vmatprep.subr.bf16.mxu0 0
        %1583 = vmatpush1.bf16.msra.mxu0 0
        %1584 = vmatprep.subr.bf16.mxu0 0
        %1585 = vmatpush1.bf16.msra.mxu0 0
        %1586 = vmatprep.subr.bf16.mxu0 0
        %1587 = vmatpush1.bf16.msra.mxu0 0
        %1588 = vmatprep.mubr.bf16.mxu0 0
        %1589 = vmatmul.mubr.bf16.gmra.mrb[0].mxu0 %v1551
        %v1590 = vpop.f32.mrb[0].mxu0
        %v1591 = vadd.f32 0.0, %v1590
        %v1592 = vpop.f32.mrb[0].mxu0
        %v1593 = vpop.f32.mrb[0].mxu0
        %v1594 = vpop.f32.mrb[0].mxu0
        %1595 = vdwg.mxu0
        %1596 = vrot.lane.b32.xlu0 %v1374, 112
        %v1597 = vpop.permute.xlu0 %1596
        %1598 = vrot.lane.b32.xlu0 %v1375, 112
        %v1599 = vpop.permute.xlu0 %1598
        %v1601 = vsel %vm1377, %v1597, 0
        %v1604 = vsel %vm1377, %v1599, 0
        %1606 = vmatprep.subr.bf16.mxu0 0
        %1607 = vmatpush1.bf16.xpose.msra.mxu0 %v1604
        %1608 = vmatprep.subr.bf16.mxu0 0
        %1609 = vmatpush1.bf16.xpose.msra.mxu0 0
        %1610 = vmatprep.subr.bf16.mxu0 0
        %1611 = vmatpush1.bf16.xpose.msra.mxu0 0
        %1612 = vmatprep.subr.bf16.mxu0 0
        %1613 = vmatpush1.bf16.xpose.msra.mxu0 0
        %1614 = vmatprep.subr.bf16.mxu0 0
        %1615 = vmatpush1.bf16.xpose.msra.mxu0 0
        %1616 = vmatprep.subr.bf16.mxu0 0
        %1617 = vmatpush1.bf16.xpose.msra.mxu0 0
        %1618 = vmatprep.subr.bf16.mxu0 0
        %1619 = vmatpush1.bf16.xpose.msra.mxu0 0
        %1620 = vmatprep.subr.bf16.mxu0 0
        %1621 = vmatpush1.bf16.xpose.msra.mxu0 0
        %1622 = vmatprep.subr.bf16.mxu0 0
        %1623 = vmatpush1.bf16.xpose.msra.mxu0 0
        %1624 = vmatprep.subr.bf16.mxu0 0
        %1625 = vmatpush1.bf16.xpose.msra.mxu0 0
        %1626 = vmatprep.subr.bf16.mxu0 0
        %1627 = vmatpush1.bf16.xpose.msra.mxu0 0
        %1628 = vmatprep.subr.bf16.mxu0 0
        %1629 = vmatpush1.bf16.xpose.msra.mxu0 0
        %1630 = vmatprep.subr.bf16.mxu0 0
        %1631 = vmatpush1.bf16.xpose.msra.mxu0 0
        %1632 = vmatprep.subr.bf16.mxu0 0
        %1633 = vmatpush1.bf16.xpose.msra.mxu0 0
        %1634 = vmatprep.subr.bf16.mxu0 0
        %1635 = vmatpush1.bf16.xpose.msra.mxu0 0
        %1636 = vmatprep.subr.bf16.mxu0 0
        %1637 = vmatpush1.bf16.xpose.msra.mxu0 0
        %1638 = vmatprep.mubr.bf16.mxu0 0
        %1639 = vmatmul.mubr.bf16.gmra.mrb[0].mxu0 %v1601
        %v1640 = vpop.f32.mrb[0].mxu0
        %v1641 = vadd.f32 %v1372, %v1640
        %v1642 = vpop.f32.mrb[0].mxu0
        %v1643 = vpop.f32.mrb[0].mxu0
        %v1644 = vpop.f32.mrb[0].mxu0
        %1645 = vdwg.mxu0
        %v1646 = vsel %vm1377, %v1641, -inf
        %1647 = vmax.xlane.f32.xlu0 %v1646
        %v1648 = vpop.xlane.xlu0 %1647
        %v1649 = vsub.f32 %v1641, %v1648
        %v1650 = vmul.f32 %v1649, 1.442695
        %v1651 = vpow.pop %v1650
        %v1652 = vsel %vm1377, %v1651, 0.0
        %1653 = vadd.xlane.f32.xlu0 %v1652
        %v1654 = vpop.xlane.xlu0 %1653
        %v1655 = vrcp.pop %v1654
        %v1656 = vmul.f32 %v1651, %v1655
        %v1657 = vpack.c.bf16 %v1656, %v1656
        %1658 = vrot.lane.b32.xlu0 %v1376, 112
        %v1659 = vpop.permute.xlu0 %1658
        %v1661 = vsel %vm1377, %v1657, 0
        %v1664 = vsel %vm1439, %v1659, 0
        %1666 = vmatprep.subr.bf16.mxu0 0
        %1667 = vmatpush1.bf16.msra.mxu0 %v1664
        %1668 = vmatprep.subr.bf16.mxu0 0
        %1669 = vmatpush1.bf16.msra.mxu0 0
        %1670 = vmatprep.subr.bf16.mxu0 0
        %1671 = vmatpush1.bf16.msra.mxu0 0
        %1672 = vmatprep.subr.bf16.mxu0 0
        %1673 = vmatpush1.bf16.msra.mxu0 0
        %1674 = vmatprep.subr.bf16.mxu0 0
        %1675 = vmatpush1.bf16.msra.mxu0 0
        %1676 = vmatprep.subr.bf16.mxu0 0
        %1677 = vmatpush1.bf16.msra.mxu0 0
        %1678 = vmatprep.subr.bf16.mxu0 0
        %1679 = vmatpush1.bf16.msra.mxu0 0
        %1680 = vmatprep.subr.bf16.mxu0 0
        %1681 = vmatpush1.bf16.msra.mxu0 0
        %1682 = vmatprep.subr.bf16.mxu0 0
        %1683 = vmatpush1.bf16.msra.mxu0 0
        %1684 = vmatprep.subr.bf16.mxu0 0
        %1685 = vmatpush1.bf16.msra.mxu0 0
        %1686 = vmatprep.subr.bf16.mxu0 0
        %1687 = vmatpush1.bf16.msra.mxu0 0
        %1688 = vmatprep.subr.bf16.mxu0 0
        %1689 = vmatpush1.bf16.msra.mxu0 0
        %1690 = vmatprep.subr.bf16.mxu0 0
        %1691 = vmatpush1.bf16.msra.mxu0 0
        %1692 = vmatprep.subr.bf16.mxu0 0
        %1693 = vmatpush1.bf16.msra.mxu0 0
        %1694 = vmatprep.subr.bf16.mxu0 0
        %1695 = vmatpush1.bf16.msra.mxu0 0
        %1696 = vmatprep.subr.bf16.mxu0 0
        %1697 = vmatpush1.bf16.msra.mxu0 0
        %1698 = vmatprep.mubr.bf16.mxu0 0
        %1699 = vmatmul.mubr.bf16.gmra.mrb[0].mxu0 %v1661
        %v1700 = vpop.f32.mrb[0].mxu0
        %v1701 = vadd.f32 0.0, %v1700
        %v1702 = vpop.f32.mrb[0].mxu0
        %v1703 = vpop.f32.mrb[0].mxu0
        %v1704 = vpop.f32.mrb[0].mxu0
        %1705 = vdwg.mxu0
        %1706 = vrot.lane.b32.xlu0 %v1374, 104
        %v1707 = vpop.permute.xlu0 %1706
        %1708 = vrot.lane.b32.xlu0 %v1375, 104
        %v1709 = vpop.permute.xlu0 %1708
        %v1711 = vsel %vm1377, %v1707, 0
        %v1714 = vsel %vm1377, %v1709, 0
        %1716 = vmatprep.subr.bf16.mxu0 0
        %1717 = vmatpush1.bf16.xpose.msra.mxu0 %v1714
        %1718 = vmatprep.subr.bf16.mxu0 0
        %1719 = vmatpush1.bf16.xpose.msra.mxu0 0
        %1720 = vmatprep.subr.bf16.mxu0 0
        %1721 = vmatpush1.bf16.xpose.msra.mxu0 0
        %1722 = vmatprep.subr.bf16.mxu0 0
        %1723 = vmatpush1.bf16.xpose.msra.mxu0 0
        %1724 = vmatprep.subr.bf16.mxu0 0
        %1725 = vmatpush1.bf16.xpose.msra.mxu0 0
        %1726 = vmatprep.subr.bf16.mxu0 0
        %1727 = vmatpush1.bf16.xpose.msra.mxu0 0
        %1728 = vmatprep.subr.bf16.mxu0 0
        %1729 = vmatpush1.bf16.xpose.msra.mxu0 0
        %1730 = vmatprep.subr.bf16.mxu0 0
        %1731 = vmatpush1.bf16.xpose.msra.mxu0 0
        %1732 = vmatprep.subr.bf16.mxu0 0
        %1733 = vmatpush1.bf16.xpose.msra.mxu0 0
        %1734 = vmatprep.subr.bf16.mxu0 0
        %1735 = vmatpush1.bf16.xpose.msra.mxu0 0
        %1736 = vmatprep.subr.bf16.mxu0 0
        %1737 = vmatpush1.bf16.xpose.msra.mxu0 0
        %1738 = vmatprep.subr.bf16.mxu0 0
        %1739 = vmatpush1.bf16.xpose.msra.mxu0 0
        %1740 = vmatprep.subr.bf16.mxu0 0
        %1741 = vmatpush1.bf16.xpose.msra.mxu0 0
        %1742 = vmatprep.subr.bf16.mxu0 0
        %1743 = vmatpush1.bf16.xpose.msra.mxu0 0
        %1744 = vmatprep.subr.bf16.mxu0 0
        %1745 = vmatpush1.bf16.xpose.msra.mxu0 0
        %1746 = vmatprep.subr.bf16.mxu0 0
        %1747 = vmatpush1.bf16.xpose.msra.mxu0 0
        %1748 = vmatprep.mubr.bf16.mxu0 0
        %1749 = vmatmul.mubr.bf16.gmra.mrb[0].mxu0 %v1711
        %v1750 = vpop.f32.mrb[0].mxu0
        %v1751 = vadd.f32 %v1372, %v1750
        %v1752 = vpop.f32.mrb[0].mxu0
        %v1753 = vpop.f32.mrb[0].mxu0
        %v1754 = vpop.f32.mrb[0].mxu0
        %1755 = vdwg.mxu0
        %v1756 = vsel %vm1377, %v1751, -inf
        %1757 = vmax.xlane.f32.xlu0 %v1756
        %v1758 = vpop.xlane.xlu0 %1757
        %v1759 = vsub.f32 %v1751, %v1758
        %v1760 = vmul.f32 %v1759, 1.442695
        %v1761 = vpow.pop %v1760
        %v1762 = vsel %vm1377, %v1761, 0.0
        %1763 = vadd.xlane.f32.xlu0 %v1762
        %v1764 = vpop.xlane.xlu0 %1763
        %v1765 = vrcp.pop %v1764
        %v1766 = vmul.f32 %v1761, %v1765
        %v1767 = vpack.c.bf16 %v1766, %v1766
        %1768 = vrot.lane.b32.xlu0 %v1376, 104
        %v1769 = vpop.permute.xlu0 %1768
        %v1771 = vsel %vm1377, %v1767, 0
        %v1774 = vsel %vm1439, %v1769, 0
        %1776 = vmatprep.subr.bf16.mxu0 0
        %1777 = vmatpush1.bf16.msra.mxu0 %v1774
        %1778 = vmatprep.subr.bf16.mxu0 0
        %1779 = vmatpush1.bf16.msra.mxu0 0
        %1780 = vmatprep.subr.bf16.mxu0 0
        %1781 = vmatpush1.bf16.msra.mxu0 0
        %1782 = vmatprep.subr.bf16.mxu0 0
        %1783 = vmatpush1.bf16.msra.mxu0 0
        %1784 = vmatprep.subr.bf16.mxu0 0
        %1785 = vmatpush1.bf16.msra.mxu0 0
        %1786 = vmatprep.subr.bf16.mxu0 0
        %1787 = vmatpush1.bf16.msra.mxu0 0
        %1788 = vmatprep.subr.bf16.mxu0 0
        %1789 = vmatpush1.bf16.msra.mxu0 0
        %1790 = vmatprep.subr.bf16.mxu0 0
        %1791 = vmatpush1.bf16.msra.mxu0 0
        %1792 = vmatprep.subr.bf16.mxu0 0
        %1793 = vmatpush1.bf16.msra.mxu0 0
        %1794 = vmatprep.subr.bf16.mxu0 0
        %1795 = vmatpush1.bf16.msra.mxu0 0
        %1796 = vmatprep.subr.bf16.mxu0 0
        %1797 = vmatpush1.bf16.msra.mxu0 0
        %1798 = vmatprep.subr.bf16.mxu0 0
        %1799 = vmatpush1.bf16.msra.mxu0 0
        %1800 = vmatprep.subr.bf16.mxu0 0
        %1801 = vmatpush1.bf16.msra.mxu0 0
        %1802 = vmatprep.subr.bf16.mxu0 0
        %1803 = vmatpush1.bf16.msra.mxu0 0
        %1804 = vmatprep.subr.bf16.mxu0 0
        %1805 = vmatpush1.bf16.msra.mxu0 0
        %1806 = vmatprep.subr.bf16.mxu0 0
        %1807 = vmatpush1.bf16.msra.mxu0 0
        %1808 = vmatprep.mubr.bf16.mxu0 0
        %1809 = vmatmul.mubr.bf16.gmra.mrb[0].mxu0 %v1771
        %v1810 = vpop.f32.mrb[0].mxu0
        %v1811 = vadd.f32 0.0, %v1810
        %v1812 = vpop.f32.mrb[0].mxu0
        %v1813 = vpop.f32.mrb[0].mxu0
        %v1814 = vpop.f32.mrb[0].mxu0
        %1815 = vdwg.mxu0
        %1817 = vrot.lane.b32.xlu0 %v1591, 8
        %v1818 = vpop.permute.xlu0 %1817
        %1821 = vrot.lane.b32.xlu0 %v1701, 16
        %v1822 = vpop.permute.xlu0 %1821
        %1825 = vrot.lane.b32.xlu0 %v1811, 24
        %v1826 = vpop.permute.xlu0 %1825
        %v1828 = vsel %vm1377, %v1478, %v1818
        %vm1829 = vcmask 130048
        %v1830 = vsel %vm1829, %v1828, %v1822
        %vm1831 = vcmask 195584
        %v1832 = vsel %vm1831, %v1830, %v1826
        %v1833 = vpack.c.bf16 %v1832, %v1832
        %v1835 = vlaneseq
        %v1836 = vshrl.u32 %v1835, 7
        %v1837 = vsub.s32 0, %v1836
        %v1838 = vrot.slane %v1181, %v1837
        %v1844 = vunpack.c.l.b16 %v1177
        %v1845 = vunpack.c.l.b16 %v1178
        %v1846 = vunpack.c.l.b16 %v1179
        %v1847 = vunpack.c.l.b16 %v1180
        %v1848 = vpack.c.b16 %v1845, %v1844
        %v1849 = vpack.c.b16 %v1847, %v1846
        %v1853 = vsel %vm1202, %v1833, 0
        %1855 = vmatprep.subr.bf16.mxu0 0
        %1856 = vmatpush1.bf16.msra.mxu0 %v1848
        %1857 = vmatprep.subr.bf16.mxu0 0
        %1858 = vmatpush1.bf16.msra.mxu0 %v1849
        %1859 = vmatprep.subr.bf16.mxu0 0
        %1860 = vmatpush1.bf16.msra.mxu0 0
        %1861 = vmatprep.subr.bf16.mxu0 0
        %1862 = vmatpush1.bf16.msra.mxu0 0
        %1863 = vmatprep.subr.bf16.mxu0 0
        %1864 = vmatpush1.bf16.msra.mxu0 0
        %1865 = vmatprep.subr.bf16.mxu0 0
        %1866 = vmatpush1.bf16.msra.mxu0 0
        %1867 = vmatprep.subr.bf16.mxu0 0
        %1868 = vmatpush1.bf16.msra.mxu0 0
        %1869 = vmatprep.subr.bf16.mxu0 0
        %1870 = vmatpush1.bf16.msra.mxu0 0
        %1871 = vmatprep.subr.bf16.mxu0 0
        %1872 = vmatpush1.bf16.msra.mxu0 0
        %1873 = vmatprep.subr.bf16.mxu0 0
        %1874 = vmatpush1.bf16.msra.mxu0 0
        %1875 = vmatprep.subr.bf16.mxu0 0
        %1876 = vmatpush1.bf16.msra.mxu0 0
        %1877 = vmatprep.subr.bf16.mxu0 0
        %1878 = vmatpush1.bf16.msra.mxu0 0
        %1879 = vmatprep.subr.bf16.mxu0 0
        %1880 = vmatpush1.bf16.msra.mxu0 0
        %1881 = vmatprep.subr.bf16.mxu0 0
        %1882 = vmatpush1.bf16.msra.mxu0 0
        %1883 = vmatprep.subr.bf16.mxu0 0
        %1884 = vmatpush1.bf16.msra.mxu0 0
        %1885 = vmatprep.subr.bf16.mxu0 0
        %1886 = vmatpush1.bf16.msra.mxu0 0
        %1887 = vmatprep.mubr.bf16.mxu0 0
        %1888 = vmatmul.mubr.bf16.gmra.mrb[0].mxu0 %v1853
        %v1889 = vpop.f32.mrb[0].mxu0
        %v1890 = vadd.f32 %v1838, %v1889
        %v1891 = vpop.f32.mrb[0].mxu0
        %v1892 = vpop.f32.mrb[0].mxu0
        %v1893 = vpop.f32.mrb[0].mxu0
        %1894 = vdwg.mxu0
        %v1895 = vadd.f32 %v1890, %v1157
        %v1896 = vld [vmem:[%s43] sm:$0x1]
        %v1897 = vld [vmem:[#allocation20] sm:$0x1]
        %v1898 = vsel %vm1202, %v1895, 0.0
        %1899 = vadd.xlane.f32.xlu0 %v1898
        %v1900 = vpop.xlane.xlu0 %1899
        %v1901 = vrcp.pop 32.0
        %v1902 = vmul.f32 %v1900, %v1901
        %v1903 = vsub.f32 %v1895, %v1902
        %v1904 = vmul.f32 %v1903, %v1903
        %v1905 = vsel %vm1202, %v1904, 0.0
        %1906 = vadd.xlane.f32.xlu0 %v1905
        %v1907 = vpop.xlane.xlu0 %1906
        %v1908 = vmul.f32 %v1907, %v1901
        %v1909 = vadd.f32 %v1908, 1e-05
        %v1910 = vrsqrt.pop %v1909
        %v1911 = vmul.f32 %v1903, %v1910
        %v1913 = vlaneseq
        %v1914 = vshrl.u32 %v1913, 7
        %v1915 = vsub.s32 0, %v1914
        %v1916 = vrot.slane %v1896, %v1915
        %v1918 = vmul.f32 %v1911, %v1916
        %v1920 = vlaneseq
        %v1921 = vshrl.u32 %v1920, 7
        %v1922 = vsub.s32 0, %v1921
        %v1923 = vrot.slane %v1897, %v1922
        %v1925 = vadd.f32 %v1918, %v1923
        %v1926 = vld [vmem:[%s27] sm:$0xf]
        %v1927 = vld [vmem:[%s27 + $0x4] sm:$0xf]
        %v1928 = vld [vmem:[%s27 + $0x8] sm:$0xf]
        %v1929 = vld [vmem:[%s27 + $0xc] sm:$0xf]
        %v1930 = vld [vmem:[#allocation14] sm:$0x1]
        %v1931 = vld [vmem:[#allocation16] sm:$0xf]
        %v1932 = vld [vmem:[#allocation16 + $0x4] sm:$0xf]
        %v1933 = vld [vmem:[#allocation16 + $0x8] sm:$0xf]
        %v1934 = vld [vmem:[#allocation16 + $0xc] sm:$0xf]
        %v1935 = vld [vmem:[#allocation17] sm:$0x1]
        %v1936 = vld [vmem:[%s35] sm:$0xf]
        %v1937 = vld [vmem:[%s35 + $0x4] sm:$0xf]
        %v1938 = vld [vmem:[%s35 + $0x8] sm:$0xf]
        %v1939 = vld [vmem:[%s35 + $0xc] sm:$0xf]
        %v1940 = vld [vmem:[%s37] sm:$0x1]
        %v1941 = vld [vmem:[#allocation19] sm:$0xf]
        %v1942 = vld [vmem:[#allocation19 + $0x4] sm:$0xf]
        %v1943 = vld [vmem:[#allocation19 + $0x8] sm:$0xf]
        %v1944 = vld [vmem:[#allocation19 + $0xc] sm:$0xf]
        %v1945 = vld [vmem:[%s41] sm:$0x1]
        %v1946 = vpack.c.bf16 %v1925, %v1925
        %v1947 = vpack.c.bf16 %v1159, %v1159
        %v1949 = vlaneseq
        %v1950 = vshrl.u32 %v1949, 7
        %v1951 = vsub.s32 0, %v1950
        %v1952 = vrot.slane %v1930, %v1951
        %v1958 = vunpack.c.l.b16 %v1926
        %v1959 = vunpack.c.l.b16 %v1927
        %v1960 = vunpack.c.l.b16 %v1928
        %v1961 = vunpack.c.l.b16 %v1929
        %v1962 = vpack.c.b16 %v1959, %v1958
        %v1963 = vpack.c.b16 %v1961, %v1960
        %v1967 = vsel %vm1202, %v1947, 0
        %1969 = vmatprep.subr.bf16.mxu0 0
        %1970 = vmatpush1.bf16.msra.mxu0 %v1962
        %1971 = vmatprep.subr.bf16.mxu0 0
        %1972 = vmatpush1.bf16.msra.mxu0 %v1963
        %1973 = vmatprep.subr.bf16.mxu0 0
        %1974 = vmatpush1.bf16.msra.mxu0 0
        %1975 = vmatprep.subr.bf16.mxu0 0
        %1976 = vmatpush1.bf16.msra.mxu0 0
        %1977 = vmatprep.subr.bf16.mxu0 0
        %1978 = vmatpush1.bf16.msra.mxu0 0
        %1979 = vmatprep.subr.bf16.mxu0 0
        %1980 = vmatpush1.bf16.msra.mxu0 0
        %1981 = vmatprep.subr.bf16.mxu0 0
        %1982 = vmatpush1.bf16.msra.mxu0 0
        %1983 = vmatprep.subr.bf16.mxu0 0
        %1984 = vmatpush1.bf16.msra.mxu0 0
        %1985 = vmatprep.subr.bf16.mxu0 0
        %1986 = vmatpush1.bf16.msra.mxu0 0
        %1987 = vmatprep.subr.bf16.mxu0 0
        %1988 = vmatpush1.bf16.msra.mxu0 0
        %1989 = vmatprep.subr.bf16.mxu0 0
        %1990 = vmatpush1.bf16.msra.mxu0 0
        %1991 = vmatprep.subr.bf16.mxu0 0
        %1992 = vmatpush1.bf16.msra.mxu0 0
        %1993 = vmatprep.subr.bf16.mxu0 0
        %1994 = vmatpush1.bf16.msra.mxu0 0
        %1995 = vmatprep.subr.bf16.mxu0 0
        %1996 = vmatpush1.bf16.msra.mxu0 0
        %1997 = vmatprep.subr.bf16.mxu0 0
        %1998 = vmatpush1.bf16.msra.mxu0 0
        %1999 = vmatprep.subr.bf16.mxu0 0
        %2000 = vmatpush1.bf16.msra.mxu0 0
        %2001 = vmatprep.mubr.bf16.mxu0 0
        %2002 = vmatmul.mubr.bf16.gmra.mrb[0].mxu0 %v1967
        %v2003 = vpop.f32.mrb[0].mxu0
        %v2004 = vadd.f32 %v1952, %v2003
        %v2005 = vpop.f32.mrb[0].mxu0
        %v2006 = vpop.f32.mrb[0].mxu0
        %v2007 = vpop.f32.mrb[0].mxu0
        %2008 = vdwg.mxu0
        %v2010 = vlaneseq
        %v2011 = vshrl.u32 %v2010, 7
        %v2012 = vsub.s32 0, %v2011
        %v2013 = vrot.slane %v1935, %v2012
        %v2019 = vunpack.c.l.b16 %v1931
        %v2020 = vunpack.c.l.b16 %v1932
        %v2021 = vunpack.c.l.b16 %v1933
        %v2022 = vunpack.c.l.b16 %v1934
        %v2023 = vpack.c.b16 %v2020, %v2019
        %v2024 = vpack.c.b16 %v2022, %v2021
        %2027 = vmatprep.subr.bf16.mxu0 0
        %2028 = vmatpush1.bf16.msra.mxu0 %v2023
        %2029 = vmatprep.subr.bf16.mxu0 0
        %2030 = vmatpush1.bf16.msra.mxu0 %v2024
        %2031 = vmatprep.subr.bf16.mxu0 0
        %2032 = vmatpush1.bf16.msra.mxu0 0
        %2033 = vmatprep.subr.bf16.mxu0 0
        %2034 = vmatpush1.bf16.msra.mxu0 0
        %2035 = vmatprep.subr.bf16.mxu0 0
        %2036 = vmatpush1.bf16.msra.mxu0 0
        %2037 = vmatprep.subr.bf16.mxu0 0
        %2038 = vmatpush1.bf16.msra.mxu0 0
        %2039 = vmatprep.subr.bf16.mxu0 0
        %2040 = vmatpush1.bf16.msra.mxu0 0
        %2041 = vmatprep.subr.bf16.mxu0 0
        %2042 = vmatpush1.bf16.msra.mxu0 0
        %2043 = vmatprep.subr.bf16.mxu0 0
        %2044 = vmatpush1.bf16.msra.mxu0 0
        %2045 = vmatprep.subr.bf16.mxu0 0
        %2046 = vmatpush1.bf16.msra.mxu0 0
        %2047 = vmatprep.subr.bf16.mxu0 0
        %2048 = vmatpush1.bf16.msra.mxu0 0
        %2049 = vmatprep.subr.bf16.mxu0 0
        %2050 = vmatpush1.bf16.msra.mxu0 0
        %2051 = vmatprep.subr.bf16.mxu0 0
        %2052 = vmatpush1.bf16.msra.mxu0 0
        %2053 = vmatprep.subr.bf16.mxu0 0
        %2054 = vmatpush1.bf16.msra.mxu0 0
        %2055 = vmatprep.subr.bf16.mxu0 0
        %2056 = vmatpush1.bf16.msra.mxu0 0
        %2057 = vmatprep.subr.bf16.mxu0 0
        %2058 = vmatpush1.bf16.msra.mxu0 0
        %2059 = vmatprep.mubr.bf16.mxu0 0
        %2060 = vmatmul.mubr.bf16.gmra.mrb[0].mxu0 %v1967
        %v2061 = vpop.f32.mrb[0].mxu0
        %v2062 = vadd.f32 %v2013, %v2061
        %v2063 = vpop.f32.mrb[0].mxu0
        %v2064 = vpop.f32.mrb[0].mxu0
        %v2065 = vpop.f32.mrb[0].mxu0
        %2066 = vdwg.mxu0
        %v2068 = vlaneseq
        %v2069 = vshrl.u32 %v2068, 7
        %v2070 = vsub.s32 0, %v2069
        %v2071 = vrot.slane %v1940, %v2070
        %v2077 = vunpack.c.l.b16 %v1936
        %v2078 = vunpack.c.l.b16 %v1937
        %v2079 = vunpack.c.l.b16 %v1938
        %v2080 = vunpack.c.l.b16 %v1939
        %v2081 = vpack.c.b16 %v2078, %v2077
        %v2082 = vpack.c.b16 %v2080, %v2079
        %v2086 = vsel %vm1202, %v1946, 0
        %2088 = vmatprep.subr.bf16.mxu0 0
        %2089 = vmatpush1.bf16.msra.mxu0 %v2081
        %2090 = vmatprep.subr.bf16.mxu0 0
        %2091 = vmatpush1.bf16.msra.mxu0 %v2082
        %2092 = vmatprep.subr.bf16.mxu0 0
        %2093 = vmatpush1.bf16.msra.mxu0 0
        %2094 = vmatprep.subr.bf16.mxu0 0
        %2095 = vmatpush1.bf16.msra.mxu0 0
        %2096 = vmatprep.subr.bf16.mxu0 0
        %2097 = vmatpush1.bf16.msra.mxu0 0
        %2098 = vmatprep.subr.bf16.mxu0 0
        %2099 = vmatpush1.bf16.msra.mxu0 0
        %2100 = vmatprep.subr.bf16.mxu0 0
        %2101 = vmatpush1.bf16.msra.mxu0 0
        %2102 = vmatprep.subr.bf16.mxu0 0
        %2103 = vmatpush1.bf16.msra.mxu0 0
        %2104 = vmatprep.subr.bf16.mxu0 0
        %2105 = vmatpush1.bf16.msra.mxu0 0
        %2106 = vmatprep.subr.bf16.mxu0 0
        %2107 = vmatpush1.bf16.msra.mxu0 0
        %2108 = vmatprep.subr.bf16.mxu0 0
        %2109 = vmatpush1.bf16.msra.mxu0 0
        %2110 = vmatprep.subr.bf16.mxu0 0
        %2111 = vmatpush1.bf16.msra.mxu0 0
        %2112 = vmatprep.subr.bf16.mxu0 0
        %2113 = vmatpush1.bf16.msra.mxu0 0
        %2114 = vmatprep.subr.bf16.mxu0 0
        %2115 = vmatpush1.bf16.msra.mxu0 0
        %2116 = vmatprep.subr.bf16.mxu0 0
        %2117 = vmatpush1.bf16.msra.mxu0 0
        %2118 = vmatprep.subr.bf16.mxu0 0
        %2119 = vmatpush1.bf16.msra.mxu0 0
        %2120 = vmatprep.mubr.bf16.mxu0 0
        %2121 = vmatmul.mubr.bf16.gmra.mrb[0].mxu0 %v2086
        %v2122 = vpop.f32.mrb[0].mxu0
        %v2123 = vadd.f32 %v2071, %v2122
        %v2124 = vpop.f32.mrb[0].mxu0
        %v2125 = vpop.f32.mrb[0].mxu0
        %v2126 = vpop.f32.mrb[0].mxu0
        %2127 = vdwg.mxu0
        %v2128 = vmul.f32 %v2123, 0.35355338
        %vm2129 = vcmp.gt.f32.partialorder %v1161, 0.0
        %v2130 = vsel %vm2129, 0.0, -1e+30
        %v2132 = vlaneseq
        %v2133 = vshrl.u32 %v2132, 7
        %v2134 = vsub.s32 0, %v2133
        %v2135 = vrot.slane %v2130, %v2134
        %v2137 = vpack.c.bf16 %v2128, %v2128
        %v2138 = vpack.c.bf16 %v2004, %v2004
        %v2139 = vpack.c.bf16 %v2062, %v2062
        %v2141 = vsel %vm1377, %v2137, 0
        %v2144 = vsel %vm1377, %v2138, 0
        %2146 = vmatprep.subr.bf16.mxu0 0
        %2147 = vmatpush1.bf16.xpose.msra.mxu0 %v2144
        %2148 = vmatprep.subr.bf16.mxu0 0
        %2149 = vmatpush1.bf16.xpose.msra.mxu0 0
        %2150 = vmatprep.subr.bf16.mxu0 0
        %2151 = vmatpush1.bf16.xpose.msra.mxu0 0
        %2152 = vmatprep.subr.bf16.mxu0 0
        %2153 = vmatpush1.bf16.xpose.msra.mxu0 0
        %2154 = vmatprep.subr.bf16.mxu0 0
        %2155 = vmatpush1.bf16.xpose.msra.mxu0 0
        %2156 = vmatprep.subr.bf16.mxu0 0
        %2157 = vmatpush1.bf16.xpose.msra.mxu0 0
        %2158 = vmatprep.subr.bf16.mxu0 0
        %2159 = vmatpush1.bf16.xpose.msra.mxu0 0
        %2160 = vmatprep.subr.bf16.mxu0 0
        %2161 = vmatpush1.bf16.xpose.msra.mxu0 0
        %2162 = vmatprep.subr.bf16.mxu0 0
        %2163 = vmatpush1.bf16.xpose.msra.mxu0 0
        %2164 = vmatprep.subr.bf16.mxu0 0
        %2165 = vmatpush1.bf16.xpose.msra.mxu0 0
        %2166 = vmatprep.subr.bf16.mxu0 0
        %2167 = vmatpush1.bf16.xpose.msra.mxu0 0
        %2168 = vmatprep.subr.bf16.mxu0 0
        %2169 = vmatpush1.bf16.xpose.msra.mxu0 0
        %2170 = vmatprep.subr.bf16.mxu0 0
        %2171 = vmatpush1.bf16.xpose.msra.mxu0 0
        %2172 = vmatprep.subr.bf16.mxu0 0
        %2173 = vmatpush1.bf16.xpose.msra.mxu0 0
        %2174 = vmatprep.subr.bf16.mxu0 0
        %2175 = vmatpush1.bf16.xpose.msra.mxu0 0
        %2176 = vmatprep.subr.bf16.mxu0 0
        %2177 = vmatpush1.bf16.xpose.msra.mxu0 0
        %2178 = vmatprep.mubr.bf16.mxu0 0
        %2179 = vmatmul.mubr.bf16.gmra.mrb[0].mxu0 %v2141
        %v2180 = vpop.f32.mrb[0].mxu0
        %v2181 = vadd.f32 %v2135, %v2180
        %v2182 = vpop.f32.mrb[0].mxu0
        %v2183 = vpop.f32.mrb[0].mxu0
        %v2184 = vpop.f32.mrb[0].mxu0
        %2185 = vdwg.mxu0
        %v2186 = vsel %vm1377, %v2181, -inf
        %2187 = vmax.xlane.f32.xlu0 %v2186
        %v2188 = vpop.xlane.xlu0 %2187
        %v2189 = vsub.f32 %v2181, %v2188
        %v2190 = vmul.f32 %v2189, 1.442695
        %v2191 = vpow.pop %v2190
        %v2192 = vsel %vm1377, %v2191, 0.0
        %2193 = vadd.xlane.f32.xlu0 %v2192
        %v2194 = vpop.xlane.xlu0 %2193
        %v2195 = vrcp.pop %v2194
        %v2196 = vmul.f32 %v2191, %v2195
        %v2197 = vpack.c.bf16 %v2196, %v2196
        %v2199 = vsel %vm1377, %v2197, 0
        %v2202 = vsel %vm1439, %v2139, 0
        %2204 = vmatprep.subr.bf16.mxu0 0
        %2205 = vmatpush1.bf16.msra.mxu0 %v2202
        %2206 = vmatprep.subr.bf16.mxu0 0
        %2207 = vmatpush1.bf16.msra.mxu0 0
        %2208 = vmatprep.subr.bf16.mxu0 0
        %2209 = vmatpush1.bf16.msra.mxu0 0
        %2210 = vmatprep.subr.bf16.mxu0 0
        %2211 = vmatpush1.bf16.msra.mxu0 0
        %2212 = vmatprep.subr.bf16.mxu0 0
        %2213 = vmatpush1.bf16.msra.mxu0 0
        %2214 = vmatprep.subr.bf16.mxu0 0
        %2215 = vmatpush1.bf16.msra.mxu0 0
        %2216 = vmatprep.subr.bf16.mxu0 0
        %2217 = vmatpush1.bf16.msra.mxu0 0
        %2218 = vmatprep.subr.bf16.mxu0 0
        %2219 = vmatpush1.bf16.msra.mxu0 0
        %2220 = vmatprep.subr.bf16.mxu0 0
        %2221 = vmatpush1.bf16.msra.mxu0 0
        %2222 = vmatprep.subr.bf16.mxu0 0
        %2223 = vmatpush1.bf16.msra.mxu0 0
        %2224 = vmatprep.subr.bf16.mxu0 0
        %2225 = vmatpush1.bf16.msra.mxu0 0
        %2226 = vmatprep.subr.bf16.mxu0 0
        %2227 = vmatpush1.bf16.msra.mxu0 0
        %2228 = vmatprep.subr.bf16.mxu0 0
        %2229 = vmatpush1.bf16.msra.mxu0 0
        %2230 = vmatprep.subr.bf16.mxu0 0
        %2231 = vmatpush1.bf16.msra.mxu0 0
        %2232 = vmatprep.subr.bf16.mxu0 0
        %2233 = vmatpush1.bf16.msra.mxu0 0
        %2234 = vmatprep.subr.bf16.mxu0 0
        %2235 = vmatpush1.bf16.msra.mxu0 0
        %2236 = vmatprep.mubr.bf16.mxu0 0
        %2237 = vmatmul.mubr.bf16.gmra.mrb[0].mxu0 %v2199
        %v2238 = vpop.f32.mrb[0].mxu0
        %v2239 = vadd.f32 0.0, %v2238
        %v2240 = vpop.f32.mrb[0].mxu0
        %v2241 = vpop.f32.mrb[0].mxu0
        %v2242 = vpop.f32.mrb[0].mxu0
        %2243 = vdwg.mxu0
        %2245 = vrot.lane.b32.xlu0 %v2137, 120
        %v2246 = vpop.permute.xlu0 %2245
        %2248 = vrot.lane.b32.xlu0 %v2138, 120
        %v2249 = vpop.permute.xlu0 %2248
        %v2251 = vsel %vm1377, %v2246, 0
        %v2254 = vsel %vm1377, %v2249, 0
        %2256 = vmatprep.subr.bf16.mxu0 0
        %2257 = vmatpush1.bf16.xpose.msra.mxu0 %v2254
        %2258 = vmatprep.subr.bf16.mxu0 0
        %2259 = vmatpush1.bf16.xpose.msra.mxu0 0
        %2260 = vmatprep.subr.bf16.mxu0 0
        %2261 = vmatpush1.bf16.xpose.msra.mxu0 0
        %2262 = vmatprep.subr.bf16.mxu0 0
        %2263 = vmatpush1.bf16.xpose.msra.mxu0 0
        %2264 = vmatprep.subr.bf16.mxu0 0
        %2265 = vmatpush1.bf16.xpose.msra.mxu0 0
        %2266 = vmatprep.subr.bf16.mxu0 0
        %2267 = vmatpush1.bf16.xpose.msra.mxu0 0
        %2268 = vmatprep.subr.bf16.mxu0 0
        %2269 = vmatpush1.bf16.xpose.msra.mxu0 0
        %2270 = vmatprep.subr.bf16.mxu0 0
        %2271 = vmatpush1.bf16.xpose.msra.mxu0 0
        %2272 = vmatprep.subr.bf16.mxu0 0
        %2273 = vmatpush1.bf16.xpose.msra.mxu0 0
        %2274 = vmatprep.subr.bf16.mxu0 0
        %2275 = vmatpush1.bf16.xpose.msra.mxu0 0
        %2276 = vmatprep.subr.bf16.mxu0 0
        %2277 = vmatpush1.bf16.xpose.msra.mxu0 0
        %2278 = vmatprep.subr.bf16.mxu0 0
        %2279 = vmatpush1.bf16.xpose.msra.mxu0 0
        %2280 = vmatprep.subr.bf16.mxu0 0
        %2281 = vmatpush1.bf16.xpose.msra.mxu0 0
        %2282 = vmatprep.subr.bf16.mxu0 0
        %2283 = vmatpush1.bf16.xpose.msra.mxu0 0
        %2284 = vmatprep.subr.bf16.mxu0 0
        %2285 = vmatpush1.bf16.xpose.msra.mxu0 0
        %2286 = vmatprep.subr.bf16.mxu0 0
        %2287 = vmatpush1.bf16.xpose.msra.mxu0 0
        %2288 = vmatprep.mubr.bf16.mxu0 0
        %2289 = vmatmul.mubr.bf16.gmra.mrb[0].mxu0 %v2251
        %v2290 = vpop.f32.mrb[0].mxu0
        %v2291 = vadd.f32 %v2135, %v2290
        %v2292 = vpop.f32.mrb[0].mxu0
        %v2293 = vpop.f32.mrb[0].mxu0
        %v2294 = vpop.f32.mrb[0].mxu0
        %2295 = vdwg.mxu0
        %v2296 = vsel %vm1377, %v2291, -inf
        %2297 = vmax.xlane.f32.xlu0 %v2296
        %v2298 = vpop.xlane.xlu0 %2297
        %v2299 = vsub.f32 %v2291, %v2298
        %v2300 = vmul.f32 %v2299, 1.442695
        %v2301 = vpow.pop %v2300
        %v2302 = vsel %vm1377, %v2301, 0.0
        %2303 = vadd.xlane.f32.xlu0 %v2302
        %v2304 = vpop.xlane.xlu0 %2303
        %v2305 = vrcp.pop %v2304
        %v2306 = vmul.f32 %v2301, %v2305
        %v2307 = vpack.c.bf16 %v2306, %v2306
        %2309 = vrot.lane.b32.xlu0 %v2139, 120
        %v2310 = vpop.permute.xlu0 %2309
        %v2312 = vsel %vm1377, %v2307, 0
        %v2315 = vsel %vm1439, %v2310, 0
        %2317 = vmatprep.subr.bf16.mxu0 0
        %2318 = vmatpush1.bf16.msra.mxu0 %v2315
        %2319 = vmatprep.subr.bf16.mxu0 0
        %2320 = vmatpush1.bf16.msra.mxu0 0
        %2321 = vmatprep.subr.bf16.mxu0 0
        %2322 = vmatpush1.bf16.msra.mxu0 0
        %2323 = vmatprep.subr.bf16.mxu0 0
        %2324 = vmatpush1.bf16.msra.mxu0 0
        %2325 = vmatprep.subr.bf16.mxu0 0
        %2326 = vmatpush1.bf16.msra.mxu0 0
        %2327 = vmatprep.subr.bf16.mxu0 0
        %2328 = vmatpush1.bf16.msra.mxu0 0
        %2329 = vmatprep.subr.bf16.mxu0 0
        %2330 = vmatpush1.bf16.msra.mxu0 0
        %2331 = vmatprep.subr.bf16.mxu0 0
        %2332 = vmatpush1.bf16.msra.mxu0 0
        %2333 = vmatprep.subr.bf16.mxu0 0
        %2334 = vmatpush1.bf16.msra.mxu0 0
        %2335 = vmatprep.subr.bf16.mxu0 0
        %2336 = vmatpush1.bf16.msra.mxu0 0
        %2337 = vmatprep.subr.bf16.mxu0 0
        %2338 = vmatpush1.bf16.msra.mxu0 0
        %2339 = vmatprep.subr.bf16.mxu0 0
        %2340 = vmatpush1.bf16.msra.mxu0 0
        %2341 = vmatprep.subr.bf16.mxu0 0
        %2342 = vmatpush1.bf16.msra.mxu0 0
        %2343 = vmatprep.subr.bf16.mxu0 0
        %2344 = vmatpush1.bf16.msra.mxu0 0
        %2345 = vmatprep.subr.bf16.mxu0 0
        %2346 = vmatpush1.bf16.msra.mxu0 0
        %2347 = vmatprep.subr.bf16.mxu0 0
        %2348 = vmatpush1.bf16.msra.mxu0 0
        %2349 = vmatprep.mubr.bf16.mxu0 0
        %2350 = vmatmul.mubr.bf16.gmra.mrb[0].mxu0 %v2312
        %v2351 = vpop.f32.mrb[0].mxu0
        %v2352 = vadd.f32 0.0, %v2351
        %v2353 = vpop.f32.mrb[0].mxu0
        %v2354 = vpop.f32.mrb[0].mxu0
        %v2355 = vpop.f32.mrb[0].mxu0
        %2356 = vdwg.mxu0
        %2357 = vrot.lane.b32.xlu0 %v2137, 112
        %v2358 = vpop.permute.xlu0 %2357
        %2359 = vrot.lane.b32.xlu0 %v2138, 112
        %v2360 = vpop.permute.xlu0 %2359
        %v2362 = vsel %vm1377, %v2358, 0
        %v2365 = vsel %vm1377, %v2360, 0
        %2367 = vmatprep.subr.bf16.mxu0 0
        %2368 = vmatpush1.bf16.xpose.msra.mxu0 %v2365
        %2369 = vmatprep.subr.bf16.mxu0 0
        %2370 = vmatpush1.bf16.xpose.msra.mxu0 0
        %2371 = vmatprep.subr.bf16.mxu0 0
        %2372 = vmatpush1.bf16.xpose.msra.mxu0 0
        %2373 = vmatprep.subr.bf16.mxu0 0
        %2374 = vmatpush1.bf16.xpose.msra.mxu0 0
        %2375 = vmatprep.subr.bf16.mxu0 0
        %2376 = vmatpush1.bf16.xpose.msra.mxu0 0
        %2377 = vmatprep.subr.bf16.mxu0 0
        %2378 = vmatpush1.bf16.xpose.msra.mxu0 0
        %2379 = vmatprep.subr.bf16.mxu0 0
        %2380 = vmatpush1.bf16.xpose.msra.mxu0 0
        %2381 = vmatprep.subr.bf16.mxu0 0
        %2382 = vmatpush1.bf16.xpose.msra.mxu0 0
        %2383 = vmatprep.subr.bf16.mxu0 0
        %2384 = vmatpush1.bf16.xpose.msra.mxu0 0
        %2385 = vmatprep.subr.bf16.mxu0 0
        %2386 = vmatpush1.bf16.xpose.msra.mxu0 0
        %2387 = vmatprep.subr.bf16.mxu0 0
        %2388 = vmatpush1.bf16.xpose.msra.mxu0 0
        %2389 = vmatprep.subr.bf16.mxu0 0
        %2390 = vmatpush1.bf16.xpose.msra.mxu0 0
        %2391 = vmatprep.subr.bf16.mxu0 0
        %2392 = vmatpush1.bf16.xpose.msra.mxu0 0
        %2393 = vmatprep.subr.bf16.mxu0 0
        %2394 = vmatpush1.bf16.xpose.msra.mxu0 0
        %2395 = vmatprep.subr.bf16.mxu0 0
        %2396 = vmatpush1.bf16.xpose.msra.mxu0 0
        %2397 = vmatprep.subr.bf16.mxu0 0
        %2398 = vmatpush1.bf16.xpose.msra.mxu0 0
        %2399 = vmatprep.mubr.bf16.mxu0 0
        %2400 = vmatmul.mubr.bf16.gmra.mrb[0].mxu0 %v2362
        %v2401 = vpop.f32.mrb[0].mxu0
        %v2402 = vadd.f32 %v2135, %v2401
        %v2403 = vpop.f32.mrb[0].mxu0
        %v2404 = vpop.f32.mrb[0].mxu0
        %v2405 = vpop.f32.mrb[0].mxu0
        %2406 = vdwg.mxu0
        %v2407 = vsel %vm1377, %v2402, -inf
        %2408 = vmax.xlane.f32.xlu0 %v2407
        %v2409 = vpop.xlane.xlu0 %2408
        %v2410 = vsub.f32 %v2402, %v2409
        %v2411 = vmul.f32 %v2410, 1.442695
        %v2412 = vpow.pop %v2411
        %v2413 = vsel %vm1377, %v2412, 0.0
        %2414 = vadd.xlane.f32.xlu0 %v2413
        %v2415 = vpop.xlane.xlu0 %2414
        %v2416 = vrcp.pop %v2415
        %v2417 = vmul.f32 %v2412, %v2416
        %v2418 = vpack.c.bf16 %v2417, %v2417
        %2419 = vrot.lane.b32.xlu0 %v2139, 112
        %v2420 = vpop.permute.xlu0 %2419
        %v2422 = vsel %vm1377, %v2418, 0
        %v2425 = vsel %vm1439, %v2420, 0
        %2427 = vmatprep.subr.bf16.mxu0 0
        %2428 = vmatpush1.bf16.msra.mxu0 %v2425
        %2429 = vmatprep.subr.bf16.mxu0 0
        %2430 = vmatpush1.bf16.msra.mxu0 0
        %2431 = vmatprep.subr.bf16.mxu0 0
        %2432 = vmatpush1.bf16.msra.mxu0 0
        %2433 = vmatprep.subr.bf16.mxu0 0
        %2434 = vmatpush1.bf16.msra.mxu0 0
        %2435 = vmatprep.subr.bf16.mxu0 0
        %2436 = vmatpush1.bf16.msra.mxu0 0
        %2437 = vmatprep.subr.bf16.mxu0 0
        %2438 = vmatpush1.bf16.msra.mxu0 0
        %2439 = vmatprep.subr.bf16.mxu0 0
        %2440 = vmatpush1.bf16.msra.mxu0 0
        %2441 = vmatprep.subr.bf16.mxu0 0
        %2442 = vmatpush1.bf16.msra.mxu0 0
        %2443 = vmatprep.subr.bf16.mxu0 0
        %2444 = vmatpush1.bf16.msra.mxu0 0
        %2445 = vmatprep.subr.bf16.mxu0 0
        %2446 = vmatpush1.bf16.msra.mxu0 0
        %2447 = vmatprep.subr.bf16.mxu0 0
        %2448 = vmatpush1.bf16.msra.mxu0 0
        %2449 = vmatprep.subr.bf16.mxu0 0
        %2450 = vmatpush1.bf16.msra.mxu0 0
        %2451 = vmatprep.subr.bf16.mxu0 0
        %2452 = vmatpush1.bf16.msra.mxu0 0
        %2453 = vmatprep.subr.bf16.mxu0 0
        %2454 = vmatpush1.bf16.msra.mxu0 0
        %2455 = vmatprep.subr.bf16.mxu0 0
        %2456 = vmatpush1.bf16.msra.mxu0 0
        %2457 = vmatprep.subr.bf16.mxu0 0
        %2458 = vmatpush1.bf16.msra.mxu0 0
        %2459 = vmatprep.mubr.bf16.mxu0 0
        %2460 = vmatmul.mubr.bf16.gmra.mrb[0].mxu0 %v2422
        %v2461 = vpop.f32.mrb[0].mxu0
        %v2462 = vadd.f32 0.0, %v2461
        %v2463 = vpop.f32.mrb[0].mxu0
        %v2464 = vpop.f32.mrb[0].mxu0
        %v2465 = vpop.f32.mrb[0].mxu0
        %2466 = vdwg.mxu0
        %2467 = vrot.lane.b32.xlu0 %v2137, 104
        %v2468 = vpop.permute.xlu0 %2467
        %2469 = vrot.lane.b32.xlu0 %v2138, 104
        %v2470 = vpop.permute.xlu0 %2469
        %v2472 = vsel %vm1377, %v2468, 0
        %v2475 = vsel %vm1377, %v2470, 0
        %2477 = vmatprep.subr.bf16.mxu0 0
        %2478 = vmatpush1.bf16.xpose.msra.mxu0 %v2475
        %2479 = vmatprep.subr.bf16.mxu0 0
        %2480 = vmatpush1.bf16.xpose.msra.mxu0 0
        %2481 = vmatprep.subr.bf16.mxu0 0
        %2482 = vmatpush1.bf16.xpose.msra.mxu0 0
        %2483 = vmatprep.subr.bf16.mxu0 0
        %2484 = vmatpush1.bf16.xpose.msra.mxu0 0
        %2485 = vmatprep.subr.bf16.mxu0 0
        %2486 = vmatpush1.bf16.xpose.msra.mxu0 0
        %2487 = vmatprep.subr.bf16.mxu0 0
        %2488 = vmatpush1.bf16.xpose.msra.mxu0 0
        %2489 = vmatprep.subr.bf16.mxu0 0
        %2490 = vmatpush1.bf16.xpose.msra.mxu0 0
        %2491 = vmatprep.subr.bf16.mxu0 0
        %2492 = vmatpush1.bf16.xpose.msra.mxu0 0
        %2493 = vmatprep.subr.bf16.mxu0 0
        %2494 = vmatpush1.bf16.xpose.msra.mxu0 0
        %2495 = vmatprep.subr.bf16.mxu0 0
        %2496 = vmatpush1.bf16.xpose.msra.mxu0 0
        %2497 = vmatprep.subr.bf16.mxu0 0
        %2498 = vmatpush1.bf16.xpose.msra.mxu0 0
        %2499 = vmatprep.subr.bf16.mxu0 0
        %2500 = vmatpush1.bf16.xpose.msra.mxu0 0
        %2501 = vmatprep.subr.bf16.mxu0 0
        %2502 = vmatpush1.bf16.xpose.msra.mxu0 0
        %2503 = vmatprep.subr.bf16.mxu0 0
        %2504 = vmatpush1.bf16.xpose.msra.mxu0 0
        %2505 = vmatprep.subr.bf16.mxu0 0
        %2506 = vmatpush1.bf16.xpose.msra.mxu0 0
        %2507 = vmatprep.subr.bf16.mxu0 0
        %2508 = vmatpush1.bf16.xpose.msra.mxu0 0
        %2509 = vmatprep.mubr.bf16.mxu0 0
        %2510 = vmatmul.mubr.bf16.gmra.mrb[0].mxu0 %v2472
        %v2511 = vpop.f32.mrb[0].mxu0
        %v2512 = vadd.f32 %v2135, %v2511
        %v2513 = vpop.f32.mrb[0].mxu0
        %v2514 = vpop.f32.mrb[0].mxu0
        %v2515 = vpop.f32.mrb[0].mxu0
        %2516 = vdwg.mxu0
        %v2517 = vsel %vm1377, %v2512, -inf
        %2518 = vmax.xlane.f32.xlu0 %v2517
        %v2519 = vpop.xlane.xlu0 %2518
        %v2520 = vsub.f32 %v2512, %v2519
        %v2521 = vmul.f32 %v2520, 1.442695
        %v2522 = vpow.pop %v2521
        %v2523 = vsel %vm1377, %v2522, 0.0
        %2524 = vadd.xlane.f32.xlu0 %v2523
        %v2525 = vpop.xlane.xlu0 %2524
        %v2526 = vrcp.pop %v2525
        %v2527 = vmul.f32 %v2522, %v2526
        %v2528 = vpack.c.bf16 %v2527, %v2527
        %2529 = vrot.lane.b32.xlu0 %v2139, 104
        %v2530 = vpop.permute.xlu0 %2529
        %v2532 = vsel %vm1377, %v2528, 0
        %v2535 = vsel %vm1439, %v2530, 0
        %2537 = vmatprep.subr.bf16.mxu0 0
        %2538 = vmatpush1.bf16.msra.mxu0 %v2535
        %2539 = vmatprep.subr.bf16.mxu0 0
        %2540 = vmatpush1.bf16.msra.mxu0 0
        %2541 = vmatprep.subr.bf16.mxu0 0
        %2542 = vmatpush1.bf16.msra.mxu0 0
        %2543 = vmatprep.subr.bf16.mxu0 0
        %2544 = vmatpush1.bf16.msra.mxu0 0
        %2545 = vmatprep.subr.bf16.mxu0 0
        %2546 = vmatpush1.bf16.msra.mxu0 0
        %2547 = vmatprep.subr.bf16.mxu0 0
        %2548 = vmatpush1.bf16.msra.mxu0 0
        %2549 = vmatprep.subr.bf16.mxu0 0
        %2550 = vmatpush1.bf16.msra.mxu0 0
        %2551 = vmatprep.subr.bf16.mxu0 0
        %2552 = vmatpush1.bf16.msra.mxu0 0
        %2553 = vmatprep.subr.bf16.mxu0 0
        %2554 = vmatpush1.bf16.msra.mxu0 0
        %2555 = vmatprep.subr.bf16.mxu0 0
        %2556 = vmatpush1.bf16.msra.mxu0 0
        %2557 = vmatprep.subr.bf16.mxu0 0
        %2558 = vmatpush1.bf16.msra.mxu0 0
        %2559 = vmatprep.subr.bf16.mxu0 0
        %2560 = vmatpush1.bf16.msra.mxu0 0
        %2561 = vmatprep.subr.bf16.mxu0 0
        %2562 = vmatpush1.bf16.msra.mxu0 0
        %2563 = vmatprep.subr.bf16.mxu0 0
        %2564 = vmatpush1.bf16.msra.mxu0 0
        %2565 = vmatprep.subr.bf16.mxu0 0
        %2566 = vmatpush1.bf16.msra.mxu0 0
        %2567 = vmatprep.subr.bf16.mxu0 0
        %2568 = vmatpush1.bf16.msra.mxu0 0
        %2569 = vmatprep.mubr.bf16.mxu0 0
        %2570 = vmatmul.mubr.bf16.gmra.mrb[0].mxu0 %v2532
        %v2571 = vpop.f32.mrb[0].mxu0
        %v2572 = vadd.f32 0.0, %v2571
        %v2573 = vpop.f32.mrb[0].mxu0
        %v2574 = vpop.f32.mrb[0].mxu0
        %v2575 = vpop.f32.mrb[0].mxu0
        %2576 = vdwg.mxu0
        %2578 = vrot.lane.b32.xlu0 %v2352, 8
        %v2579 = vpop.permute.xlu0 %2578
        %2582 = vrot.lane.b32.xlu0 %v2462, 16
        %v2583 = vpop.permute.xlu0 %2582
        %2586 = vrot.lane.b32.xlu0 %v2572, 24
        %v2587 = vpop.permute.xlu0 %2586
        %v2589 = vsel %vm1377, %v2239, %v2579
        %v2590 = vsel %vm1829, %v2589, %v2583
        %v2591 = vsel %vm1831, %v2590, %v2587
        %v2592 = vpack.c.bf16 %v2591, %v2591
        %v2594 = vlaneseq
        %v2595 = vshrl.u32 %v2594, 7
        %v2596 = vsub.s32 0, %v2595
        %v2597 = vrot.slane %v1945, %v2596
        %v2603 = vunpack.c.l.b16 %v1941
        %v2604 = vunpack.c.l.b16 %v1942
        %v2605 = vunpack.c.l.b16 %v1943
        %v2606 = vunpack.c.l.b16 %v1944
        %v2607 = vpack.c.b16 %v2604, %v2603
        %v2608 = vpack.c.b16 %v2606, %v2605
        %v2612 = vsel %vm1202, %v2592, 0
        %2614 = vmatprep.subr.bf16.mxu0 0
        %2615 = vmatpush1.bf16.msra.mxu0 %v2607
        %2616 = vmatprep.subr.bf16.mxu0 0
        %2617 = vmatpush1.bf16.msra.mxu0 %v2608
        %2618 = vmatprep.subr.bf16.mxu0 0
        %2619 = vmatpush1.bf16.msra.mxu0 0
        %2620 = vmatprep.subr.bf16.mxu0 0
        %2621 = vmatpush1.bf16.msra.mxu0 0
        %2622 = vmatprep.subr.bf16.mxu0 0
        %2623 = vmatpush1.bf16.msra.mxu0 0
        %2624 = vmatprep.subr.bf16.mxu0 0
        %2625 = vmatpush1.bf16.msra.mxu0 0
        %2626 = vmatprep.subr.bf16.mxu0 0
        %2627 = vmatpush1.bf16.msra.mxu0 0
        %2628 = vmatprep.subr.bf16.mxu0 0
        %2629 = vmatpush1.bf16.msra.mxu0 0
        %2630 = vmatprep.subr.bf16.mxu0 0
        %2631 = vmatpush1.bf16.msra.mxu0 0
        %2632 = vmatprep.subr.bf16.mxu0 0
        %2633 = vmatpush1.bf16.msra.mxu0 0
        %2634 = vmatprep.subr.bf16.mxu0 0
        %2635 = vmatpush1.bf16.msra.mxu0 0
        %2636 = vmatprep.subr.bf16.mxu0 0
        %2637 = vmatpush1.bf16.msra.mxu0 0
        %2638 = vmatprep.subr.bf16.mxu0 0
        %2639 = vmatpush1.bf16.msra.mxu0 0
        %2640 = vmatprep.subr.bf16.mxu0 0
        %2641 = vmatpush1.bf16.msra.mxu0 0
        %2642 = vmatprep.subr.bf16.mxu0 0
        %2643 = vmatpush1.bf16.msra.mxu0 0
        %2644 = vmatprep.subr.bf16.mxu0 0
        %2645 = vmatpush1.bf16.msra.mxu0 0
        %2646 = vmatprep.mubr.bf16.mxu0 0
        %2647 = vmatmul.mubr.bf16.gmra.mrb[0].mxu0 %v2612
        %v2648 = vpop.f32.mrb[0].mxu0
        %v2649 = vadd.f32 %v2597, %v2648
        %v2650 = vpop.f32.mrb[0].mxu0
        %v2651 = vpop.f32.mrb[0].mxu0
        %v2652 = vpop.f32.mrb[0].mxu0
        %2653 = vdwg.mxu0
        %v2654 = vadd.f32 %v2649, %v1925
        %v2655 = vsel %vm1202, %v2654, 0.0
        %2656 = vadd.xlane.f32.xlu0 %v2655
        %v2657 = vpop.xlane.xlu0 %2656
        %v2658 = vmul.f32 %v2657, %v1901
        %v2659 = vsub.f32 %v2654, %v2658
        %v2660 = vmul.f32 %v2659, %v2659
        %v2661 = vsel %vm1202, %v2660, 0.0
        %2662 = vadd.xlane.f32.xlu0 %v2661
        %v2663 = vpop.xlane.xlu0 %2662
        %v2664 = vmul.f32 %v2663, %v1901
        %v2665 = vadd.f32 %v2664, 1e-05
        %v2666 = vrsqrt.pop %v2665
        %v2667 = vmul.f32 %v2659, %v2666
        %v2668 = vmul.f32 %v2667, %v1916
        %v2669 = vadd.f32 %v2668, %v1923
        %v2670 = vpack.c.bf16 %v2669, %v2669
        %v2671 = vld [vmem:[%s51] sm:$0xf]
        %v2672 = vld [vmem:[%s51 + $0x4] sm:$0xf]
        %v2673 = vld [vmem:[%s51 + $0x8] sm:$0xf]
        %v2674 = vld [vmem:[%s51 + $0xc] sm:$0xf]
        %v2675 = vld [vmem:[%s53] sm:$0x1]
        %v2677 = vlaneseq
        %v2678 = vshrl.u32 %v2677, 7
        %v2679 = vsub.s32 0, %v2678
        %v2680 = vrot.slane %v2675, %v2679
        %v2686 = vunpack.c.l.b16 %v2671
        %v2687 = vunpack.c.l.b16 %v2672
        %v2688 = vunpack.c.l.b16 %v2673
        %v2689 = vunpack.c.l.b16 %v2674
        %v2690 = vpack.c.b16 %v2687, %v2686
        %v2691 = vpack.c.b16 %v2689, %v2688
        %v2695 = vsel %vm1202, %v2670, 0
        %2697 = vmatprep.subr.bf16.mxu0 0
        %2698 = vmatpush1.bf16.msra.mxu0 %v2690
        %2699 = vmatprep.subr.bf16.mxu0 0
        %2700 = vmatpush1.bf16.msra.mxu0 %v2691
        %2701 = vmatprep.subr.bf16.mxu0 0
        %2702 = vmatpush1.bf16.msra.mxu0 0
        %2703 = vmatprep.subr.bf16.mxu0 0
        %2704 = vmatpush1.bf16.msra.mxu0 0
        %2705 = vmatprep.subr.bf16.mxu0 0
        %2706 = vmatpush1.bf16.msra.mxu0 0
        %2707 = vmatprep.subr.bf16.mxu0 0
        %2708 = vmatpush1.bf16.msra.mxu0 0
        %2709 = vmatprep.subr.bf16.mxu0 0
        %2710 = vmatpush1.bf16.msra.mxu0 0
        %2711 = vmatprep.subr.bf16.mxu0 0
        %2712 = vmatpush1.bf16.msra.mxu0 0
        %2713 = vmatprep.subr.bf16.mxu0 0
        %2714 = vmatpush1.bf16.msra.mxu0 0
        %2715 = vmatprep.subr.bf16.mxu0 0
        %2716 = vmatpush1.bf16.msra.mxu0 0
        %2717 = vmatprep.subr.bf16.mxu0 0
        %2718 = vmatpush1.bf16.msra.mxu0 0
        %2719 = vmatprep.subr.bf16.mxu0 0
        %2720 = vmatpush1.bf16.msra.mxu0 0
        %2721 = vmatprep.subr.bf16.mxu0 0
        %2722 = vmatpush1.bf16.msra.mxu0 0
        %2723 = vmatprep.subr.bf16.mxu0 0
        %2724 = vmatpush1.bf16.msra.mxu0 0
        %2725 = vmatprep.subr.bf16.mxu0 0
        %2726 = vmatpush1.bf16.msra.mxu0 0
        %2727 = vmatprep.subr.bf16.mxu0 0
        %2728 = vmatpush1.bf16.msra.mxu0 0
        %2729 = vmatprep.mubr.bf16.mxu0 0
        %2730 = vmatmul.mubr.bf16.gmra.mrb[0].mxu0 %v2695
        %v2731 = vpop.f32.mrb[0].mxu0
        %v2732 = vadd.f32 %v2680, %v2731
        %v2733 = vpop.f32.mrb[0].mxu0
        %v2734 = vpop.f32.mrb[0].mxu0
        %v2735 = vpop.f32.mrb[0].mxu0
        %2736 = vdwg.mxu0
        %v2737 = vmax.f32 %v2732, 0.0
        %v2738 = vpack.c.bf16 %v2737, %v2737
        %v2739 = vld [vmem:[%s55] sm:$0xf]
        %v2740 = vld [vmem:[%s55 + $0x4] sm:$0xf]
        %v2741 = vld [vmem:[%s55 + $0x8] sm:$0xf]
        %v2742 = vld [vmem:[%s55 + $0xc] sm:$0xf]
        %v2743 = vld [vmem:[%s55 + $0x10] sm:$0xf]
        %v2744 = vld [vmem:[%s55 + $0x14] sm:$0xf]
        %v2745 = vld [vmem:[%s55 + $0x18] sm:$0xf]
        %v2746 = vld [vmem:[%s55 + $0x1c] sm:$0xf]
        %v2747 = vld [vmem:[%s55 + $0x20] sm:$0xf]
        %v2748 = vld [vmem:[%s55 + $0x24] sm:$0xf]
        %v2749 = vld [vmem:[%s55 + $0x28] sm:$0xf]
        %v2750 = vld [vmem:[%s55 + $0x2c] sm:$0xf]
        %v2751 = vld [vmem:[%s55 + $0x30] sm:$0xf]
        %v2752 = vld [vmem:[%s55 + $0x34] sm:$0xf]
        %v2753 = vld [vmem:[%s55 + $0x38] sm:$0xf]
        %v2754 = vld [vmem:[%s55 + $0x3c] sm:$0xf]
        %v2755 = vld [vmem:[%s57] sm:$0x1]
        %v2757 = vlaneseq
        %v2758 = vshrl.u32 %v2757, 7
        %v2759 = vsub.s32 0, %v2758
        %v2760 = vrot.slane %v2755, %v2759
        %v2778 = vunpack.c.l.b16 %v2739
        %v2779 = vunpack.c.l.b16 %v2740
        %v2780 = vunpack.c.l.b16 %v2741
        %v2781 = vunpack.c.l.b16 %v2742
        %v2782 = vunpack.c.l.b16 %v2743
        %v2783 = vunpack.c.l.b16 %v2744
        %v2784 = vunpack.c.l.b16 %v2745
        %v2785 = vunpack.c.l.b16 %v2746
        %v2786 = vunpack.c.l.b16 %v2747
        %v2787 = vunpack.c.l.b16 %v2748
        %v2788 = vunpack.c.l.b16 %v2749
        %v2789 = vunpack.c.l.b16 %v2750
        %v2790 = vunpack.c.l.b16 %v2751
        %v2791 = vunpack.c.l.b16 %v2752
        %v2792 = vunpack.c.l.b16 %v2753
        %v2793 = vunpack.c.l.b16 %v2754
        %v2794 = vpack.c.b16 %v2779, %v2778
        %v2795 = vpack.c.b16 %v2781, %v2780
        %v2796 = vpack.c.b16 %v2783, %v2782
        %v2797 = vpack.c.b16 %v2785, %v2784
        %v2798 = vpack.c.b16 %v2787, %v2786
        %v2799 = vpack.c.b16 %v2789, %v2788
        %v2800 = vpack.c.b16 %v2791, %v2790
        %v2801 = vpack.c.b16 %v2793, %v2792
        %2810 = vmatprep.subr.bf16.mxu0 0
        %2811 = vmatpush1.bf16.msra.mxu0 %v2794
        %2812 = vmatprep.subr.bf16.mxu0 0
        %2813 = vmatpush1.bf16.msra.mxu0 %v2795
        %2814 = vmatprep.subr.bf16.mxu0 0
        %2815 = vmatpush1.bf16.msra.mxu0 %v2796
        %2816 = vmatprep.subr.bf16.mxu0 0
        %2817 = vmatpush1.bf16.msra.mxu0 %v2797
        %2818 = vmatprep.subr.bf16.mxu0 0
        %2819 = vmatpush1.bf16.msra.mxu0 %v2798
        %2820 = vmatprep.subr.bf16.mxu0 0
        %2821 = vmatpush1.bf16.msra.mxu0 %v2799
        %2822 = vmatprep.subr.bf16.mxu0 0
        %2823 = vmatpush1.bf16.msra.mxu0 %v2800
        %2824 = vmatprep.subr.bf16.mxu0 0
        %2825 = vmatpush1.bf16.msra.mxu0 %v2801
        %2826 = vmatprep.subr.bf16.mxu0 0
        %2827 = vmatpush1.bf16.msra.mxu0 0
        %2828 = vmatprep.subr.bf16.mxu0 0
        %2829 = vmatpush1.bf16.msra.mxu0 0
        %2830 = vmatprep.subr.bf16.mxu0 0
        %2831 = vmatpush1.bf16.msra.mxu0 0
        %2832 = vmatprep.subr.bf16.mxu0 0
        %2833 = vmatpush1.bf16.msra.mxu0 0
        %2834 = vmatprep.subr.bf16.mxu0 0
        %2835 = vmatpush1.bf16.msra.mxu0 0
        %2836 = vmatprep.subr.bf16.mxu0 0
        %2837 = vmatpush1.bf16.msra.mxu0 0
        %2838 = vmatprep.subr.bf16.mxu0 0
        %2839 = vmatpush1.bf16.msra.mxu0 0
        %2840 = vmatprep.subr.bf16.mxu0 0
        %2841 = vmatpush1.bf16.msra.mxu0 0
        %2842 = vmatprep.mubr.bf16.mxu0 0
        %2843 = vmatmul.mubr.bf16.gmra.mrb[0].mxu0 %v2738
        %v2844 = vpop.f32.mrb[0].mxu0
        %v2845 = vadd.f32 %v2760, %v2844
        %v2846 = vpop.f32.mrb[0].mxu0
        %v2847 = vpop.f32.mrb[0].mxu0
        %v2848 = vpop.f32.mrb[0].mxu0
        %2849 = vdwg.mxu0
        %v2850 = vadd.f32 %v2845, %v2669
        %v2851 = vld [vmem:[%s47] sm:$0x1]
        %v2852 = vld [vmem:[%s49] sm:$0x1]
        %v2853 = vsel %vm1202, %v2850, 0.0
        %2854 = vadd.xlane.f32.xlu0 %v2853
        %v2855 = vpop.xlane.xlu0 %2854
        %v2856 = vmul.f32 %v2855, %v1901
        %v2857 = vsub.f32 %v2850, %v2856
        %v2858 = vmul.f32 %v2857, %v2857
        %v2859 = vsel %vm1202, %v2858, 0.0
        %2860 = vadd.xlane.f32.xlu0 %v2859
        %v2861 = vpop.xlane.xlu0 %2860
        %v2862 = vmul.f32 %v2861, %v1901
        %v2863 = vadd.f32 %v2862, 1e-05
        %v2864 = vrsqrt.pop %v2863
        %v2865 = vmul.f32 %v2857, %v2864
        %v2867 = vlaneseq
        %v2868 = vshrl.u32 %v2867, 7
        %v2869 = vsub.s32 0, %v2868
        %v2870 = vrot.slane %v2851, %v2869
        %v2872 = vmul.f32 %v2865, %v2870
        %v2874 = vlaneseq
        %v2875 = vshrl.u32 %v2874, 7
        %v2876 = vsub.s32 0, %v2875
        %v2877 = vrot.slane %v2852, %v2876
        %v2879 = vadd.f32 %v2872, %v2877
        %2880 = vst.msk [vmem:[%s1140] sm:$0xff] %vm1202, %v2879
        %s2881 = sand.u32 %s742, 1
        %s2882 = scalar_lea.sflag [#allocation4], %s2881
        %s2883 = sand.u32 %s742, 1
        %s2884 = smul.addr %s2883, 8
        %s2885 = scalar_lea.vmem [#allocation22], %s2884
        // Predicated region
        $region185: #{tpu_custom_call.1} parent=135 // pred_check
          %p2886 = pneg %p752
        $region186: #{tpu_custom_call.1} parent=135 // pred_check_branch
          %2888 = sbr.rel (%p2886) target = $region188
        $region187: #{tpu_custom_call.1} parent=135 // pred_region
          %s2890 = ssub.s32 128, 128
          %2891 = vsyncadd %s2882, %s2890
          %s2892 = sadd.s32 %s89, %s88
          %s2893 = smul.addr %s2892, 128
          %s2894 = scalar_lea.hbm %s59, %s2893
          %s2896 = sshll.u32 %s2885, 4
          %s2897 = int_to_ptr.vmem [resolvable:$true] %s2896
          %2899 = dma.vmem_to_hbm [thread:$0]  %s2897, 128, %s2894, %s2882
        $region188: #{tpu_custom_call.1} parent=135 // pred_fallthru
          _
      $region136: #{tpu_custom_call.1} parent=5 // pred_fallthru
        _
      %p2900 = scmp.le.s32.totalorder 2, %s79
      // Predicated region
      $region189: #{tpu_custom_call.1} parent=5 // pred_check
        %p2901 = pneg %p2900
      $region190: #{tpu_custom_call.1} parent=5 // pred_check_branch
        %2903 = sbr.rel (%p2901) target = $region192
      $region191: #{tpu_custom_call.1} parent=5 // pred_region
        %s2904 = ssub.s32 %s79, 2
        // Predicated region
        $region193: #{tpu_custom_call.1} parent=191 // pred_check
          %p2905 = pneg %p758
        $region194: #{tpu_custom_call.1} parent=191 // pred_check_branch
          %2907 = sbr.rel (%p2905) target = $region196
        $region195: #{tpu_custom_call.1} parent=191 // pred_region
          %s2908 = sand.u32 %s743, 1
          %s2909 = scalar_lea.sflag [#allocation4], %s2908
          %s2910 = sand.u32 %s743, 1
          %s2911 = smul.addr %s2910, 8
          %s2912 = scalar_lea.vmem [#allocation22], %s2911
          %2913 = dma.done %s2909, 128
        $region196: #{tpu_custom_call.1} parent=191 // pred_fallthru
          _
      $region192: #{tpu_custom_call.1} parent=5 // pred_fallthru
        _
    $region6: #{tpu_custom_call.1} parent=1 // loop_footer
      %s83 = sadd.s32 1, %s79
    $region7: #{tpu_custom_call.1} parent=1 // loop_footer_branch
      %78 = sbr.rel target = $region3
    $region8: #{tpu_custom_call.1} parent=1 // loop_exit
      _
    %2914 = vsyncpa [#allocation3], 1
    %s2915 = scalar_lea.sflag [#allocation3], 1
    %2916 = vsyncpa %s2915, 1
    %2917 = vsyncpa [#allocation6], 1
    %s2918 = scalar_lea.sflag [#allocation6], 1
    %2919 = vsyncpa %s2918, 1
    %2920 = vsyncpa [#allocation9], 1
    %2921 = vsyncpa [#allocation12], 1
    %2922 = vsyncpa [#allocation15], 1
    %2923 = vsyncpa [#allocation18], 1
    %2924 = vsyncpa [#allocation21], 1
    %2925 = vsyncpa [#allocation4], 1
    %s2926 = scalar_lea.sflag [#allocation4], 1
    %2927 = vsyncpa %s2926, 1

</llo_original>
